<compile_context>
chip_gen: v5e
topology: v5e:2x2
jax: 0.10.0
libtpu: 0.0.40
codegen_flags: <defaults>
</compile_context>

<pallas_src>
import functools

import numpy as np
import jax
import jax.numpy as jnp
from jax.experimental import pallas as pl
from jax.experimental.pallas import tpu as pltpu

LANE = 128  # lane padding for all feature dims


# --------------------------------------------------------------------------
# Pallas kernel: full DMPNN forward for ONE packed block of graphs per step.
# --------------------------------------------------------------------------
def dmpnn_kernel(init_msg_ref, x_ref, gsrc_ref, scat_ref, pool_ref, invcnt_ref,
                 logmw_ref, w1_ref, w2_ref, w3_ref, b3_ref, wfc_ref, bfc_ref,
                 out_ref, *, depth):
    f32, bf16 = jnp.float32, jnp.bfloat16
    dot = lambda a, b: jnp.dot(a, b, preferred_element_type=f32)
    e_half = init_msg_ref.shape[0] // 2

    # h0 = relu(W1(cat([x[src], edge_attr])))               (E_BLK, LANE) f32
    h0 = jnp.maximum(dot(init_msg_ref[...], w1_ref[...]), 0.0)
    h = h0

    # Directed MP: m = Gsrc @ (Scat @ h) - h[rev].
    # Edges are packed so rev(e) == e +/- E_BLK/2 (forward half / reverse half,
    # padding mirrored at both half boundaries), so h[rev] is a half-swap of
    # the edge (sublane) axis.  Equivalent to pltpu.roll(h, e_half, axis=0).
    for _ in range(depth - 1):
        node_sum = dot(scat_ref[...], h.astype(bf16))            # (N_BLK, LANE)
        m_all = dot(gsrc_ref[...], node_sum.astype(bf16))        # (E_BLK, LANE)
        h_rev = jnp.concatenate([h[e_half:], h[:e_half]], axis=0)
        h = jnp.maximum(h0 + dot((m_all - h_rev).astype(bf16), w2_ref[...]), 0.0)

    # Node aggregation + node MLP.  x features are pre-packed into lanes
    # [H, H+F) of x_ref (v_msg only occupies lanes [0, H)), so the concat
    # collapses to an add and a single matmul with the re-packed W3.
    v_msg = dot(scat_ref[...], h.astype(bf16))                   # (N_BLK, LANE)
    z = v_msg + x_ref[...]
    node_attr = jnp.maximum(dot(z.astype(bf16), w3_ref[...]) + b3_ref[...], 0.0)

    # Global mean pool: bf16 0/1 sum-pool + exact f32 1/count scale.
    pooled = dot(pool_ref[...], node_attr.astype(bf16)) * invcnt_ref[...]

    # fc on cat([pooled, logmw]) + tanh: logmw pre-packed into spare lane H.
    xcat = pooled + logmw_ref[...]
    out_ref[...] = jnp.tanh(dot(xcat.astype(bf16), wfc_ref[...]) + bfc_ref[...])


def dmpnn_forward_pallas(init_msg3, x3, gsrc3, scat3, pool3, invcnt3, logmw3,
                         w1, w2, w3, b3, wfc, bfc, *, depth):
    num_blocks, e_blk, _ = init_msg3.shape
    _, n_blk, _ = x3.shape
    _, g_blk, _ = pool3.shape

    def per_block(arr):   # one packed graph block per grid step (leading dim squeezed)
        return pl.BlockSpec((None,) + arr.shape[1:], lambda b: (b, 0, 0))

    def resident(arr):    # full array, constant block index -> DMA'd once, stays in VMEM
        return pl.BlockSpec(arr.shape, lambda b: (0, 0))

    blocked = [init_msg3, x3, gsrc3, scat3, pool3, invcnt3, logmw3]
    weights = [w1, w2, w3, b3, wfc, bfc]
    in_specs = [per_block(a) for a in blocked] + [resident(w) for w in weights]

    flops_block = 2 * (e_blk * LANE * LANE
                       + (depth - 1) * (2 * e_blk * n_blk * LANE + e_blk * LANE * LANE)
                       + e_blk * n_blk * LANE
                       + n_blk * LANE * LANE
                       + g_blk * n_blk * LANE
                       + g_blk * LANE * LANE)
    bytes_accessed = int(sum(int(a.size) * a.dtype.itemsize for a in blocked + weights)
                         + num_blocks * g_blk * LANE * 4)

    kernel = functools.partial(dmpnn_kernel, depth=depth)
    return pl.pallas_call(
        kernel,
        grid=(num_blocks,),
        in_specs=in_specs,
        out_specs=pl.BlockSpec((None, g_blk, LANE), lambda b: (b, 0, 0)),
        out_shape=jax.ShapeDtypeStruct((num_blocks, g_blk, LANE), jnp.float32),
        compiler_params=pltpu.CompilerParams(
            dimension_semantics=("parallel",),        # 2 blocks -> v7x's 2 TCs
            vmem_limit_bytes=32 * 1024 * 1024),       # safe on v5e/v6e/v7x
        cost_estimate=pl.CostEstimate(
            flops=int(num_blocks * flops_block),
            transcendentals=int(num_blocks * g_blk * LANE),
            bytes_accessed=bytes_accessed),
    )(*blocked, *weights)


# --------------------------------------------------------------------------
# Pure-JAX reference mirroring the PyTorch scatter/gather semantics (f32).
# --------------------------------------------------------------------------
def dmpnn_forward_ref(x, edge_attr, src, dst, rev, batch, logmw,
                      w1t, w2t, w3t, b3, wfct, bfc, *, depth, num_graphs):
    relu = lambda t: jnp.maximum(t, 0.0)
    num_nodes = x.shape[0]
    init_msg = jnp.concatenate([x[src], edge_attr], axis=1).astype(jnp.float32)
    h0 = relu(init_msg @ w1t)
    h = h0
    for _ in range(depth - 1):
        msum = jax.ops.segment_sum(h, dst, num_segments=num_nodes)
        m = msum[src] - h[rev]
        h = relu(h0 + m @ w2t)
    v_msg = jax.ops.segment_sum(h, dst, num_segments=num_nodes)
    z = jnp.concatenate([x, v_msg], axis=1)
    node_attr = relu(z @ w3t + b3)
    counts = jax.ops.segment_sum(jnp.ones((num_nodes,), jnp.float32), batch,
                                 num_segments=num_graphs)
    pooled = jax.ops.segment_sum(node_attr, batch,
                                 num_segments=num_graphs) / counts[:, None]
    xcat = jnp.concatenate([pooled, logmw], axis=1)
    return jnp.tanh(xcat @ wfct + bfc)


# --------------------------------------------------------------------------
# Main: deterministic synthetic graph batch + parameters + packing glue.
# --------------------------------------------------------------------------
if __name__ == "__main__":
    node_fdim, edge_fdim = 8, 4
    hidden, emb_dim = 32, 16
    depth = 3

    graphs_per_block, num_blocks = 32, 2          # 64 graphs total
    num_graphs = graphs_per_block * num_blocks
    graph_sizes = ([5, 4, 6, 3] * (num_graphs // 4))[:num_graphs]   # path graphs

    E_BLK, N_BLK, G_BLK = 256, 160, graphs_per_block   # packed block row counts
    E_HALF = E_BLK // 2

    # ---- flat (reference-layout) graph batch -------------------------------
    # Each graph: path on n nodes -> (n-1) forward edges then (n-1) reverses.
    src_l, dst_l, rev_l, batch_l = [], [], [], []
    node_off, edge_off = [0], [0]
    for g, n in enumerate(graph_sizes):
        gn0, ge0, nf = node_off[-1], edge_off[-1], n - 1
        fwd_src = [gn0 + i for i in range(nf)]
        fwd_dst = [gn0 + i + 1 for i in range(nf)]
        src_l += fwd_src + fwd_dst
        dst_l += fwd_dst + fwd_src
        rev_l += [ge0 + nf + k for k in range(nf)] + [ge0 + k for k in range(nf)]
        batch_l += [g] * n
        node_off.append(gn0 + n)
        edge_off.append(ge0 + 2 * nf)
    src = np.array(src_l, np.int32)
    dst = np.array(dst_l, np.int32)
    rev = np.array(rev_l, np.int32)
    batch = np.array(batch_l, np.int32)
    num_nodes, num_edges = node_off[-1], edge_off[-1]

    key = jax.random.PRNGKey(0)
    ks = jax.random.split(key, 10)
    # Inputs / weights are snapped to bf16-representable values so the only
    # kernel-vs-reference divergence is the in-kernel bf16 activation casts.
    snap = lambda a: a.astype(jnp.bfloat16).astype(jnp.float32)
    x = snap(jax.random.normal(ks[0], (num_nodes, node_fdim), jnp.float32))
    edge_attr = snap(jax.random.normal(ks[1], (num_edges, edge_fdim), jnp.float32))
    logmw = snap(jax.random.normal(ks[2], (num_graphs, 1), jnp.float32))

    def init_w(k, shape, fan_in):
        return snap(jax.random.normal(k, shape, jnp.float32) / np.sqrt(fan_in))

    # Linear weights stored transposed (in_dim x out_dim), biases (1 x out).
    w1t = init_w(ks[3], (node_fdim + edge_fdim, hidden), node_fdim + edge_fdim)
    w2t = init_w(ks[4], (hidden, hidden), hidden)
    w3t = init_w(ks[5], (node_fdim + hidden, hidden), node_fdim + hidden)
    b3 = init_w(ks[6], (1, hidden), hidden)
    wfct = init_w(ks[7], (hidden + 1, emb_dim), hidden + 1)
    bfc = init_w(ks[8], (1, emb_dim), emb_dim)

    # ---- glue: pack many graphs per block -----------------------------------
    # Block edge ordering: [all forward edges of the block | pad to E_HALF |
    # their reverses in the same order | pad], so rev(e) = e +/- E_HALF and
    # padded rows mirror each other across the half boundary.
    x_np = np.asarray(x)
    ea_np = np.asarray(edge_attr)
    lmw_np = np.asarray(logmw)
    init_flat = np.concatenate([x_np[src], ea_np], axis=1)      # (E, 12)

    init3 = np.zeros((num_blocks, E_BLK, LANE), np.float32)
    x3 = np.zeros((num_blocks, N_BLK, LANE), np.float32)
    gsrc3 = np.zeros((num_blocks, E_BLK, N_BLK), np.float32)
    scat3 = np.zeros((num_blocks, N_BLK, E_BLK), np.float32)
    pool3 = np.zeros((num_blocks, G_BLK, N_BLK), np.float32)
    invc3 = np.zeros((num_blocks, G_BLK, 1), np.float32)
    lmw3 = np.zeros((num_blocks, G_BLK, LANE), np.float32)

    for b in range(num_blocks):
        nrow, erow = 0, 0
        for gi in range(graphs_per_block):
            g = b * graphs_per_block + gi
            n = graph_sizes[g]
            nf = n - 1
            gn0, ge0 = node_off[g], edge_off[g]
            # x features lane-packed into [hidden, hidden+node_fdim)
            x3[b, nrow:nrow + n, hidden:hidden + node_fdim] = x_np[gn0:gn0 + n]
            pool3[b, gi, nrow:nrow + n] = 1.0          # 0/1 sum-pool (bf16-exact)
            invc3[b, gi, 0] = 1.0 / n                  # exact f32 mean scale
            lmw3[b, gi, hidden] = lmw_np[g, 0]         # logmw folded into lane H
            for k in range(nf):
                fe = ge0 + k                            # flat forward-edge index
                for row, e in ((erow + k, fe), (E_HALF + erow + k, rev[fe])):
                    init3[b, row, :node_fdim + edge_fdim] = init_flat[e]
                    gsrc3[b, row, nrow + (src[e] - gn0)] = 1.0
                    scat3[b, nrow + (dst[e] - gn0), row] = 1.0
            nrow += n
            erow += nf
        assert nrow <= N_BLK and erow <= E_HALF, "block capacity exceeded"

    # ---- weight packing: lane-pad to 128, fold concats via row placement ----
    def pad2(a, rows, cols):
        out = np.zeros((rows, cols), np.float32)
        a = np.asarray(a)
        out[:a.shape[0], :a.shape[1]] = a
        return out

    w1p = pad2(w1t, LANE, LANE)
    w2p = pad2(w2t, LANE, LANE)
    w3p = np.zeros((LANE, LANE), np.float32)
    w3p[:hidden, :hidden] = np.asarray(w3t[node_fdim:])                 # v_msg rows
    w3p[hidden:hidden + node_fdim, :hidden] = np.asarray(w3t[:node_fdim])  # x rows
    b3p = pad2(b3, 1, LANE)
    wfcp = np.zeros((LANE, LANE), np.float32)
    wfcp[:hidden, :emb_dim] = np.asarray(wfct[:hidden])                 # pooled rows
    wfcp[hidden, :emb_dim] = np.asarray(wfct[hidden])                   # logmw row
    bfcp = pad2(bfc, 1, LANE)

    bf16, f32 = jnp.bfloat16, jnp.float32
    out3 = dmpnn_forward_pallas(
        jnp.asarray(init3, bf16), jnp.asarray(x3, f32),
        jnp.asarray(gsrc3, bf16), jnp.asarray(scat3, bf16),
        jnp.asarray(pool3, bf16), jnp.asarray(invc3, f32), jnp.asarray(lmw3, f32),
        jnp.asarray(w1p, bf16), jnp.asarray(w2p, bf16), jnp.asarray(w3p, bf16),
        jnp.asarray(b3p, f32), jnp.asarray(wfcp, bf16), jnp.asarray(bfcp, f32),
        depth=depth)
    out3 = jax.block_until_ready(out3)
    # Graph gi of block b sits at row gi of block b; no padded graph rows here.
    out = out3.reshape(num_blocks * G_BLK, LANE)[:num_graphs, :emb_dim]

    ref = dmpnn_forward_ref(x, edge_attr, jnp.asarray(src), jnp.asarray(dst),
                            jnp.asarray(rev), jnp.asarray(batch), logmw,
                            w1t, w2t, w3t, b3, wfct, bfc,
                            depth=depth, num_graphs=num_graphs)

    assert out.shape == (num_graphs, emb_dim)
    # Tolerance reflects bf16 MXU operands with f32 accumulation (weights and
    # inputs are bf16-representable, so divergence is only activation casts).
    assert jnp.allclose(out, ref, atol=5e-2, rtol=5e-2), "mismatch vs reference"

    print("KERNEL_OK")
</pallas_src>

<mosaic_0001>
module attributes {stable_mosaic.version = 11 : i64} {
  func.func @dmpnn_kernel(%arg0: i32, %arg1: memref<1x256x128xbf16, #tpu.memory_space<vmem>>, %arg2: memref<1x160x128xf32, #tpu.memory_space<vmem>>, %arg3: memref<1x256x160xbf16, #tpu.memory_space<vmem>>, %arg4: memref<1x160x256xbf16, #tpu.memory_space<vmem>>, %arg5: memref<1x32x160xbf16, #tpu.memory_space<vmem>>, %arg6: memref<1x32x1xf32, #tpu.memory_space<vmem>>, %arg7: memref<1x32x128xf32, #tpu.memory_space<vmem>>, %arg8: memref<128x128xbf16, #tpu.memory_space<vmem>>, %arg9: memref<128x128xbf16, #tpu.memory_space<vmem>>, %arg10: memref<128x128xbf16, #tpu.memory_space<vmem>>, %arg11: memref<1x128xf32, #tpu.memory_space<vmem>>, %arg12: memref<128x128xbf16, #tpu.memory_space<vmem>>, %arg13: memref<1x128xf32, #tpu.memory_space<vmem>>, %arg14: memref<1x32x128xf32, #tpu.memory_space<vmem>>) attributes {dimension_semantics = [#tpu.dimension_semantics<parallel>], iteration_bounds = array<i64: 2>, scalar_prefetch = 0 : i64, scratch_operands = 0 : i64, tpu.core_type = #tpu.core_type<tc>, window_params = [{transform_indices = @transform_0, window_bounds = array<i64: 1, 256, 128>}, {transform_indices = @transform_1, window_bounds = array<i64: 1, 160, 128>}, {transform_indices = @transform_2, window_bounds = array<i64: 1, 256, 160>}, {transform_indices = @transform_3, window_bounds = array<i64: 1, 160, 256>}, {transform_indices = @transform_4, window_bounds = array<i64: 1, 32, 160>}, {transform_indices = @transform_5, window_bounds = array<i64: 1, 32, 1>}, {transform_indices = @transform_6, window_bounds = array<i64: 1, 32, 128>}, {pipeline_mode = #tpu.pipeline_mode<synchronous>, transform_indices = @transform_7, window_bounds = array<i64: 128, 128>}, {pipeline_mode = #tpu.pipeline_mode<synchronous>, transform_indices = @transform_8, window_bounds = array<i64: 128, 128>}, {pipeline_mode = #tpu.pipeline_mode<synchronous>, transform_indices = @transform_9, window_bounds = array<i64: 128, 128>}, {pipeline_mode = #tpu.pipeline_mode<synchronous>, transform_indices = @transform_10, window_bounds = array<i64: 1, 128>}, {pipeline_mode = #tpu.pipeline_mode<synchronous>, transform_indices = @transform_11, window_bounds = array<i64: 128, 128>}, {pipeline_mode = #tpu.pipeline_mode<synchronous>, transform_indices = @transform_12, window_bounds = array<i64: 1, 128>}, {transform_indices = @transform_13, window_bounds = array<i64: 1, 32, 128>}]} {
    %c0 = arith.constant 0 : index
    %c0_0 = arith.constant 0 : index
    %c0_1 = arith.constant 0 : index
    %0 = vector.load %arg1[%c0, %c0_0, %c0_1] : memref<1x256x128xbf16, #tpu.memory_space<vmem>>, vector<1x256x128xbf16>
    %1 = vector.shape_cast %0 : vector<1x256x128xbf16> to vector<256x128xbf16>
    %c0_2 = arith.constant 0 : index
    %c0_3 = arith.constant 0 : index
    %2 = vector.load %arg8[%c0_2, %c0_3] : memref<128x128xbf16, #tpu.memory_space<vmem>>, vector<128x128xbf16>
    %cst = arith.constant dense<0.000000e+00> : vector<256x128xf32>
    %3 = tpu.matmul %1, %2, %cst {dimension_numbers = #tpu.dot_dimension_numbers<[1], [0], [0], [1], [0, 0, 1, 1], [], []>} : vector<256x128xbf16>, vector<128x128xbf16>, vector<256x128xf32> -> vector<256x128xf32>
    %cst_4 = arith.constant 0.000000e+00 : f32
    %4 = vector.broadcast %cst_4 : f32 to vector<256x128xf32>
    %5 = arith.maximumf %3, %4 : vector<256x128xf32>
    %c0_5 = arith.constant 0 : index
    %c0_6 = arith.constant 0 : index
    %c0_7 = arith.constant 0 : index
    %6 = vector.load %arg4[%c0_5, %c0_6, %c0_7] : memref<1x160x256xbf16, #tpu.memory_space<vmem>>, vector<1x160x256xbf16>
    %7 = vector.shape_cast %6 : vector<1x160x256xbf16> to vector<160x256xbf16>
    %8 = arith.truncf %5 : vector<256x128xf32> to vector<256x128xbf16>
    %cst_8 = arith.constant dense<0.000000e+00> : vector<160x128xf32>
    %9 = tpu.matmul %7, %8, %cst_8 {dimension_numbers = #tpu.dot_dimension_numbers<[1], [0], [0], [1], [0, 0, 1, 1], [], []>} : vector<160x256xbf16>, vector<256x128xbf16>, vector<160x128xf32> -> vector<160x128xf32>
    %c0_9 = arith.constant 0 : index
    %c0_10 = arith.constant 0 : index
    %c0_11 = arith.constant 0 : index
    %10 = vector.load %arg3[%c0_9, %c0_10, %c0_11] : memref<1x256x160xbf16, #tpu.memory_space<vmem>>, vector<1x256x160xbf16>
    %11 = vector.shape_cast %10 : vector<1x256x160xbf16> to vector<256x160xbf16>
    %12 = arith.truncf %9 : vector<160x128xf32> to vector<160x128xbf16>
    %cst_12 = arith.constant dense<0.000000e+00> : vector<256x128xf32>
    %13 = tpu.matmul %11, %12, %cst_12 {dimension_numbers = #tpu.dot_dimension_numbers<[1], [0], [0], [1], [0, 0, 1, 1], [], []>} : vector<256x160xbf16>, vector<160x128xbf16>, vector<256x128xf32> -> vector<256x128xf32>
    %14 = vector.extract_strided_slice %5 {offsets = [128, 0], sizes = [128, 128], strides = [1, 1]} : vector<256x128xf32> to vector<128x128xf32>
    %15 = vector.extract_strided_slice %5 {offsets = [0, 0], sizes = [128, 128], strides = [1, 1]} : vector<256x128xf32> to vector<128x128xf32>
    %16 = tpu.concatenate %14, %15 in 0 : vector<128x128xf32>, vector<128x128xf32> -> vector<256x128xf32>
    %17 = arith.subf %13, %16 : vector<256x128xf32>
    %18 = arith.truncf %17 : vector<256x128xf32> to vector<256x128xbf16>
    %c0_13 = arith.constant 0 : index
    %c0_14 = arith.constant 0 : index
    %19 = vector.load %arg9[%c0_13, %c0_14] : memref<128x128xbf16, #tpu.memory_space<vmem>>, vector<128x128xbf16>
    %cst_15 = arith.constant dense<0.000000e+00> : vector<256x128xf32>
    %20 = tpu.matmul %18, %19, %cst_15 {dimension_numbers = #tpu.dot_dimension_numbers<[1], [0], [0], [1], [0, 0, 1, 1], [], []>} : vector<256x128xbf16>, vector<128x128xbf16>, vector<256x128xf32> -> vector<256x128xf32>
    %21 = arith.addf %5, %20 : vector<256x128xf32>
    %cst_16 = arith.constant 0.000000e+00 : f32
    %22 = vector.broadcast %cst_16 : f32 to vector<256x128xf32>
    %23 = arith.maximumf %21, %22 : vector<256x128xf32>
    %c0_17 = arith.constant 0 : index
    %c0_18 = arith.constant 0 : index
    %c0_19 = arith.constant 0 : index
    %24 = vector.load %arg4[%c0_17, %c0_18, %c0_19] : memref<1x160x256xbf16, #tpu.memory_space<vmem>>, vector<1x160x256xbf16>
    %25 = vector.shape_cast %24 : vector<1x160x256xbf16> to vector<160x256xbf16>
    %26 = arith.truncf %23 : vector<256x128xf32> to vector<256x128xbf16>
    %cst_20 = arith.constant dense<0.000000e+00> : vector<160x128xf32>
    %27 = tpu.matmul %25, %26, %cst_20 {dimension_numbers = #tpu.dot_dimension_numbers<[1], [0], [0], [1], [0, 0, 1, 1], [], []>} : vector<160x256xbf16>, vector<256x128xbf16>, vector<160x128xf32> -> vector<160x128xf32>
    %c0_21 = arith.constant 0 : index
    %c0_22 = arith.constant 0 : index
    %c0_23 = arith.constant 0 : index
    %28 = vector.load %arg3[%c0_21, %c0_22, %c0_23] : memref<1x256x160xbf16, #tpu.memory_space<vmem>>, vector<1x256x160xbf16>
    %29 = vector.shape_cast %28 : vector<1x256x160xbf16> to vector<256x160xbf16>
    %30 = arith.truncf %27 : vector<160x128xf32> to vector<160x128xbf16>
    %cst_24 = arith.constant dense<0.000000e+00> : vector<256x128xf32>
    %31 = tpu.matmul %29, %30, %cst_24 {dimension_numbers = #tpu.dot_dimension_numbers<[1], [0], [0], [1], [0, 0, 1, 1], [], []>} : vector<256x160xbf16>, vector<160x128xbf16>, vector<256x128xf32> -> vector<256x128xf32>
    %32 = vector.extract_strided_slice %23 {offsets = [128, 0], sizes = [128, 128], strides = [1, 1]} : vector<256x128xf32> to vector<128x128xf32>
    %33 = vector.extract_strided_slice %23 {offsets = [0, 0], sizes = [128, 128], strides = [1, 1]} : vector<256x128xf32> to vector<128x128xf32>
    %34 = tpu.concatenate %32, %33 in 0 : vector<128x128xf32>, vector<128x128xf32> -> vector<256x128xf32>
    %35 = arith.subf %31, %34 : vector<256x128xf32>
    %36 = arith.truncf %35 : vector<256x128xf32> to vector<256x128xbf16>
    %c0_25 = arith.constant 0 : index
    %c0_26 = arith.constant 0 : index
    %37 = vector.load %arg9[%c0_25, %c0_26] : memref<128x128xbf16, #tpu.memory_space<vmem>>, vector<128x128xbf16>
    %cst_27 = arith.constant dense<0.000000e+00> : vector<256x128xf32>
    %38 = tpu.matmul %36, %37, %cst_27 {dimension_numbers = #tpu.dot_dimension_numbers<[1], [0], [0], [1], [0, 0, 1, 1], [], []>} : vector<256x128xbf16>, vector<128x128xbf16>, vector<256x128xf32> -> vector<256x128xf32>
    %39 = arith.addf %5, %38 : vector<256x128xf32>
    %cst_28 = arith.constant 0.000000e+00 : f32
    %40 = vector.broadcast %cst_28 : f32 to vector<256x128xf32>
    %41 = arith.maximumf %39, %40 : vector<256x128xf32>
    %c0_29 = arith.constant 0 : index
    %c0_30 = arith.constant 0 : index
    %c0_31 = arith.constant 0 : index
    %42 = vector.load %arg4[%c0_29, %c0_30, %c0_31] : memref<1x160x256xbf16, #tpu.memory_space<vmem>>, vector<1x160x256xbf16>
    %43 = vector.shape_cast %42 : vector<1x160x256xbf16> to vector<160x256xbf16>
    %44 = arith.truncf %41 : vector<256x128xf32> to vector<256x128xbf16>
    %cst_32 = arith.constant dense<0.000000e+00> : vector<160x128xf32>
    %45 = tpu.matmul %43, %44, %cst_32 {dimension_numbers = #tpu.dot_dimension_numbers<[1], [0], [0], [1], [0, 0, 1, 1], [], []>} : vector<160x256xbf16>, vector<256x128xbf16>, vector<160x128xf32> -> vector<160x128xf32>
    %c0_33 = arith.constant 0 : index
    %c0_34 = arith.constant 0 : index
    %c0_35 = arith.constant 0 : index
    %46 = vector.load %arg2[%c0_33, %c0_34, %c0_35] : memref<1x160x128xf32, #tpu.memory_space<vmem>>, vector<1x160x128xf32>
    %47 = vector.shape_cast %46 : vector<1x160x128xf32> to vector<160x128xf32>
    %48 = arith.addf %45, %47 : vector<160x128xf32>
    %49 = arith.truncf %48 : vector<160x128xf32> to vector<160x128xbf16>
    %c0_36 = arith.constant 0 : index
    %c0_37 = arith.constant 0 : index
    %50 = vector.load %arg10[%c0_36, %c0_37] : memref<128x128xbf16, #tpu.memory_space<vmem>>, vector<128x128xbf16>
    %cst_38 = arith.constant dense<0.000000e+00> : vector<160x128xf32>
    %51 = tpu.matmul %49, %50, %cst_38 {dimension_numbers = #tpu.dot_dimension_numbers<[1], [0], [0], [1], [0, 0, 1, 1], [], []>} : vector<160x128xbf16>, vector<128x128xbf16>, vector<160x128xf32> -> vector<160x128xf32>
    %c0_39 = arith.constant 0 : index
    %c0_40 = arith.constant 0 : index
    %52 = vector.load %arg11[%c0_39, %c0_40] : memref<1x128xf32, #tpu.memory_space<vmem>>, vector<1x128xf32>
    %53 = vector.broadcast %52 : vector<1x128xf32> to vector<160x128xf32>
    %54 = arith.addf %51, %53 : vector<160x128xf32>
    %cst_41 = arith.constant 0.000000e+00 : f32
    %55 = vector.broadcast %cst_41 : f32 to vector<160x128xf32>
    %56 = arith.maximumf %54, %55 : vector<160x128xf32>
    %c0_42 = arith.constant 0 : index
    %c0_43 = arith.constant 0 : index
    %c0_44 = arith.constant 0 : index
    %57 = vector.load %arg5[%c0_42, %c0_43, %c0_44] : memref<1x32x160xbf16, #tpu.memory_space<vmem>>, vector<1x32x160xbf16>
    %58 = vector.shape_cast %57 : vector<1x32x160xbf16> to vector<32x160xbf16>
    %59 = arith.truncf %56 : vector<160x128xf32> to vector<160x128xbf16>
    %cst_45 = arith.constant dense<0.000000e+00> : vector<32x128xf32>
    %60 = tpu.matmul %58, %59, %cst_45 {dimension_numbers = #tpu.dot_dimension_numbers<[1], [0], [0], [1], [0, 0, 1, 1], [], []>} : vector<32x160xbf16>, vector<160x128xbf16>, vector<32x128xf32> -> vector<32x128xf32>
    %c0_46 = arith.constant 0 : index
    %c0_47 = arith.constant 0 : index
    %c0_48 = arith.constant 0 : index
    %61 = vector.load %arg6[%c0_46, %c0_47, %c0_48] : memref<1x32x1xf32, #tpu.memory_space<vmem>>, vector<1x32x1xf32>
    %62 = vector.shape_cast %61 : vector<1x32x1xf32> to vector<32x1xf32>
    %63 = vector.broadcast %62 : vector<32x1xf32> to vector<32x128xf32>
    %64 = arith.mulf %60, %63 : vector<32x128xf32>
    %c0_49 = arith.constant 0 : index
    %c0_50 = arith.constant 0 : index
    %c0_51 = arith.constant 0 : index
    %65 = vector.load %arg7[%c0_49, %c0_50, %c0_51] : memref<1x32x128xf32, #tpu.memory_space<vmem>>, vector<1x32x128xf32>
    %66 = vector.shape_cast %65 : vector<1x32x128xf32> to vector<32x128xf32>
    %67 = arith.addf %64, %66 : vector<32x128xf32>
    %68 = arith.truncf %67 : vector<32x128xf32> to vector<32x128xbf16>
    %c0_52 = arith.constant 0 : index
    %c0_53 = arith.constant 0 : index
    %69 = vector.load %arg12[%c0_52, %c0_53] : memref<128x128xbf16, #tpu.memory_space<vmem>>, vector<128x128xbf16>
    %cst_54 = arith.constant dense<0.000000e+00> : vector<32x128xf32>
    %70 = tpu.matmul %68, %69, %cst_54 {dimension_numbers = #tpu.dot_dimension_numbers<[1], [0], [0], [1], [0, 0, 1, 1], [], []>} : vector<32x128xbf16>, vector<128x128xbf16>, vector<32x128xf32> -> vector<32x128xf32>
    %c0_55 = arith.constant 0 : index
    %c0_56 = arith.constant 0 : index
    %71 = vector.load %arg13[%c0_55, %c0_56] : memref<1x128xf32, #tpu.memory_space<vmem>>, vector<1x128xf32>
    %72 = vector.broadcast %71 : vector<1x128xf32> to vector<32x128xf32>
    %73 = arith.addf %70, %72 : vector<32x128xf32>
    %74 = math.tanh %73 : vector<32x128xf32>
    %c0_57 = arith.constant 0 : index
    %c0_58 = arith.constant 0 : index
    %c0_59 = arith.constant 0 : index
    %75 = vector.load %arg14[%c0_57, %c0_58, %c0_59] : memref<1x32x128xf32, #tpu.memory_space<vmem>>, vector<1x32x128xf32>
    %76 = vector.shape_cast %75 : vector<1x32x128xf32> to vector<32x128xf32>
    %77 = vector.shape_cast %74 : vector<32x128xf32> to vector<1x32x128xf32>
    tpu.vector_store %arg14[%c0_57, %c0_58, %c0_59], %77 {strides = array<i32>} : memref<1x32x128xf32, #tpu.memory_space<vmem>>, vector<1x32x128xf32>,
    return
  }
  func.func @transform_0(%arg0: i32) -> (i32, i32, i32) {
    %c0_i32 = arith.constant 0 : i32
    %c0_i32_0 = arith.constant 0 : i32
    %c0_i32_1 = arith.constant 0 : i32
    return %arg0, %c0_i32, %c0_i32_0 : i32, i32, i32
  }
  func.func @transform_1(%arg0: i32) -> (i32, i32, i32) {
    %c0_i32 = arith.constant 0 : i32
    %c0_i32_0 = arith.constant 0 : i32
    %c0_i32_1 = arith.constant 0 : i32
    return %arg0, %c0_i32, %c0_i32_0 : i32, i32, i32
  }
  func.func @transform_2(%arg0: i32) -> (i32, i32, i32) {
    %c0_i32 = arith.constant 0 : i32
    %c0_i32_0 = arith.constant 0 : i32
    %c0_i32_1 = arith.constant 0 : i32
    return %arg0, %c0_i32, %c0_i32_0 : i32, i32, i32
  }
  func.func @transform_3(%arg0: i32) -> (i32, i32, i32) {
    %c0_i32 = arith.constant 0 : i32
    %c0_i32_0 = arith.constant 0 : i32
    %c0_i32_1 = arith.constant 0 : i32
    return %arg0, %c0_i32, %c0_i32_0 : i32, i32, i32
  }
  func.func @transform_4(%arg0: i32) -> (i32, i32, i32) {
    %c0_i32 = arith.constant 0 : i32
    %c0_i32_0 = arith.constant 0 : i32
    %c0_i32_1 = arith.constant 0 : i32
    return %arg0, %c0_i32, %c0_i32_0 : i32, i32, i32
  }
  func.func @transform_5(%arg0: i32) -> (i32, i32, i32) {
    %c0_i32 = arith.constant 0 : i32
    %c0_i32_0 = arith.constant 0 : i32
    %c0_i32_1 = arith.constant 0 : i32
    return %arg0, %c0_i32, %c0_i32_0 : i32, i32, i32
  }
  func.func @transform_6(%arg0: i32) -> (i32, i32, i32) {
    %c0_i32 = arith.constant 0 : i32
    %c0_i32_0 = arith.constant 0 : i32
    %c0_i32_1 = arith.constant 0 : i32
    return %arg0, %c0_i32, %c0_i32_0 : i32, i32, i32
  }
  func.func @transform_7(%arg0: i32) -> (i32, i32) {
    %c0_i32 = arith.constant 0 : i32
    %c0_i32_0 = arith.constant 0 : i32
    %c0_i32_1 = arith.constant 0 : i32
    return %c0_i32, %c0_i32_0 : i32, i32
  }
  func.func @transform_8(%arg0: i32) -> (i32, i32) {
    %c0_i32 = arith.constant 0 : i32
    %c0_i32_0 = arith.constant 0 : i32
    %c0_i32_1 = arith.constant 0 : i32
    return %c0_i32, %c0_i32_0 : i32, i32
  }
  func.func @transform_9(%arg0: i32) -> (i32, i32) {
    %c0_i32 = arith.constant 0 : i32
    %c0_i32_0 = arith.constant 0 : i32
    %c0_i32_1 = arith.constant 0 : i32
    return %c0_i32, %c0_i32_0 : i32, i32
  }
  func.func @transform_10(%arg0: i32) -> (i32, i32) {
    %c0_i32 = arith.constant 0 : i32
    %c0_i32_0 = arith.constant 0 : i32
    %c0_i32_1 = arith.constant 0 : i32
    return %c0_i32, %c0_i32_0 : i32, i32
  }
  func.func @transform_11(%arg0: i32) -> (i32, i32) {
    %c0_i32 = arith.constant 0 : i32
    %c0_i32_0 = arith.constant 0 : i32
    %c0_i32_1 = arith.constant 0 : i32
    return %c0_i32, %c0_i32_0 : i32, i32
  }
  func.func @transform_12(%arg0: i32) -> (i32, i32) {
    %c0_i32 = arith.constant 0 : i32
    %c0_i32_0 = arith.constant 0 : i32
    %c0_i32_1 = arith.constant 0 : i32
    return %c0_i32, %c0_i32_0 : i32, i32
  }
  func.func @transform_13(%arg0: i32) -> (i32, i32, i32) {
    %c0_i32 = arith.constant 0 : i32
    %c0_i32_0 = arith.constant 0 : i32
    %c0_i32_1 = arith.constant 0 : i32
    return %arg0, %c0_i32, %c0_i32_0 : i32, i32, i32
  }
}

</mosaic_0001>

<llo_original>
// kernel: tpu_custom_call.1
$region0: #{tpu_custom_call.1}
  #allocation0 [shape = 'u32[]', space=smem, size = 0x4, offset = 0x4, fixed_abs, tag = 'smem constant byte address 0x4 - core index']
  #allocation1 [shape = 'u32[72,128]{1,0:T(1,128)}', space=vmem, size = 0x9000, scoped, tag = 'internal scratch']
  %s0 = inlined_call_operand.vmem [shape: bf16[2,256,128], index: 0, kind: input, shape index: {}]
  %s1 = inlined_call_operand.vmem [shape: f32[2,160,128], index: 1, kind: input, shape index: {}]
  %s2 = inlined_call_operand.vmem [shape: bf16[2,256,160], index: 2, kind: input, shape index: {}]
  %s3 = inlined_call_operand.vmem [shape: bf16[2,160,256], index: 3, kind: input, shape index: {}]
  %s4 = inlined_call_operand.hbm [shape: bf16[2,32,160], index: 4, kind: input, shape index: {}]
  %s5 = inlined_call_operand.vmem [shape: f32[2,32,1], index: 5, kind: input, shape index: {}]
  %s6 = inlined_call_operand.hbm [shape: f32[2,32,128], index: 6, kind: input, shape index: {}]
  %s7 = inlined_call_operand.hbm [shape: bf16[128,128], index: 7, kind: input, shape index: {}]
  %s8 = inlined_call_operand.hbm [shape: bf16[128,128], index: 8, kind: input, shape index: {}]
  %s9 = inlined_call_operand.hbm [shape: bf16[128,128], index: 9, kind: input, shape index: {}]
  %s10 = inlined_call_operand.vmem [shape: f32[1,128], index: 10, kind: input, shape index: {}]
  %s11 = inlined_call_operand.hbm [shape: bf16[128,128], index: 11, kind: input, shape index: {}]
  %s12 = inlined_call_operand.vmem [shape: f32[1,128], index: 12, kind: input, shape index: {}]
  %s13 = inlined_call_operand.hbm [shape: f32[2,32,128], index: 13, kind: output, shape index: {}]
  %s14 = sld [smem:[#allocation0]]
  $region109: #{tpu_custom_call.1} parent=0
    _
  %s16 = ssub.s32 1, %s14
  %s17 = scalar_select 0, %s16, %s14
  $region1: #{tpu_custom_call.1} parent=0
    #allocation2 [shape = 'u8[32768]{0}', space=vmem, size = 0x8000, scoped, tag = 'input window, operand 4']
    #allocation3 [shape = 's32[2]{0}', space=sflag, size = 0x8, scoped, tag = 'scoped memory for tpu_custom_call.1']
    #allocation4 [shape = 's32[2]{0}', space=sflag, size = 0x8, scoped, tag = 'scoped memory for tpu_custom_call.1']
    #allocation5 [shape = 'u8[32768]{0}', space=vmem, size = 0x8000, scoped, tag = 'input window, operand 6']
    #allocation6 [shape = 's32[2]{0}', space=sflag, size = 0x8, scoped, tag = 'scoped memory for tpu_custom_call.1']
    #allocation7 [shape = 'u8[32768]{0}', space=vmem, size = 0x8000, scoped, tag = 'input window, operand 7, single buffered']
    #allocation8 [shape = 'u8[32768]{0}', space=vmem, size = 0x8000, scoped, tag = 'input window, operand 8, single buffered']
    #allocation9 [shape = 's32[1]{0}', space=sflag, size = 0x4, scoped, tag = 'scoped memory for tpu_custom_call.1']
    #allocation10 [shape = 'u8[32768]{0}', space=vmem, size = 0x8000, scoped, tag = 'input window, operand 9, single buffered']
    #allocation11 [shape = 'u8[32768]{0}', space=vmem, size = 0x8000, scoped, tag = 'input window, operand 11, single buffered']
    #allocation12 [shape = 's32[1]{0}', space=sflag, size = 0x4, scoped, tag = 'scoped memory for tpu_custom_call.1']
    #allocation13 [shape = 'u8[32768]{0}', space=vmem, size = 0x8000, scoped, tag = 'output window, operand 0']
    %18 = vsyncpa [#allocation3], 0
    %s19 = scalar_lea.sflag [#allocation3], 1
    %20 = vsyncpa %s19, 0
    %21 = vsyncpa [#allocation6], 0
    %s22 = scalar_lea.sflag [#allocation6], 1
    %23 = vsyncpa %s22, 0
    %24 = vsyncpa [#allocation9], 0
    %25 = vsyncpa [#allocation12], 0
    %26 = vsyncpa [#allocation4], 0
    %s27 = scalar_lea.sflag [#allocation4], 1
    %28 = vsyncpa %s27, 0
    loop: start=0, step=1, limit=4
    $region2: #{tpu_custom_call.1} parent=1 // loop_pre_header
      _
    $region3: #{tpu_custom_call.1} parent=1 // loop_header
      %s30 = sphi 0, %s34
      %p31 = scmp.ge.s32.totalorder %s30, 4
      %s40 = sphi 0, %s42
      %s43 = sphi 0, %s40
      %s44 = sphi 0, %s43
      %s60 = sphi 0, %s44
      %s66 = sphi 0, %s68
      %s69 = sphi 0, %s66
      %s70 = sphi 0, %s69
      %s86 = sphi 0, %s70
      %s92 = sphi 0, %s94
      %s95 = sphi 0, %s92
      %s96 = sphi 0, %s95
      %s112 = sphi 0, %s96
      %s118 = sphi 0, %s120
      %s121 = sphi 0, %s118
      %s122 = sphi 0, %s121
      %s138 = sphi 0, %s122
      %s144 = sphi 0, %s146
      %s147 = sphi 0, %s144
      %s148 = sphi 0, %s147
      %s164 = sphi 0, %s148
      %s170 = sphi 0, %s172
      %s173 = sphi 0, %s170
      %s174 = sphi 0, %s173
      %s190 = sphi 0, %s174
      %s196 = sphi 0, %s198
      %s199 = sphi 0, %s196
      %s200 = sphi 0, %s199
      %s216 = sphi 0, %s200
      %s220 = sphi 0, %s220
      %s222 = sphi 0, %s220
      %s223 = sphi 0, %s222
      %s237 = sphi 0, %s223
      %s241 = sphi 0, %s241
      %s243 = sphi 0, %s241
      %s244 = sphi 0, %s243
      %s258 = sphi 0, %s244
      %s262 = sphi 0, %s262
      %s264 = sphi 0, %s262
      %s265 = sphi 0, %s264
      %s279 = sphi 0, %s265
      %s283 = sphi 0, %s283
      %s285 = sphi 0, %s283
      %s286 = sphi 0, %s285
      %s300 = sphi 0, %s286
      %s304 = sphi 0, %s304
      %s306 = sphi 0, %s304
      %s307 = sphi 0, %s306
      %s321 = sphi 0, %s307
      %s325 = sphi 0, %s325
      %s327 = sphi 0, %s325
      %s328 = sphi 0, %s327
      %s342 = sphi 0, %s328
      %s348 = sphi 0, %s350
      %s351 = sphi 0, %s348
      %s352 = sphi 0, %s351
      %s368 = sphi 0, %s352
    $region4: #{tpu_custom_call.1} parent=1 // loop_header_branch
      %33 = sbr.rel (%p31) target = $region8
    $region5: #{tpu_custom_call.1} parent=1 // loop_body
      %s35 = ssub.s32 %s30, 1
      %s36 = ssub.s32 %s30, 2
      %s37 = sadd.s32 %s30, 1
      %s38 = ssub.s32 %s30, %s37
      %p39 = scmp.eq.s32.totalorder %s38, 0
      %s41 = sadd.s32 %s40, 1
      %s42 = scalar_select %p39, %s40, %s41
      %p45 = pneg %p39
      %p46 = scmp.eq.s32.totalorder %s30, 1
      %p47 = por %p45, %p46
      %p48 = scmp.ne.s32.totalorder %s40, %s43
      %p49 = scmp.eq.s32.totalorder %s30, 0
      %p50 = por %p48, %p49
      %p51 = scmp.ne.s32.totalorder %s40, %s43
      %p52 = scmp.eq.s32.totalorder %s35, 1
      %p53 = por %p51, %p52
      %p54 = scmp.ne.s32.totalorder %s43, %s44
      %p55 = scmp.eq.s32.totalorder %s35, 0
      %p56 = por %p54, %p55
      %p57 = scmp.ne.s32.totalorder %s43, %s44
      %p58 = scmp.eq.s32.totalorder %s36, 1
      %p59 = por %p57, %p58
      %p61 = scmp.ne.s32.totalorder %s44, %s60
      %p62 = scmp.eq.s32.totalorder %s36, 0
      %p63 = por %p61, %p62
      %s64 = ssub.s32 %s30, %s37
      %p65 = scmp.eq.s32.totalorder %s64, 0
      %s67 = sadd.s32 %s66, 1
      %s68 = scalar_select %p65, %s66, %s67
      %p71 = pneg %p65
      %p72 = scmp.eq.s32.totalorder %s30, 1
      %p73 = por %p71, %p72
      %p74 = scmp.ne.s32.totalorder %s66, %s69
      %p75 = scmp.eq.s32.totalorder %s30, 0
      %p76 = por %p74, %p75
      %p77 = scmp.ne.s32.totalorder %s66, %s69
      %p78 = scmp.eq.s32.totalorder %s35, 1
      %p79 = por %p77, %p78
      %p80 = scmp.ne.s32.totalorder %s69, %s70
      %p81 = scmp.eq.s32.totalorder %s35, 0
      %p82 = por %p80, %p81
      %p83 = scmp.ne.s32.totalorder %s69, %s70
      %p84 = scmp.eq.s32.totalorder %s36, 1
      %p85 = por %p83, %p84
      %p87 = scmp.ne.s32.totalorder %s70, %s86
      %p88 = scmp.eq.s32.totalorder %s36, 0
      %p89 = por %p87, %p88
      %s90 = ssub.s32 %s30, %s37
      %p91 = scmp.eq.s32.totalorder %s90, 0
      %s93 = sadd.s32 %s92, 1
      %s94 = scalar_select %p91, %s92, %s93
      %p97 = pneg %p91
      %p98 = scmp.eq.s32.totalorder %s30, 1
      %p99 = por %p97, %p98
      %p100 = scmp.ne.s32.totalorder %s92, %s95
      %p101 = scmp.eq.s32.totalorder %s30, 0
      %p102 = por %p100, %p101
      %p103 = scmp.ne.s32.totalorder %s92, %s95
      %p104 = scmp.eq.s32.totalorder %s35, 1
      %p105 = por %p103, %p104
      %p106 = scmp.ne.s32.totalorder %s95, %s96
      %p107 = scmp.eq.s32.totalorder %s35, 0
      %p108 = por %p106, %p107
      %p109 = scmp.ne.s32.totalorder %s95, %s96
      %p110 = scmp.eq.s32.totalorder %s36, 1
      %p111 = por %p109, %p110
      %p113 = scmp.ne.s32.totalorder %s96, %s112
      %p114 = scmp.eq.s32.totalorder %s36, 0
      %p115 = por %p113, %p114
      %s116 = ssub.s32 %s30, %s37
      %p117 = scmp.eq.s32.totalorder %s116, 0
      %s119 = sadd.s32 %s118, 1
      %s120 = scalar_select %p117, %s118, %s119
      %p123 = pneg %p117
      %p124 = scmp.eq.s32.totalorder %s30, 1
      %p125 = por %p123, %p124
      %p126 = scmp.ne.s32.totalorder %s118, %s121
      %p127 = scmp.eq.s32.totalorder %s30, 0
      %p128 = por %p126, %p127
      %p129 = scmp.ne.s32.totalorder %s118, %s121
      %p130 = scmp.eq.s32.totalorder %s35, 1
      %p131 = por %p129, %p130
      %p132 = scmp.ne.s32.totalorder %s121, %s122
      %p133 = scmp.eq.s32.totalorder %s35, 0
      %p134 = por %p132, %p133
      %p135 = scmp.ne.s32.totalorder %s121, %s122
      %p136 = scmp.eq.s32.totalorder %s36, 1
      %p137 = por %p135, %p136
      %p139 = scmp.ne.s32.totalorder %s122, %s138
      %p140 = scmp.eq.s32.totalorder %s36, 0
      %p141 = por %p139, %p140
      %s142 = ssub.s32 %s30, %s37
      %p143 = scmp.eq.s32.totalorder %s142, 0
      %s145 = sadd.s32 %s144, 1
      %s146 = scalar_select %p143, %s144, %s145
      %p149 = pneg %p143
      %p150 = scmp.eq.s32.totalorder %s30, 1
      %p151 = por %p149, %p150
      %p152 = scmp.ne.s32.totalorder %s144, %s147
      %p153 = scmp.eq.s32.totalorder %s30, 0
      %p154 = por %p152, %p153
      %p155 = scmp.ne.s32.totalorder %s144, %s147
      %p156 = scmp.eq.s32.totalorder %s35, 1
      %p157 = por %p155, %p156
      %p158 = scmp.ne.s32.totalorder %s147, %s148
      %p159 = scmp.eq.s32.totalorder %s35, 0
      %p160 = por %p158, %p159
      %p161 = scmp.ne.s32.totalorder %s147, %s148
      %p162 = scmp.eq.s32.totalorder %s36, 1
      %p163 = por %p161, %p162
      %p165 = scmp.ne.s32.totalorder %s148, %s164
      %p166 = scmp.eq.s32.totalorder %s36, 0
      %p167 = por %p165, %p166
      %s168 = ssub.s32 %s30, %s37
      %p169 = scmp.eq.s32.totalorder %s168, 0
      %s171 = sadd.s32 %s170, 1
      %s172 = scalar_select %p169, %s170, %s171
      %p175 = pneg %p169
      %p176 = scmp.eq.s32.totalorder %s30, 1
      %p177 = por %p175, %p176
      %p178 = scmp.ne.s32.totalorder %s170, %s173
      %p179 = scmp.eq.s32.totalorder %s30, 0
      %p180 = por %p178, %p179
      %p181 = scmp.ne.s32.totalorder %s170, %s173
      %p182 = scmp.eq.s32.totalorder %s35, 1
      %p183 = por %p181, %p182
      %p184 = scmp.ne.s32.totalorder %s173, %s174
      %p185 = scmp.eq.s32.totalorder %s35, 0
      %p186 = por %p184, %p185
      %p187 = scmp.ne.s32.totalorder %s173, %s174
      %p188 = scmp.eq.s32.totalorder %s36, 1
      %p189 = por %p187, %p188
      %p191 = scmp.ne.s32.totalorder %s174, %s190
      %p192 = scmp.eq.s32.totalorder %s36, 0
      %p193 = por %p191, %p192
      %s194 = ssub.s32 %s30, %s37
      %p195 = scmp.eq.s32.totalorder %s194, 0
      %s197 = sadd.s32 %s196, 1
      %s198 = scalar_select %p195, %s196, %s197
      %p201 = pneg %p195
      %p202 = scmp.eq.s32.totalorder %s30, 1
      %p203 = por %p201, %p202
      %p204 = scmp.ne.s32.totalorder %s196, %s199
      %p205 = scmp.eq.s32.totalorder %s30, 0
      %p206 = por %p204, %p205
      %p207 = scmp.ne.s32.totalorder %s196, %s199
      %p208 = scmp.eq.s32.totalorder %s35, 1
      %p209 = por %p207, %p208
      %p210 = scmp.ne.s32.totalorder %s199, %s200
      %p211 = scmp.eq.s32.totalorder %s35, 0
      %p212 = por %p210, %p211
      %p213 = scmp.ne.s32.totalorder %s199, %s200
      %p214 = scmp.eq.s32.totalorder %s36, 1
      %p215 = por %p213, %p214
      %p217 = scmp.ne.s32.totalorder %s200, %s216
      %p218 = scmp.eq.s32.totalorder %s36, 0
      %p219 = por %p217, %p218
      %s221 = sadd.s32 %s220, 1
      %p224 = scmp.eq.s32.totalorder %s30, 1
      %p225 = scmp.ne.s32.totalorder %s220, %s222
      %p226 = scmp.eq.s32.totalorder %s30, 0
      %p227 = por %p225, %p226
      %p228 = scmp.ne.s32.totalorder %s220, %s222
      %p229 = scmp.eq.s32.totalorder %s35, 1
      %p230 = por %p228, %p229
      %p231 = scmp.ne.s32.totalorder %s222, %s223
      %p232 = scmp.eq.s32.totalorder %s35, 0
      %p233 = por %p231, %p232
      %p234 = scmp.ne.s32.totalorder %s222, %s223
      %p235 = scmp.eq.s32.totalorder %s36, 1
      %p236 = por %p234, %p235
      %p238 = scmp.ne.s32.totalorder %s223, %s237
      %p239 = scmp.eq.s32.totalorder %s36, 0
      %p240 = por %p238, %p239
      %s242 = sadd.s32 %s241, 1
      %p245 = scmp.eq.s32.totalorder %s30, 1
      %p246 = scmp.ne.s32.totalorder %s241, %s243
      %p247 = scmp.eq.s32.totalorder %s30, 0
      %p248 = por %p246, %p247
      %p249 = scmp.ne.s32.totalorder %s241, %s243
      %p250 = scmp.eq.s32.totalorder %s35, 1
      %p251 = por %p249, %p250
      %p252 = scmp.ne.s32.totalorder %s243, %s244
      %p253 = scmp.eq.s32.totalorder %s35, 0
      %p254 = por %p252, %p253
      %p255 = scmp.ne.s32.totalorder %s243, %s244
      %p256 = scmp.eq.s32.totalorder %s36, 1
      %p257 = por %p255, %p256
      %p259 = scmp.ne.s32.totalorder %s244, %s258
      %p260 = scmp.eq.s32.totalorder %s36, 0
      %p261 = por %p259, %p260
      %s263 = sadd.s32 %s262, 1
      %p266 = scmp.eq.s32.totalorder %s30, 1
      %p267 = scmp.ne.s32.totalorder %s262, %s264
      %p268 = scmp.eq.s32.totalorder %s30, 0
      %p269 = por %p267, %p268
      %p270 = scmp.ne.s32.totalorder %s262, %s264
      %p271 = scmp.eq.s32.totalorder %s35, 1
      %p272 = por %p270, %p271
      %p273 = scmp.ne.s32.totalorder %s264, %s265
      %p274 = scmp.eq.s32.totalorder %s35, 0
      %p275 = por %p273, %p274
      %p276 = scmp.ne.s32.totalorder %s264, %s265
      %p277 = scmp.eq.s32.totalorder %s36, 1
      %p278 = por %p276, %p277
      %p280 = scmp.ne.s32.totalorder %s265, %s279
      %p281 = scmp.eq.s32.totalorder %s36, 0
      %p282 = por %p280, %p281
      %s284 = sadd.s32 %s283, 1
      %p287 = scmp.eq.s32.totalorder %s30, 1
      %p288 = scmp.ne.s32.totalorder %s283, %s285
      %p289 = scmp.eq.s32.totalorder %s30, 0
      %p290 = por %p288, %p289
      %p291 = scmp.ne.s32.totalorder %s283, %s285
      %p292 = scmp.eq.s32.totalorder %s35, 1
      %p293 = por %p291, %p292
      %p294 = scmp.ne.s32.totalorder %s285, %s286
      %p295 = scmp.eq.s32.totalorder %s35, 0
      %p296 = por %p294, %p295
      %p297 = scmp.ne.s32.totalorder %s285, %s286
      %p298 = scmp.eq.s32.totalorder %s36, 1
      %p299 = por %p297, %p298
      %p301 = scmp.ne.s32.totalorder %s286, %s300
      %p302 = scmp.eq.s32.totalorder %s36, 0
      %p303 = por %p301, %p302
      %s305 = sadd.s32 %s304, 1
      %p308 = scmp.eq.s32.totalorder %s30, 1
      %p309 = scmp.ne.s32.totalorder %s304, %s306
      %p310 = scmp.eq.s32.totalorder %s30, 0
      %p311 = por %p309, %p310
      %p312 = scmp.ne.s32.totalorder %s304, %s306
      %p313 = scmp.eq.s32.totalorder %s35, 1
      %p314 = por %p312, %p313
      %p315 = scmp.ne.s32.totalorder %s306, %s307
      %p316 = scmp.eq.s32.totalorder %s35, 0
      %p317 = por %p315, %p316
      %p318 = scmp.ne.s32.totalorder %s306, %s307
      %p319 = scmp.eq.s32.totalorder %s36, 1
      %p320 = por %p318, %p319
      %p322 = scmp.ne.s32.totalorder %s307, %s321
      %p323 = scmp.eq.s32.totalorder %s36, 0
      %p324 = por %p322, %p323
      %s326 = sadd.s32 %s325, 1
      %p329 = scmp.eq.s32.totalorder %s30, 1
      %p330 = scmp.ne.s32.totalorder %s325, %s327
      %p331 = scmp.eq.s32.totalorder %s30, 0
      %p332 = por %p330, %p331
      %p333 = scmp.ne.s32.totalorder %s325, %s327
      %p334 = scmp.eq.s32.totalorder %s35, 1
      %p335 = por %p333, %p334
      %p336 = scmp.ne.s32.totalorder %s327, %s328
      %p337 = scmp.eq.s32.totalorder %s35, 0
      %p338 = por %p336, %p337
      %p339 = scmp.ne.s32.totalorder %s327, %s328
      %p340 = scmp.eq.s32.totalorder %s36, 1
      %p341 = por %p339, %p340
      %p343 = scmp.ne.s32.totalorder %s328, %s342
      %p344 = scmp.eq.s32.totalorder %s36, 0
      %p345 = por %p343, %p344
      %s346 = ssub.s32 %s30, %s37
      %p347 = scmp.eq.s32.totalorder %s346, 0
      %s349 = sadd.s32 %s348, 1
      %s350 = scalar_select %p347, %s348, %s349
      %p353 = pneg %p347
      %p354 = scmp.eq.s32.totalorder %s30, 1
      %p355 = por %p353, %p354
      %p356 = scmp.ne.s32.totalorder %s348, %s351
      %p357 = scmp.eq.s32.totalorder %s30, 0
      %p358 = por %p356, %p357
      %p359 = scmp.ne.s32.totalorder %s348, %s351
      %p360 = scmp.eq.s32.totalorder %s35, 1
      %p361 = por %p359, %p360
      %p362 = scmp.ne.s32.totalorder %s351, %s352
      %p363 = scmp.eq.s32.totalorder %s35, 0
      %p364 = por %p362, %p363
      %p365 = scmp.ne.s32.totalorder %s351, %s352
      %p366 = scmp.eq.s32.totalorder %s36, 1
      %p367 = por %p365, %p366
      %p369 = scmp.ne.s32.totalorder %s352, %s368
      %p370 = scmp.eq.s32.totalorder %s36, 0
      %p371 = por %p369, %p370
      %p372 = scmp.le.s32.totalorder 1, %s30
      %p373 = scmp.lt.s32.totalorder %s30, 3
      %p374 = pnand %p372, %p373
      %p375 = pneg %p374
      // Predicated region
      $region9: #{tpu_custom_call.1} parent=5 // pred_check
        _
      $region10: #{tpu_custom_call.1} parent=5 // pred_check_branch
        %377 = sbr.rel (%p374) target = $region12
      $region11: #{tpu_custom_call.1} parent=5 // pred_region
        %s378 = ssub.s32 %s30, 1
        // Predicated region
        $region13: #{tpu_custom_call.1} parent=11 // pred_check
          %p379 = pneg %p233
        $region14: #{tpu_custom_call.1} parent=11 // pred_check_branch
          %381 = sbr.rel (%p379) target = $region16
        $region15: #{tpu_custom_call.1} parent=11 // pred_region
          %383 = vsyncadd [#allocation6], 0
          %s384 = sshll.u32 %s7, 4
          %s385 = int_to_ptr.hbm [resolvable:$true] %s384
          %s386 = sshll.u32 [#allocation7], 4
          %s387 = int_to_ptr.vmem [resolvable:$true] %s386
          %392 = dma.hbm_to_vmem [thread:$0]  %s385, 1024, %s387, [#allocation6], 64, 64, 4
        $region16: #{tpu_custom_call.1} parent=11 // pred_fallthru
          _
        // Predicated region
        $region17: #{tpu_custom_call.1} parent=11 // pred_check
          %p393 = pneg %p254
        $region18: #{tpu_custom_call.1} parent=11 // pred_check_branch
          %395 = sbr.rel (%p393) target = $region20
        $region19: #{tpu_custom_call.1} parent=11 // pred_region
          %397 = vsyncadd [#allocation9], 0
          %s398 = sshll.u32 %s8, 4
          %s399 = int_to_ptr.hbm [resolvable:$true] %s398
          %s400 = sshll.u32 [#allocation8], 4
          %s401 = int_to_ptr.vmem [resolvable:$true] %s400
          %406 = dma.hbm_to_vmem [thread:$0]  %s399, 1024, %s401, [#allocation9], 64, 64, 4
        $region20: #{tpu_custom_call.1} parent=11 // pred_fallthru
          _
        // Predicated region
        $region21: #{tpu_custom_call.1} parent=11 // pred_check
          %p407 = pneg %p275
        $region22: #{tpu_custom_call.1} parent=11 // pred_check_branch
          %409 = sbr.rel (%p407) target = $region24
        $region23: #{tpu_custom_call.1} parent=11 // pred_region
          %411 = vsyncadd [#allocation9], 0
          %s412 = sshll.u32 %s9, 4
          %s413 = int_to_ptr.hbm [resolvable:$true] %s412
          %s414 = sshll.u32 [#allocation10], 4
          %s415 = int_to_ptr.vmem [resolvable:$true] %s414
          %420 = dma.hbm_to_vmem [thread:$0]  %s413, 1024, %s415, [#allocation9], 64, 64, 4
        $region24: #{tpu_custom_call.1} parent=11 // pred_fallthru
          _
        // Predicated region
        $region25: #{tpu_custom_call.1} parent=11 // pred_check
          %p421 = pneg %p296
        $region26: #{tpu_custom_call.1} parent=11 // pred_check_branch
          %423 = sbr.rel (%p421) target = $region28
        $region27: #{tpu_custom_call.1} parent=11 // pred_region
          _
        $region28: #{tpu_custom_call.1} parent=11 // pred_fallthru
          _
        // Predicated region
        $region29: #{tpu_custom_call.1} parent=11 // pred_check
          %p424 = pneg %p317
        $region30: #{tpu_custom_call.1} parent=11 // pred_check_branch
          %426 = sbr.rel (%p424) target = $region32
        $region31: #{tpu_custom_call.1} parent=11 // pred_region
          %428 = vsyncadd [#allocation12], 0
          %s429 = sshll.u32 %s11, 4
          %s430 = int_to_ptr.hbm [resolvable:$true] %s429
          %s431 = sshll.u32 [#allocation11], 4
          %s432 = int_to_ptr.vmem [resolvable:$true] %s431
          %437 = dma.hbm_to_vmem [thread:$0]  %s430, 1024, %s432, [#allocation12], 64, 64, 4
        $region32: #{tpu_custom_call.1} parent=11 // pred_fallthru
          _
        // Predicated region
        $region33: #{tpu_custom_call.1} parent=11 // pred_check
          %p438 = pneg %p338
        $region34: #{tpu_custom_call.1} parent=11 // pred_check_branch
          %440 = sbr.rel (%p438) target = $region36
        $region35: #{tpu_custom_call.1} parent=11 // pred_region
          _
        $region36: #{tpu_custom_call.1} parent=11 // pred_fallthru
          _
      $region12: #{tpu_custom_call.1} parent=5 // pred_fallthru
        _
      %p441 = scmp.lt.s32.totalorder %s30, 2
      // Predicated region
      $region37: #{tpu_custom_call.1} parent=5 // pred_check
        %p442 = pneg %p441
      $region38: #{tpu_custom_call.1} parent=5 // pred_check_branch
        %444 = sbr.rel (%p442) target = $region40
      $region39: #{tpu_custom_call.1} parent=5 // pred_region
        // Predicated region
        $region41: #{tpu_custom_call.1} parent=39 // pred_check
          %p445 = pneg %p50
        $region42: #{tpu_custom_call.1} parent=39 // pred_check_branch
          %447 = sbr.rel (%p445) target = $region44
        $region43: #{tpu_custom_call.1} parent=39 // pred_region
          %p448 = scmp.lt.s32.totalorder %s30, 1
          %s449 = scalar_select %p448, %s30, 1
          %s450 = smul.addr %s449, 32
          %s451 = smul.addr %s450, 4
          %s452 = scalar_lea.vmem %s0, %s451
        $region44: #{tpu_custom_call.1} parent=39 // pred_fallthru
          _
        // Predicated region
        $region45: #{tpu_custom_call.1} parent=39 // pred_check
          %p453 = pneg %p76
        $region46: #{tpu_custom_call.1} parent=39 // pred_check_branch
          %455 = sbr.rel (%p453) target = $region48
        $region47: #{tpu_custom_call.1} parent=39 // pred_region
          %p456 = scmp.lt.s32.totalorder %s30, 1
          %s457 = scalar_select %p456, %s30, 1
          %s458 = smul.addr %s457, 20
          %s459 = smul.addr %s458, 8
          %s460 = scalar_lea.vmem %s1, %s459
        $region48: #{tpu_custom_call.1} parent=39 // pred_fallthru
          _
        // Predicated region
        $region49: #{tpu_custom_call.1} parent=39 // pred_check
          %p461 = pneg %p102
        $region50: #{tpu_custom_call.1} parent=39 // pred_check_branch
          %463 = sbr.rel (%p461) target = $region52
        $region51: #{tpu_custom_call.1} parent=39 // pred_region
          %p464 = scmp.lt.s32.totalorder %s30, 1
          %s465 = scalar_select %p464, %s30, 1
          %s466 = smul.addr %s465, 64
          %s467 = smul.addr %s466, 4
          %s468 = scalar_lea.vmem %s2, %s467
        $region52: #{tpu_custom_call.1} parent=39 // pred_fallthru
          _
        // Predicated region
        $region53: #{tpu_custom_call.1} parent=39 // pred_check
          %p469 = pneg %p128
        $region54: #{tpu_custom_call.1} parent=39 // pred_check_branch
          %471 = sbr.rel (%p469) target = $region56
        $region55: #{tpu_custom_call.1} parent=39 // pred_region
          %p472 = scmp.lt.s32.totalorder %s30, 1
          %s473 = scalar_select %p472, %s30, 1
          %s474 = smul.addr %s473, 40
          %s475 = smul.addr %s474, 4
          %s476 = scalar_lea.vmem %s3, %s475
        $region56: #{tpu_custom_call.1} parent=39 // pred_fallthru
          _
        // Predicated region
        $region57: #{tpu_custom_call.1} parent=39 // pred_check
          %p477 = pneg %p154
        $region58: #{tpu_custom_call.1} parent=39 // pred_check_branch
          %479 = sbr.rel (%p477) target = $region60
        $region59: #{tpu_custom_call.1} parent=39 // pred_region
          %s480 = sand.u32 %s144, 1
          %s481 = scalar_lea.sflag [#allocation3], %s480
          %s482 = sand.u32 %s144, 1
          %s483 = smul.addr %s482, 32
          %s484 = scalar_lea.vmem [#allocation2], %s483
          %486 = vsyncadd %s481, 0
          %s487 = smul.addr %s30, 8
          %s488 = smul.addr %s487, 4
          %s489 = scalar_lea.hbm %s4, %s488
          %s490 = sshll.u32 %s489, 4
          %s491 = int_to_ptr.hbm [resolvable:$true] %s490
          %s492 = sshll.u32 %s484, 4
          %s493 = int_to_ptr.vmem [resolvable:$true] %s492
          %498 = dma.hbm_to_vmem [thread:$0]  %s491, 512, %s493, %s481, 128, 128, 8
        $region60: #{tpu_custom_call.1} parent=39 // pred_fallthru
          _
        // Predicated region
        $region61: #{tpu_custom_call.1} parent=39 // pred_check
          %p499 = pneg %p180
        $region62: #{tpu_custom_call.1} parent=39 // pred_check_branch
          %501 = sbr.rel (%p499) target = $region64
        $region63: #{tpu_custom_call.1} parent=39 // pred_region
          %p502 = scmp.lt.s32.totalorder %s30, 1
          %s503 = scalar_select %p502, %s30, 1
          %s504 = smul.addr %s503, 4
          %s505 = smul.addr %s504, 8
          %s506 = scalar_lea.vmem %s5, %s505
        $region64: #{tpu_custom_call.1} parent=39 // pred_fallthru
          _
        // Predicated region
        $region65: #{tpu_custom_call.1} parent=39 // pred_check
          %p507 = pneg %p206
        $region66: #{tpu_custom_call.1} parent=39 // pred_check_branch
          %509 = sbr.rel (%p507) target = $region68
        $region67: #{tpu_custom_call.1} parent=39 // pred_region
          %s510 = sand.u32 %s30, 1
          %s511 = scalar_lea.sflag [#allocation6], %s510
          %s512 = sand.u32 %s196, 1
          %s513 = smul.addr %s512, 32
          %s514 = scalar_lea.vmem [#allocation5], %s513
          %516 = vsyncadd %s511, 0
          %s517 = smul.addr %s30, 4
          %s518 = smul.addr %s517, 8
          %s519 = scalar_lea.hbm %s6, %s518
          %s520 = sshll.u32 %s519, 4
          %s521 = int_to_ptr.hbm [resolvable:$true] %s520
          %s522 = sshll.u32 %s514, 4
          %s523 = int_to_ptr.vmem [resolvable:$true] %s522
          %528 = dma.hbm_to_vmem [thread:$0]  %s521, 512, %s523, %s511, 128, 128, 8
        $region68: #{tpu_custom_call.1} parent=39 // pred_fallthru
          _
      $region40: #{tpu_custom_call.1} parent=5 // pred_fallthru
        _
      %p529 = scmp.le.s32.totalorder 1, %s30
      %p530 = scmp.lt.s32.totalorder %s30, 3
      %p531 = pnand %p529, %p530
      %p532 = pneg %p531
      // Predicated region
      $region69: #{tpu_custom_call.1} parent=5 // pred_check
        _
      $region70: #{tpu_custom_call.1} parent=5 // pred_check_branch
        %534 = sbr.rel (%p531) target = $region72
      $region71: #{tpu_custom_call.1} parent=5 // pred_region
        %s535 = ssub.s32 %s30, 1
        %s536 = sand.u32 %s147, 1
        %s537 = scalar_lea.sflag [#allocation3], %s536
        %s538 = sand.u32 %s147, 1
        %s539 = smul.addr %s538, 32
        %s540 = scalar_lea.vmem [#allocation2], %s539
        // Predicated region
        $region73: #{tpu_custom_call.1} parent=71 // pred_check
          %p541 = pneg %p160
        $region74: #{tpu_custom_call.1} parent=71 // pred_check_branch
          %543 = sbr.rel (%p541) target = $region76
        $region75: #{tpu_custom_call.1} parent=71 // pred_region
          %545 = dma.done %s537, 512
        $region76: #{tpu_custom_call.1} parent=71 // pred_fallthru
          _
        %s546 = sand.u32 %s35, 1
        %s547 = scalar_lea.sflag [#allocation6], %s546
        %s548 = sand.u32 %s199, 1
        %s549 = smul.addr %s548, 32
        %s550 = scalar_lea.vmem [#allocation5], %s549
        // Predicated region
        $region77: #{tpu_custom_call.1} parent=71 // pred_check
          %p551 = pneg %p212
        $region78: #{tpu_custom_call.1} parent=71 // pred_check_branch
          %553 = sbr.rel (%p551) target = $region80
        $region79: #{tpu_custom_call.1} parent=71 // pred_region
          %555 = dma.done %s547, 512
        $region80: #{tpu_custom_call.1} parent=71 // pred_fallthru
          _
        // Predicated region
        $region81: #{tpu_custom_call.1} parent=71 // pred_check
          %p556 = pneg %p233
        $region82: #{tpu_custom_call.1} parent=71 // pred_check_branch
          %558 = sbr.rel (%p556) target = $region84
        $region83: #{tpu_custom_call.1} parent=71 // pred_region
          %560 = dma.done [#allocation6], 1024
        $region84: #{tpu_custom_call.1} parent=71 // pred_fallthru
          _
        // Predicated region
        $region85: #{tpu_custom_call.1} parent=71 // pred_check
          %p561 = pneg %p254
        $region86: #{tpu_custom_call.1} parent=71 // pred_check_branch
          %563 = sbr.rel (%p561) target = $region88
        $region87: #{tpu_custom_call.1} parent=71 // pred_region
          %565 = dma.done [#allocation9], 1024
        $region88: #{tpu_custom_call.1} parent=71 // pred_fallthru
          _
        // Predicated region
        $region89: #{tpu_custom_call.1} parent=71 // pred_check
          %p566 = pneg %p275
        $region90: #{tpu_custom_call.1} parent=71 // pred_check_branch
          %568 = sbr.rel (%p566) target = $region92
        $region91: #{tpu_custom_call.1} parent=71 // pred_region
          %570 = dma.done [#allocation9], 1024
        $region92: #{tpu_custom_call.1} parent=71 // pred_fallthru
          _
        // Predicated region
        $region93: #{tpu_custom_call.1} parent=71 // pred_check
          %p571 = pneg %p317
        $region94: #{tpu_custom_call.1} parent=71 // pred_check_branch
          %573 = sbr.rel (%p571) target = $region96
        $region95: #{tpu_custom_call.1} parent=71 // pred_region
          %575 = dma.done [#allocation12], 1024
        $region96: #{tpu_custom_call.1} parent=71 // pred_fallthru
          _
        %p576 = scmp.lt.s32.totalorder %s35, 1
        %s577 = scalar_select %p576, %s35, 1
        %s578 = smul.addr %s577, 32
        %s579 = smul.addr %s578, 4
        %s580 = scalar_lea.vmem %s0, %s579
        %p581 = pneg %p56
        %p582 = pneg %p53
        %p583 = scmp.lt.s32.totalorder %s35, 1
        %s584 = scalar_select %p583, %s35, 1
        %s585 = smul.addr %s584, 20
        %s586 = smul.addr %s585, 8
        %s587 = scalar_lea.vmem %s1, %s586
        %p588 = pneg %p82
        %p589 = pneg %p79
        %p590 = scmp.lt.s32.totalorder %s35, 1
        %s591 = scalar_select %p590, %s35, 1
        %s592 = smul.addr %s591, 64
        %s593 = smul.addr %s592, 4
        %s594 = scalar_lea.vmem %s2, %s593
        %p595 = pneg %p108
        %p596 = pneg %p105
        %p597 = scmp.lt.s32.totalorder %s35, 1
        %s598 = scalar_select %p597, %s35, 1
        %s599 = smul.addr %s598, 40
        %s600 = smul.addr %s599, 4
        %s601 = scalar_lea.vmem %s3, %s600
        %p602 = pneg %p134
        %p603 = pneg %p131
        %s604 = sand.u32 %s147, 1
        %s605 = scalar_lea.sflag [#allocation3], %s604
        %s606 = sand.u32 %s147, 1
        %s607 = smul.addr %s606, 32
        %s608 = scalar_lea.vmem [#allocation2], %s607
        %p609 = pneg %p160
        %p610 = pneg %p157
        %p611 = scmp.lt.s32.totalorder %s35, 1
        %s612 = scalar_select %p611, %s35, 1
        %s613 = smul.addr %s612, 4
        %s614 = smul.addr %s613, 8
        %s615 = scalar_lea.vmem %s5, %s614
        %p616 = pneg %p186
        %p617 = pneg %p183
        %s618 = sand.u32 %s35, 1
        %s619 = scalar_lea.sflag [#allocation6], %s618
        %s620 = sand.u32 %s199, 1
        %s621 = smul.addr %s620, 32
        %s622 = scalar_lea.vmem [#allocation5], %s621
        %p623 = pneg %p212
        %p624 = pneg %p209
        %p625 = pneg %p233
        %p626 = pneg %p230
        %p627 = pneg %p254
        %p628 = pneg %p251
        %p629 = pneg %p275
        %p630 = pneg %p272
        %p631 = pneg %p296
        %p632 = pneg %p293
        %p633 = pneg %p317
        %p634 = pneg %p314
        %p635 = pneg %p338
        %p636 = pneg %p335
        %p637 = pneg %p364
        %p638 = pneg %p361
        %s639 = sand.u32 %s351, 1
        %s640 = scalar_lea.sflag [#allocation4], %s639
        %s641 = sand.u32 %s351, 1
        %s642 = smul.addr %s641, 32
        %s643 = scalar_lea.vmem [#allocation13], %s642
        %p644 = scmp.lt.s32.totalorder %s35, 1
        %s645 = scalar_select %p644, %s35, 1
        %s646 = smul.addr %s645, 32
        %s647 = smul.addr %s646, 4
        %s648 = scalar_lea.vmem %s0, %s647
        %p649 = scmp.lt.s32.totalorder %s35, 1
        %s650 = scalar_select %p649, %s35, 1
        %s651 = smul.addr %s650, 20
        %s652 = smul.addr %s651, 8
        %s653 = scalar_lea.vmem %s1, %s652
        %p654 = scmp.lt.s32.totalorder %s35, 1
        %s655 = scalar_select %p654, %s35, 1
        %s656 = smul.addr %s655, 64
        %s657 = smul.addr %s656, 4
        %s658 = scalar_lea.vmem %s2, %s657
        %p659 = scmp.lt.s32.totalorder %s35, 1
        %s660 = scalar_select %p659, %s35, 1
        %s661 = smul.addr %s660, 40
        %s662 = smul.addr %s661, 4
        %s663 = scalar_lea.vmem %s3, %s662
        %p664 = scmp.lt.s32.totalorder %s35, 1
        %s665 = scalar_select %p664, %s35, 1
        %s666 = smul.addr %s665, 4
        %s667 = smul.addr %s666, 8
        %s668 = scalar_lea.vmem %s5, %s667
        %v670 = vld [vmem:[%s648] sm:$0xf]
        %v671 = vld [vmem:[%s648 + $0x4] sm:$0xf]
        %v672 = vld [vmem:[%s648 + $0x8] sm:$0xf]
        %v673 = vld [vmem:[%s648 + $0xc] sm:$0xf]
        %v674 = vld [vmem:[%s648 + $0x10] sm:$0xf]
        %v675 = vld [vmem:[%s648 + $0x14] sm:$0xf]
        %v676 = vld [vmem:[%s648 + $0x18] sm:$0xf]
        %v677 = vld [vmem:[%s648 + $0x1c] sm:$0xf]
        %v678 = vld [vmem:[%s648 + $0x20] sm:$0xf]
        %v679 = vld [vmem:[%s648 + $0x24] sm:$0xf]
        %v680 = vld [vmem:[%s648 + $0x28] sm:$0xf]
        %v681 = vld [vmem:[%s648 + $0x2c] sm:$0xf]
        %v682 = vld [vmem:[%s648 + $0x30] sm:$0xf]
        %v683 = vld [vmem:[%s648 + $0x34] sm:$0xf]
        %v684 = vld [vmem:[%s648 + $0x38] sm:$0xf]
        %v685 = vld [vmem:[%s648 + $0x3c] sm:$0xf]
        %v686 = vld [vmem:[%s648 + $0x40] sm:$0xf]
        %v687 = vld [vmem:[%s648 + $0x44] sm:$0xf]
        %v688 = vld [vmem:[%s648 + $0x48] sm:$0xf]
        %v689 = vld [vmem:[%s648 + $0x4c] sm:$0xf]
        %v690 = vld [vmem:[%s648 + $0x50] sm:$0xf]
        %v691 = vld [vmem:[%s648 + $0x54] sm:$0xf]
        %v692 = vld [vmem:[%s648 + $0x58] sm:$0xf]
        %v693 = vld [vmem:[%s648 + $0x5c] sm:$0xf]
        %v694 = vld [vmem:[%s648 + $0x60] sm:$0xf]
        %v695 = vld [vmem:[%s648 + $0x64] sm:$0xf]
        %v696 = vld [vmem:[%s648 + $0x68] sm:$0xf]
        %v697 = vld [vmem:[%s648 + $0x6c] sm:$0xf]
        %v698 = vld [vmem:[%s648 + $0x70] sm:$0xf]
        %v699 = vld [vmem:[%s648 + $0x74] sm:$0xf]
        %v700 = vld [vmem:[%s648 + $0x78] sm:$0xf]
        %v701 = vld [vmem:[%s648 + $0x7c] sm:$0xf]
        %v702 = vld [vmem:[#allocation7] sm:$0xf]
        %v703 = vld [vmem:[#allocation7 + $0x4] sm:$0xf]
        %v704 = vld [vmem:[#allocation7 + $0x8] sm:$0xf]
        %v705 = vld [vmem:[#allocation7 + $0xc] sm:$0xf]
        %v706 = vld [vmem:[#allocation7 + $0x10] sm:$0xf]
        %v707 = vld [vmem:[#allocation7 + $0x14] sm:$0xf]
        %v708 = vld [vmem:[#allocation7 + $0x18] sm:$0xf]
        %v709 = vld [vmem:[#allocation7 + $0x1c] sm:$0xf]
        %v710 = vld [vmem:[#allocation7 + $0x20] sm:$0xf]
        %v711 = vld [vmem:[#allocation7 + $0x24] sm:$0xf]
        %v712 = vld [vmem:[#allocation7 + $0x28] sm:$0xf]
        %v713 = vld [vmem:[#allocation7 + $0x2c] sm:$0xf]
        %v714 = vld [vmem:[#allocation7 + $0x30] sm:$0xf]
        %v715 = vld [vmem:[#allocation7 + $0x34] sm:$0xf]
        %v716 = vld [vmem:[#allocation7 + $0x38] sm:$0xf]
        %v717 = vld [vmem:[#allocation7 + $0x3c] sm:$0xf]
        %v750 = vunpack.c.l.b16 %v670
        %v751 = vunpack.c.l.b16 %v671
        %v752 = vunpack.c.l.b16 %v672
        %v753 = vunpack.c.l.b16 %v673
        %v754 = vunpack.c.l.b16 %v674
        %v755 = vunpack.c.l.b16 %v675
        %v756 = vunpack.c.l.b16 %v676
        %v757 = vunpack.c.l.b16 %v677
        %v758 = vunpack.c.l.b16 %v678
        %v759 = vunpack.c.l.b16 %v679
        %v760 = vunpack.c.l.b16 %v680
        %v761 = vunpack.c.l.b16 %v681
        %v762 = vunpack.c.l.b16 %v682
        %v763 = vunpack.c.l.b16 %v683
        %v764 = vunpack.c.l.b16 %v684
        %v765 = vunpack.c.l.b16 %v685
        %v766 = vunpack.c.l.b16 %v686
        %v767 = vunpack.c.l.b16 %v687
        %v768 = vunpack.c.l.b16 %v688
        %v769 = vunpack.c.l.b16 %v689
        %v770 = vunpack.c.l.b16 %v690
        %v771 = vunpack.c.l.b16 %v691
        %v772 = vunpack.c.l.b16 %v692
        %v773 = vunpack.c.l.b16 %v693
        %v774 = vunpack.c.l.b16 %v694
        %v775 = vunpack.c.l.b16 %v695
        %v776 = vunpack.c.l.b16 %v696
        %v777 = vunpack.c.l.b16 %v697
        %v778 = vunpack.c.l.b16 %v698
        %v779 = vunpack.c.l.b16 %v699
        %v780 = vunpack.c.l.b16 %v700
        %v781 = vunpack.c.l.b16 %v701
        %v782 = vpack.c.b16 %v751, %v750
        %v783 = vpack.c.b16 %v753, %v752
        %v784 = vpack.c.b16 %v755, %v754
        %v785 = vpack.c.b16 %v757, %v756
        %v786 = vpack.c.b16 %v759, %v758
        %v787 = vpack.c.b16 %v761, %v760
        %v788 = vpack.c.b16 %v763, %v762
        %v789 = vpack.c.b16 %v765, %v764
        %v790 = vpack.c.b16 %v767, %v766
        %v791 = vpack.c.b16 %v769, %v768
        %v792 = vpack.c.b16 %v771, %v770
        %v793 = vpack.c.b16 %v773, %v772
        %v794 = vpack.c.b16 %v775, %v774
        %v795 = vpack.c.b16 %v777, %v776
        %v796 = vpack.c.b16 %v779, %v778
        %v797 = vpack.c.b16 %v781, %v780
        %v830 = vunpack.c.l.b16 %v702
        %v831 = vunpack.c.l.b16 %v703
        %v832 = vunpack.c.l.b16 %v704
        %v833 = vunpack.c.l.b16 %v705
        %v834 = vunpack.c.l.b16 %v706
        %v835 = vunpack.c.l.b16 %v707
        %v836 = vunpack.c.l.b16 %v708
        %v837 = vunpack.c.l.b16 %v709
        %v838 = vunpack.c.l.b16 %v710
        %v839 = vunpack.c.l.b16 %v711
        %v840 = vunpack.c.l.b16 %v712
        %v841 = vunpack.c.l.b16 %v713
        %v842 = vunpack.c.l.b16 %v714
        %v843 = vunpack.c.l.b16 %v715
        %v844 = vunpack.c.l.b16 %v716
        %v845 = vunpack.c.l.b16 %v717
        %v846 = vpack.c.b16 %v831, %v830
        %v847 = vpack.c.b16 %v833, %v832
        %v848 = vpack.c.b16 %v835, %v834
        %v849 = vpack.c.b16 %v837, %v836
        %v850 = vpack.c.b16 %v839, %v838
        %v851 = vpack.c.b16 %v841, %v840
        %v852 = vpack.c.b16 %v843, %v842
        %v853 = vpack.c.b16 %v845, %v844
        %862 = vmatpush.bf16.msra.mxu0 %v853
        %863 = vmatpush.bf16.msra.mxu0 %v852
        %864 = vmatpush.bf16.msra.mxu0 %v851
        %865 = vmatpush.bf16.msra.mxu0 %v850
        %866 = vmatpush.bf16.msra.mxu0 %v849
        %867 = vmatpush.bf16.msra.mxu0 %v848
        %868 = vmatpush.bf16.msra.mxu0 %v847
        %869 = vmatpush.bf16.msra.mxu0 %v846
        %870 = vmatmul.bf16.gmra.mxu0 %v782
        %v871 = vpop.f32.mrf.mxu0
        %v872 = vadd.f32 0.0, %v871
        %v873 = vpop.f32.mrf.mxu0
        %v874 = vadd.f32 0.0, %v873
        %875 = vmatmul.bf16.gmra.mxu0 %v783
        %v876 = vpop.f32.mrf.mxu0
        %v877 = vadd.f32 0.0, %v876
        %v878 = vpop.f32.mrf.mxu0
        %v879 = vadd.f32 0.0, %v878
        %880 = vmatmul.bf16.gmra.mxu0 %v784
        %v881 = vpop.f32.mrf.mxu0
        %v882 = vadd.f32 0.0, %v881
        %v883 = vpop.f32.mrf.mxu0
        %v884 = vadd.f32 0.0, %v883
        %885 = vmatmul.bf16.gmra.mxu0 %v785
        %v886 = vpop.f32.mrf.mxu0
        %v887 = vadd.f32 0.0, %v886
        %v888 = vpop.f32.mrf.mxu0
        %v889 = vadd.f32 0.0, %v888
        %890 = vmatmul.bf16.gmra.mxu0 %v786
        %v891 = vpop.f32.mrf.mxu0
        %v892 = vadd.f32 0.0, %v891
        %v893 = vpop.f32.mrf.mxu0
        %v894 = vadd.f32 0.0, %v893
        %895 = vmatmul.bf16.gmra.mxu0 %v787
        %v896 = vpop.f32.mrf.mxu0
        %v897 = vadd.f32 0.0, %v896
        %v898 = vpop.f32.mrf.mxu0
        %v899 = vadd.f32 0.0, %v898
        %900 = vmatmul.bf16.gmra.mxu0 %v788
        %v901 = vpop.f32.mrf.mxu0
        %v902 = vadd.f32 0.0, %v901
        %v903 = vpop.f32.mrf.mxu0
        %v904 = vadd.f32 0.0, %v903
        %905 = vmatmul.bf16.gmra.mxu0 %v789
        %v906 = vpop.f32.mrf.mxu0
        %v907 = vadd.f32 0.0, %v906
        %v908 = vpop.f32.mrf.mxu0
        %v909 = vadd.f32 0.0, %v908
        %910 = vmatmul.bf16.gmra.mxu0 %v790
        %v911 = vpop.f32.mrf.mxu0
        %v912 = vadd.f32 0.0, %v911
        %v913 = vpop.f32.mrf.mxu0
        %v914 = vadd.f32 0.0, %v913
        %915 = vmatmul.bf16.gmra.mxu0 %v791
        %v916 = vpop.f32.mrf.mxu0
        %v917 = vadd.f32 0.0, %v916
        %v918 = vpop.f32.mrf.mxu0
        %v919 = vadd.f32 0.0, %v918
        %920 = vmatmul.bf16.gmra.mxu0 %v792
        %v921 = vpop.f32.mrf.mxu0
        %v922 = vadd.f32 0.0, %v921
        %v923 = vpop.f32.mrf.mxu0
        %v924 = vadd.f32 0.0, %v923
        %925 = vmatmul.bf16.gmra.mxu0 %v793
        %v926 = vpop.f32.mrf.mxu0
        %v927 = vadd.f32 0.0, %v926
        %v928 = vpop.f32.mrf.mxu0
        %v929 = vadd.f32 0.0, %v928
        %930 = vmatmul.bf16.gmra.mxu0 %v794
        %v931 = vpop.f32.mrf.mxu0
        %v932 = vadd.f32 0.0, %v931
        %v933 = vpop.f32.mrf.mxu0
        %v934 = vadd.f32 0.0, %v933
        %935 = vmatmul.bf16.gmra.mxu0 %v795
        %v936 = vpop.f32.mrf.mxu0
        %v937 = vadd.f32 0.0, %v936
        %v938 = vpop.f32.mrf.mxu0
        %v939 = vadd.f32 0.0, %v938
        %940 = vmatmul.bf16.gmra.mxu0 %v796
        %v941 = vpop.f32.mrf.mxu0
        %v942 = vadd.f32 0.0, %v941
        %v943 = vpop.f32.mrf.mxu0
        %v944 = vadd.f32 0.0, %v943
        %945 = vmatmul.bf16.gmra.mxu0 %v797
        %v946 = vpop.f32.mrf.mxu0
        %v947 = vadd.f32 0.0, %v946
        %v948 = vpop.f32.mrf.mxu0
        %v949 = vadd.f32 0.0, %v948
        %950 = vdwg.mxu0
        %v951 = vmax.f32 %v872, 0.0
        %v952 = vmax.f32 %v874, 0.0
        %v953 = vmax.f32 %v877, 0.0
        %v954 = vmax.f32 %v879, 0.0
        %v955 = vmax.f32 %v882, 0.0
        %v956 = vmax.f32 %v884, 0.0
        %v957 = vmax.f32 %v887, 0.0
        %v958 = vmax.f32 %v889, 0.0
        %v959 = vmax.f32 %v892, 0.0
        %v960 = vmax.f32 %v894, 0.0
        %v961 = vmax.f32 %v897, 0.0
        %v962 = vmax.f32 %v899, 0.0
        %v963 = vmax.f32 %v902, 0.0
        %v964 = vmax.f32 %v904, 0.0
        %v965 = vmax.f32 %v907, 0.0
        %v966 = vmax.f32 %v909, 0.0
        %v967 = vmax.f32 %v912, 0.0
        %v968 = vmax.f32 %v914, 0.0
        %v969 = vmax.f32 %v917, 0.0
        %v970 = vmax.f32 %v919, 0.0
        %v971 = vmax.f32 %v922, 0.0
        %v972 = vmax.f32 %v924, 0.0
        %v973 = vmax.f32 %v927, 0.0
        %v974 = vmax.f32 %v929, 0.0
        %v975 = vmax.f32 %v932, 0.0
        %v976 = vmax.f32 %v934, 0.0
        %v977 = vmax.f32 %v937, 0.0
        %v978 = vmax.f32 %v939, 0.0
        %v979 = vmax.f32 %v942, 0.0
        %v980 = vmax.f32 %v944, 0.0
        %v981 = vmax.f32 %v947, 0.0
        %v982 = vmax.f32 %v949, 0.0
        %v983 = vld [vmem:[%s663] sm:$0xff]
        %v984 = vld [vmem:[%s663 + $0x8] sm:$0xff]
        %v985 = vld [vmem:[%s663 + $0x10] sm:$0xff]
        %v986 = vld [vmem:[%s663 + $0x18] sm:$0xff]
        %v987 = vld [vmem:[%s663 + $0x20] sm:$0xff]
        %v988 = vld [vmem:[%s663 + $0x28] sm:$0xff]
        %v989 = vld [vmem:[%s663 + $0x30] sm:$0xff]
        %v990 = vld [vmem:[%s663 + $0x38] sm:$0xff]
        %v991 = vld [vmem:[%s663 + $0x40] sm:$0xff]
        %v992 = vld [vmem:[%s663 + $0x48] sm:$0xff]
        %v993 = vld [vmem:[%s663 + $0x50] sm:$0xff]
        %v994 = vld [vmem:[%s663 + $0x58] sm:$0xff]
        %v995 = vld [vmem:[%s663 + $0x60] sm:$0xff]
        %v996 = vld [vmem:[%s663 + $0x68] sm:$0xff]
        %v997 = vld [vmem:[%s663 + $0x70] sm:$0xff]
        %v998 = vld [vmem:[%s663 + $0x78] sm:$0xff]
        %v999 = vld [vmem:[%s663 + $0x80] sm:$0xff]
        %v1000 = vld [vmem:[%s663 + $0x88] sm:$0xff]
        %v1001 = vld [vmem:[%s663 + $0x90] sm:$0xff]
        %v1002 = vld [vmem:[%s663 + $0x98] sm:$0xff]
        %v1003 = vpack.c.bf16 %v952, %v951
        %v1004 = vpack.c.bf16 %v954, %v953
        %v1005 = vpack.c.bf16 %v956, %v955
        %v1006 = vpack.c.bf16 %v958, %v957
        %v1007 = vpack.c.bf16 %v960, %v959
        %v1008 = vpack.c.bf16 %v962, %v961
        %v1009 = vpack.c.bf16 %v964, %v963
        %v1010 = vpack.c.bf16 %v966, %v965
        %v1011 = vpack.c.bf16 %v968, %v967
        %v1012 = vpack.c.bf16 %v970, %v969
        %v1013 = vpack.c.bf16 %v972, %v971
        %v1014 = vpack.c.bf16 %v974, %v973
        %v1015 = vpack.c.bf16 %v976, %v975
        %v1016 = vpack.c.bf16 %v978, %v977
        %v1017 = vpack.c.bf16 %v980, %v979
        %v1018 = vpack.c.bf16 %v982, %v981
        %v1039 = vunpack.c.l.b16 %v983
        %v1040 = vunpack.c.h.b16 %v983
        %v1041 = vunpack.c.l.b16 %v984
        %v1042 = vunpack.c.h.b16 %v984
        %v1043 = vunpack.c.l.b16 %v985
        %v1044 = vunpack.c.h.b16 %v985
        %v1045 = vunpack.c.l.b16 %v986
        %v1046 = vunpack.c.h.b16 %v986
        %v1047 = vunpack.c.l.b16 %v987
        %v1048 = vunpack.c.h.b16 %v987
        %v1049 = vunpack.c.l.b16 %v988
        %v1050 = vunpack.c.h.b16 %v988
        %v1051 = vunpack.c.l.b16 %v989
        %v1052 = vunpack.c.h.b16 %v989
        %v1053 = vunpack.c.l.b16 %v990
        %v1054 = vunpack.c.h.b16 %v990
        %v1055 = vunpack.c.l.b16 %v991
        %v1056 = vunpack.c.h.b16 %v991
        %v1057 = vunpack.c.l.b16 %v992
        %v1058 = vunpack.c.h.b16 %v992
        %v1059 = vunpack.c.l.b16 %v993
        %v1060 = vunpack.c.h.b16 %v993
        %v1061 = vunpack.c.l.b16 %v994
        %v1062 = vunpack.c.h.b16 %v994
        %v1063 = vunpack.c.l.b16 %v995
        %v1064 = vunpack.c.h.b16 %v995
        %v1065 = vunpack.c.l.b16 %v996
        %v1066 = vunpack.c.h.b16 %v996
        %v1067 = vunpack.c.l.b16 %v997
        %v1068 = vunpack.c.h.b16 %v997
        %v1069 = vunpack.c.l.b16 %v998
        %v1070 = vunpack.c.h.b16 %v998
        %v1071 = vunpack.c.l.b16 %v999
        %v1072 = vunpack.c.h.b16 %v999
        %v1073 = vunpack.c.l.b16 %v1000
        %v1074 = vunpack.c.h.b16 %v1000
        %v1075 = vunpack.c.l.b16 %v1001
        %v1076 = vunpack.c.h.b16 %v1001
        %v1077 = vunpack.c.l.b16 %v1002
        %v1078 = vunpack.c.h.b16 %v1002
        %v1079 = vpack.c.b16 %v1041, %v1039
        %v1080 = vpack.c.b16 %v1042, %v1040
        %v1081 = vpack.c.b16 %v1045, %v1043
        %v1082 = vpack.c.b16 %v1046, %v1044
        %v1083 = vpack.c.b16 %v1049, %v1047
        %v1084 = vpack.c.b16 %v1050, %v1048
        %v1085 = vpack.c.b16 %v1053, %v1051
        %v1086 = vpack.c.b16 %v1054, %v1052
        %v1087 = vpack.c.b16 %v1057, %v1055
        %v1088 = vpack.c.b16 %v1058, %v1056
        %v1089 = vpack.c.b16 %v1061, %v1059
        %v1090 = vpack.c.b16 %v1062, %v1060
        %v1091 = vpack.c.b16 %v1065, %v1063
        %v1092 = vpack.c.b16 %v1066, %v1064
        %v1093 = vpack.c.b16 %v1069, %v1067
        %v1094 = vpack.c.b16 %v1070, %v1068
        %v1095 = vpack.c.b16 %v1073, %v1071
        %v1096 = vpack.c.b16 %v1074, %v1072
        %v1097 = vpack.c.b16 %v1077, %v1075
        %v1098 = vpack.c.b16 %v1078, %v1076
        %1119 = vmatpush.bf16.msra.mxu0 %v1010
        %1120 = vmatpush.bf16.msra.mxu0 %v1009
        %1121 = vmatpush.bf16.msra.mxu0 %v1008
        %1122 = vmatpush.bf16.msra.mxu0 %v1007
        %1123 = vmatpush.bf16.msra.mxu0 %v1006
        %1124 = vmatpush.bf16.msra.mxu0 %v1005
        %1125 = vmatpush.bf16.msra.mxu0 %v1004
        %1126 = vmatpush.bf16.msra.mxu0 %v1003
        %1127 = vmatmul.bf16.gmra.mxu0 %v1079
        %v1128 = vpop.f32.mrf.mxu0
        %v1129 = vadd.f32 0.0, %v1128
        %v1130 = vpop.f32.mrf.mxu0
        %v1131 = vadd.f32 0.0, %v1130
        %1132 = vmatmul.bf16.gmra.mxu0 %v1081
        %v1133 = vpop.f32.mrf.mxu0
        %v1134 = vadd.f32 0.0, %v1133
        %v1135 = vpop.f32.mrf.mxu0
        %v1136 = vadd.f32 0.0, %v1135
        %1137 = vmatmul.bf16.gmra.mxu0 %v1083
        %v1138 = vpop.f32.mrf.mxu0
        %v1139 = vadd.f32 0.0, %v1138
        %v1140 = vpop.f32.mrf.mxu0
        %v1141 = vadd.f32 0.0, %v1140
        %1142 = vmatmul.bf16.gmra.mxu0 %v1085
        %v1143 = vpop.f32.mrf.mxu0
        %v1144 = vadd.f32 0.0, %v1143
        %v1145 = vpop.f32.mrf.mxu0
        %v1146 = vadd.f32 0.0, %v1145
        %1147 = vmatmul.bf16.gmra.mxu0 %v1087
        %v1148 = vpop.f32.mrf.mxu0
        %v1149 = vadd.f32 0.0, %v1148
        %v1150 = vpop.f32.mrf.mxu0
        %v1151 = vadd.f32 0.0, %v1150
        %1152 = vmatmul.bf16.gmra.mxu0 %v1089
        %v1153 = vpop.f32.mrf.mxu0
        %v1154 = vadd.f32 0.0, %v1153
        %v1155 = vpop.f32.mrf.mxu0
        %v1156 = vadd.f32 0.0, %v1155
        %1157 = vmatmul.bf16.gmra.mxu0 %v1091
        %v1158 = vpop.f32.mrf.mxu0
        %v1159 = vadd.f32 0.0, %v1158
        %v1160 = vpop.f32.mrf.mxu0
        %v1161 = vadd.f32 0.0, %v1160
        %1162 = vmatmul.bf16.gmra.mxu0 %v1093
        %v1163 = vpop.f32.mrf.mxu0
        %v1164 = vadd.f32 0.0, %v1163
        %v1165 = vpop.f32.mrf.mxu0
        %v1166 = vadd.f32 0.0, %v1165
        %1167 = vmatmul.bf16.gmra.mxu0 %v1095
        %v1168 = vpop.f32.mrf.mxu0
        %v1169 = vadd.f32 0.0, %v1168
        %v1170 = vpop.f32.mrf.mxu0
        %v1171 = vadd.f32 0.0, %v1170
        %1172 = vmatmul.bf16.gmra.mxu0 %v1097
        %v1173 = vpop.f32.mrf.mxu0
        %v1174 = vadd.f32 0.0, %v1173
        %v1175 = vpop.f32.mrf.mxu0
        %v1176 = vadd.f32 0.0, %v1175
        %1177 = vdwg.mxu0
        %1178 = vmatpush.bf16.msra.mxu0 %v1018
        %1179 = vmatpush.bf16.msra.mxu0 %v1017
        %1180 = vmatpush.bf16.msra.mxu0 %v1016
        %1181 = vmatpush.bf16.msra.mxu0 %v1015
        %1182 = vmatpush.bf16.msra.mxu0 %v1014
        %1183 = vmatpush.bf16.msra.mxu0 %v1013
        %1184 = vmatpush.bf16.msra.mxu0 %v1012
        %1185 = vmatpush.bf16.msra.mxu0 %v1011
        %1186 = vmatmul.bf16.gmra.mxu0 %v1080
        %v1187 = vpop.f32.mrf.mxu0
        %v1188 = vadd.f32 %v1129, %v1187
        %v1189 = vpop.f32.mrf.mxu0
        %v1190 = vadd.f32 %v1131, %v1189
        %1191 = vmatmul.bf16.gmra.mxu0 %v1082
        %v1192 = vpop.f32.mrf.mxu0
        %v1193 = vadd.f32 %v1134, %v1192
        %v1194 = vpop.f32.mrf.mxu0
        %v1195 = vadd.f32 %v1136, %v1194
        %1196 = vmatmul.bf16.gmra.mxu0 %v1084
        %v1197 = vpop.f32.mrf.mxu0
        %v1198 = vadd.f32 %v1139, %v1197
        %v1199 = vpop.f32.mrf.mxu0
        %v1200 = vadd.f32 %v1141, %v1199
        %1201 = vmatmul.bf16.gmra.mxu0 %v1086
        %v1202 = vpop.f32.mrf.mxu0
        %v1203 = vadd.f32 %v1144, %v1202
        %v1204 = vpop.f32.mrf.mxu0
        %v1205 = vadd.f32 %v1146, %v1204
        %1206 = vmatmul.bf16.gmra.mxu0 %v1088
        %v1207 = vpop.f32.mrf.mxu0
        %v1208 = vadd.f32 %v1149, %v1207
        %v1209 = vpop.f32.mrf.mxu0
        %v1210 = vadd.f32 %v1151, %v1209
        %1211 = vmatmul.bf16.gmra.mxu0 %v1090
        %v1212 = vpop.f32.mrf.mxu0
        %v1213 = vadd.f32 %v1154, %v1212
        %v1214 = vpop.f32.mrf.mxu0
        %v1215 = vadd.f32 %v1156, %v1214
        %1216 = vmatmul.bf16.gmra.mxu0 %v1092
        %v1217 = vpop.f32.mrf.mxu0
        %v1218 = vadd.f32 %v1159, %v1217
        %v1219 = vpop.f32.mrf.mxu0
        %v1220 = vadd.f32 %v1161, %v1219
        %1221 = vmatmul.bf16.gmra.mxu0 %v1094
        %v1222 = vpop.f32.mrf.mxu0
        %v1223 = vadd.f32 %v1164, %v1222
        %v1224 = vpop.f32.mrf.mxu0
        %v1225 = vadd.f32 %v1166, %v1224
        %1226 = vmatmul.bf16.gmra.mxu0 %v1096
        %v1227 = vpop.f32.mrf.mxu0
        %v1228 = vadd.f32 %v1169, %v1227
        %v1229 = vpop.f32.mrf.mxu0
        %v1230 = vadd.f32 %v1171, %v1229
        %1231 = vmatmul.bf16.gmra.mxu0 %v1098
        %v1232 = vpop.f32.mrf.mxu0
        %v1233 = vadd.f32 %v1174, %v1232
        %v1234 = vpop.f32.mrf.mxu0
        %v1235 = vadd.f32 %v1176, %v1234
        %1236 = vdwg.mxu0
        %v1237 = vld [vmem:[%s658] sm:$0xff]
        %v1238 = vld [vmem:[%s658 + $0x8] sm:$0xff]
        %v1239 = vld [vmem:[%s658 + $0x10] sm:$0xff]
        %v1240 = vld [vmem:[%s658 + $0x18] sm:$0xff]
        %v1241 = vld [vmem:[%s658 + $0x20] sm:$0xff]
        %v1242 = vld [vmem:[%s658 + $0x28] sm:$0xff]
        %v1243 = vld [vmem:[%s658 + $0x30] sm:$0xff]
        %v1244 = vld [vmem:[%s658 + $0x38] sm:$0xff]
        %v1245 = vld [vmem:[%s658 + $0x40] sm:$0xff]
        %v1246 = vld [vmem:[%s658 + $0x48] sm:$0xff]
        %v1247 = vld [vmem:[%s658 + $0x50] sm:$0xff]
        %v1248 = vld [vmem:[%s658 + $0x58] sm:$0xff]
        %v1249 = vld [vmem:[%s658 + $0x60] sm:$0xff]
        %v1250 = vld [vmem:[%s658 + $0x68] sm:$0xff]
        %v1251 = vld [vmem:[%s658 + $0x70] sm:$0xff]
        %v1252 = vld [vmem:[%s658 + $0x78] sm:$0xff]
        %v1253 = vld [vmem:[%s658 + $0x80] sm:$0xff]
        %v1254 = vld [vmem:[%s658 + $0x88] sm:$0xff]
        %v1255 = vld [vmem:[%s658 + $0x90] sm:$0xff]
        %v1256 = vld [vmem:[%s658 + $0x98] sm:$0xff]
        %v1257 = vld [vmem:[%s658 + $0xa0] sm:$0xff]
        %v1258 = vld [vmem:[%s658 + $0xa8] sm:$0xff]
        %v1259 = vld [vmem:[%s658 + $0xb0] sm:$0xff]
        %v1260 = vld [vmem:[%s658 + $0xb8] sm:$0xff]
        %v1261 = vld [vmem:[%s658 + $0xc0] sm:$0xff]
        %v1262 = vld [vmem:[%s658 + $0xc8] sm:$0xff]
        %v1263 = vld [vmem:[%s658 + $0xd0] sm:$0xff]
        %v1264 = vld [vmem:[%s658 + $0xd8] sm:$0xff]
        %v1265 = vld [vmem:[%s658 + $0xe0] sm:$0xff]
        %v1266 = vld [vmem:[%s658 + $0xe8] sm:$0xff]
        %v1267 = vld [vmem:[%s658 + $0xf0] sm:$0xff]
        %v1268 = vld [vmem:[%s658 + $0xf8] sm:$0xff]
        %v1269 = vpack.c.bf16 %v1190, %v1188
        %v1270 = vpack.c.bf16 %v1195, %v1193
        %v1271 = vpack.c.bf16 %v1200, %v1198
        %v1272 = vpack.c.bf16 %v1205, %v1203
        %v1273 = vpack.c.bf16 %v1210, %v1208
        %v1274 = vpack.c.bf16 %v1215, %v1213
        %v1275 = vpack.c.bf16 %v1220, %v1218
        %v1276 = vpack.c.bf16 %v1225, %v1223
        %v1277 = vpack.c.bf16 %v1230, %v1228
        %v1278 = vpack.c.bf16 %v1235, %v1233
        %v1311 = vunpack.c.l.b16 %v1237
        %v1312 = vunpack.c.h.b16 %v1237
        %v1313 = vunpack.c.l.b16 %v1238
        %v1314 = vunpack.c.h.b16 %v1238
        %v1315 = vunpack.c.l.b16 %v1239
        %v1316 = vunpack.c.h.b16 %v1239
        %v1317 = vunpack.c.l.b16 %v1240
        %v1318 = vunpack.c.h.b16 %v1240
        %v1319 = vunpack.c.l.b16 %v1241
        %v1320 = vunpack.c.h.b16 %v1241
        %v1321 = vunpack.c.l.b16 %v1242
        %v1322 = vunpack.c.h.b16 %v1242
        %v1323 = vunpack.c.l.b16 %v1243
        %v1324 = vunpack.c.h.b16 %v1243
        %v1325 = vunpack.c.l.b16 %v1244
        %v1326 = vunpack.c.h.b16 %v1244
        %v1327 = vunpack.c.l.b16 %v1245
        %v1328 = vunpack.c.h.b16 %v1245
        %v1329 = vunpack.c.l.b16 %v1246
        %v1330 = vunpack.c.h.b16 %v1246
        %v1331 = vunpack.c.l.b16 %v1247
        %v1332 = vunpack.c.h.b16 %v1247
        %v1333 = vunpack.c.l.b16 %v1248
        %v1334 = vunpack.c.h.b16 %v1248
        %v1335 = vunpack.c.l.b16 %v1249
        %v1336 = vunpack.c.h.b16 %v1249
        %v1337 = vunpack.c.l.b16 %v1250
        %v1338 = vunpack.c.h.b16 %v1250
        %v1339 = vunpack.c.l.b16 %v1251
        %v1340 = vunpack.c.h.b16 %v1251
        %v1341 = vunpack.c.l.b16 %v1252
        %v1342 = vunpack.c.h.b16 %v1252
        %v1343 = vunpack.c.l.b16 %v1253
        %v1344 = vunpack.c.h.b16 %v1253
        %v1345 = vunpack.c.l.b16 %v1254
        %v1346 = vunpack.c.h.b16 %v1254
        %v1347 = vunpack.c.l.b16 %v1255
        %v1348 = vunpack.c.h.b16 %v1255
        %v1349 = vunpack.c.l.b16 %v1256
        %v1350 = vunpack.c.h.b16 %v1256
        %v1351 = vunpack.c.l.b16 %v1257
        %v1352 = vunpack.c.h.b16 %v1257
        %v1353 = vunpack.c.l.b16 %v1258
        %v1354 = vunpack.c.h.b16 %v1258
        %v1355 = vunpack.c.l.b16 %v1259
        %v1356 = vunpack.c.h.b16 %v1259
        %v1357 = vunpack.c.l.b16 %v1260
        %v1358 = vunpack.c.h.b16 %v1260
        %v1359 = vunpack.c.l.b16 %v1261
        %v1360 = vunpack.c.h.b16 %v1261
        %v1361 = vunpack.c.l.b16 %v1262
        %v1362 = vunpack.c.h.b16 %v1262
        %v1363 = vunpack.c.l.b16 %v1263
        %v1364 = vunpack.c.h.b16 %v1263
        %v1365 = vunpack.c.l.b16 %v1264
        %v1366 = vunpack.c.h.b16 %v1264
        %v1367 = vunpack.c.l.b16 %v1265
        %v1368 = vunpack.c.h.b16 %v1265
        %v1369 = vunpack.c.l.b16 %v1266
        %v1370 = vunpack.c.h.b16 %v1266
        %v1371 = vunpack.c.l.b16 %v1267
        %v1372 = vunpack.c.h.b16 %v1267
        %v1373 = vunpack.c.l.b16 %v1268
        %v1374 = vunpack.c.h.b16 %v1268
        %v1375 = vpack.c.b16 %v1313, %v1311
        %v1376 = vpack.c.b16 %v1314, %v1312
        %v1377 = vpack.c.b16 %v1317, %v1315
        %v1378 = vpack.c.b16 %v1318, %v1316
        %v1379 = vpack.c.b16 %v1321, %v1319
        %v1380 = vpack.c.b16 %v1322, %v1320
        %v1381 = vpack.c.b16 %v1325, %v1323
        %v1382 = vpack.c.b16 %v1326, %v1324
        %v1383 = vpack.c.b16 %v1329, %v1327
        %v1384 = vpack.c.b16 %v1330, %v1328
        %v1385 = vpack.c.b16 %v1333, %v1331
        %v1386 = vpack.c.b16 %v1334, %v1332
        %v1387 = vpack.c.b16 %v1337, %v1335
        %v1388 = vpack.c.b16 %v1338, %v1336
        %v1389 = vpack.c.b16 %v1341, %v1339
        %v1390 = vpack.c.b16 %v1342, %v1340
        %v1391 = vpack.c.b16 %v1345, %v1343
        %v1392 = vpack.c.b16 %v1346, %v1344
        %v1393 = vpack.c.b16 %v1349, %v1347
        %v1394 = vpack.c.b16 %v1350, %v1348
        %v1395 = vpack.c.b16 %v1353, %v1351
        %v1396 = vpack.c.b16 %v1354, %v1352
        %v1397 = vpack.c.b16 %v1357, %v1355
        %v1398 = vpack.c.b16 %v1358, %v1356
        %v1399 = vpack.c.b16 %v1361, %v1359
        %v1400 = vpack.c.b16 %v1362, %v1360
        %v1401 = vpack.c.b16 %v1365, %v1363
        %v1402 = vpack.c.b16 %v1366, %v1364
        %v1403 = vpack.c.b16 %v1369, %v1367
        %v1404 = vpack.c.b16 %v1370, %v1368
        %v1405 = vpack.c.b16 %v1373, %v1371
        %v1406 = vpack.c.b16 %v1374, %v1372
        %vm1423 = vcmask 261120
        %v1425 = vsel %vm1423, %v1376, 0
        %v1428 = vsel %vm1423, %v1378, 0
        %v1431 = vsel %vm1423, %v1380, 0
        %v1434 = vsel %vm1423, %v1382, 0
        %v1437 = vsel %vm1423, %v1384, 0
        %v1440 = vsel %vm1423, %v1386, 0
        %v1443 = vsel %vm1423, %v1388, 0
        %v1446 = vsel %vm1423, %v1390, 0
        %v1449 = vsel %vm1423, %v1392, 0
        %v1452 = vsel %vm1423, %v1394, 0
        %v1455 = vsel %vm1423, %v1396, 0
        %v1458 = vsel %vm1423, %v1398, 0
        %v1461 = vsel %vm1423, %v1400, 0
        %v1464 = vsel %vm1423, %v1402, 0
        %v1467 = vsel %vm1423, %v1404, 0
        %v1470 = vsel %vm1423, %v1406, 0
        %1472 = vmatpush.bf16.msra.mxu0 %v1276
        %1473 = vmatpush.bf16.msra.mxu0 %v1275
        %1474 = vmatpush.bf16.msra.mxu0 %v1274
        %1475 = vmatpush.bf16.msra.mxu0 %v1273
        %1476 = vmatpush.bf16.msra.mxu0 %v1272
        %1477 = vmatpush.bf16.msra.mxu0 %v1271
        %1478 = vmatpush.bf16.msra.mxu0 %v1270
        %1479 = vmatpush.bf16.msra.mxu0 %v1269
        %1480 = vmatmul.bf16.gmra.mxu0 %v1375
        %v1481 = vpop.f32.mrf.mxu0
        %v1482 = vadd.f32 0.0, %v1481
        %v1483 = vpop.f32.mrf.mxu0
        %v1484 = vadd.f32 0.0, %v1483
        %1485 = vmatmul.bf16.gmra.mxu0 %v1377
        %v1486 = vpop.f32.mrf.mxu0
        %v1487 = vadd.f32 0.0, %v1486
        %v1488 = vpop.f32.mrf.mxu0
        %v1489 = vadd.f32 0.0, %v1488
        %1490 = vmatmul.bf16.gmra.mxu0 %v1379
        %v1491 = vpop.f32.mrf.mxu0
        %v1492 = vadd.f32 0.0, %v1491
        %v1493 = vpop.f32.mrf.mxu0
        %v1494 = vadd.f32 0.0, %v1493
        %1495 = vmatmul.bf16.gmra.mxu0 %v1381
        %v1496 = vpop.f32.mrf.mxu0
        %v1497 = vadd.f32 0.0, %v1496
        %v1498 = vpop.f32.mrf.mxu0
        %v1499 = vadd.f32 0.0, %v1498
        %1500 = vmatmul.bf16.gmra.mxu0 %v1383
        %v1501 = vpop.f32.mrf.mxu0
        %v1502 = vadd.f32 0.0, %v1501
        %v1503 = vpop.f32.mrf.mxu0
        %v1504 = vadd.f32 0.0, %v1503
        %1505 = vmatmul.bf16.gmra.mxu0 %v1385
        %v1506 = vpop.f32.mrf.mxu0
        %v1507 = vadd.f32 0.0, %v1506
        %v1508 = vpop.f32.mrf.mxu0
        %v1509 = vadd.f32 0.0, %v1508
        %1510 = vmatmul.bf16.gmra.mxu0 %v1387
        %v1511 = vpop.f32.mrf.mxu0
        %v1512 = vadd.f32 0.0, %v1511
        %v1513 = vpop.f32.mrf.mxu0
        %v1514 = vadd.f32 0.0, %v1513
        %1515 = vmatmul.bf16.gmra.mxu0 %v1389
        %v1516 = vpop.f32.mrf.mxu0
        %v1517 = vadd.f32 0.0, %v1516
        %v1518 = vpop.f32.mrf.mxu0
        %v1519 = vadd.f32 0.0, %v1518
        %1520 = vmatmul.bf16.gmra.mxu0 %v1391
        %v1521 = vpop.f32.mrf.mxu0
        %v1522 = vadd.f32 0.0, %v1521
        %v1523 = vpop.f32.mrf.mxu0
        %v1524 = vadd.f32 0.0, %v1523
        %1525 = vmatmul.bf16.gmra.mxu0 %v1393
        %v1526 = vpop.f32.mrf.mxu0
        %v1527 = vadd.f32 0.0, %v1526
        %v1528 = vpop.f32.mrf.mxu0
        %v1529 = vadd.f32 0.0, %v1528
        %1530 = vmatmul.bf16.gmra.mxu0 %v1395
        %v1531 = vpop.f32.mrf.mxu0
        %v1532 = vadd.f32 0.0, %v1531
        %v1533 = vpop.f32.mrf.mxu0
        %v1534 = vadd.f32 0.0, %v1533
        %1535 = vmatmul.bf16.gmra.mxu0 %v1397
        %v1536 = vpop.f32.mrf.mxu0
        %v1537 = vadd.f32 0.0, %v1536
        %v1538 = vpop.f32.mrf.mxu0
        %v1539 = vadd.f32 0.0, %v1538
        %1540 = vmatmul.bf16.gmra.mxu0 %v1399
        %v1541 = vpop.f32.mrf.mxu0
        %v1542 = vadd.f32 0.0, %v1541
        %v1543 = vpop.f32.mrf.mxu0
        %v1544 = vadd.f32 0.0, %v1543
        %1545 = vmatmul.bf16.gmra.mxu0 %v1401
        %v1546 = vpop.f32.mrf.mxu0
        %v1547 = vadd.f32 0.0, %v1546
        %v1548 = vpop.f32.mrf.mxu0
        %v1549 = vadd.f32 0.0, %v1548
        %1550 = vmatmul.bf16.gmra.mxu0 %v1403
        %v1551 = vpop.f32.mrf.mxu0
        %v1552 = vadd.f32 0.0, %v1551
        %v1553 = vpop.f32.mrf.mxu0
        %v1554 = vadd.f32 0.0, %v1553
        %1555 = vmatmul.bf16.gmra.mxu0 %v1405
        %v1556 = vpop.f32.mrf.mxu0
        %v1557 = vadd.f32 0.0, %v1556
        %v1558 = vpop.f32.mrf.mxu0
        %v1559 = vadd.f32 0.0, %v1558
        %1560 = vdwg.mxu0
        %1561 = vmatpush.bf16.msra.mxu0 0
        %1562 = vmatpush.bf16.msra.mxu0 0
        %1563 = vmatpush.bf16.msra.mxu0 0
        %1564 = vmatpush.bf16.msra.mxu0 0
        %1565 = vmatpush.bf16.msra.mxu0 0
        %1566 = vmatpush.bf16.msra.mxu0 0
        %1567 = vmatpush.bf16.msra.mxu0 %v1278
        %1568 = vmatpush.bf16.msra.mxu0 %v1277
        %1569 = vmatmul.bf16.gmra.mxu0 %v1425
        %v1570 = vpop.f32.mrf.mxu0
        %v1571 = vadd.f32 %v1482, %v1570
        %v1572 = vpop.f32.mrf.mxu0
        %v1573 = vadd.f32 %v1484, %v1572
        %1574 = vmatmul.bf16.gmra.mxu0 %v1428
        %v1575 = vpop.f32.mrf.mxu0
        %v1576 = vadd.f32 %v1487, %v1575
        %v1577 = vpop.f32.mrf.mxu0
        %v1578 = vadd.f32 %v1489, %v1577
        %1579 = vmatmul.bf16.gmra.mxu0 %v1431
        %v1580 = vpop.f32.mrf.mxu0
        %v1581 = vadd.f32 %v1492, %v1580
        %v1582 = vpop.f32.mrf.mxu0
        %v1583 = vadd.f32 %v1494, %v1582
        %1584 = vmatmul.bf16.gmra.mxu0 %v1434
        %v1585 = vpop.f32.mrf.mxu0
        %v1586 = vadd.f32 %v1497, %v1585
        %v1587 = vpop.f32.mrf.mxu0
        %v1588 = vadd.f32 %v1499, %v1587
        %1589 = vmatmul.bf16.gmra.mxu0 %v1437
        %v1590 = vpop.f32.mrf.mxu0
        %v1591 = vadd.f32 %v1502, %v1590
        %v1592 = vpop.f32.mrf.mxu0
        %v1593 = vadd.f32 %v1504, %v1592
        %1594 = vmatmul.bf16.gmra.mxu0 %v1440
        %v1595 = vpop.f32.mrf.mxu0
        %v1596 = vadd.f32 %v1507, %v1595
        %v1597 = vpop.f32.mrf.mxu0
        %v1598 = vadd.f32 %v1509, %v1597
        %1599 = vmatmul.bf16.gmra.mxu0 %v1443
        %v1600 = vpop.f32.mrf.mxu0
        %v1601 = vadd.f32 %v1512, %v1600
        %v1602 = vpop.f32.mrf.mxu0
        %v1603 = vadd.f32 %v1514, %v1602
        %1604 = vmatmul.bf16.gmra.mxu0 %v1446
        %v1605 = vpop.f32.mrf.mxu0
        %v1606 = vadd.f32 %v1517, %v1605
        %v1607 = vpop.f32.mrf.mxu0
        %v1608 = vadd.f32 %v1519, %v1607
        %1609 = vmatmul.bf16.gmra.mxu0 %v1449
        %v1610 = vpop.f32.mrf.mxu0
        %v1611 = vadd.f32 %v1522, %v1610
        %v1612 = vpop.f32.mrf.mxu0
        %v1613 = vadd.f32 %v1524, %v1612
        %1614 = vmatmul.bf16.gmra.mxu0 %v1452
        %v1615 = vpop.f32.mrf.mxu0
        %v1616 = vadd.f32 %v1527, %v1615
        %v1617 = vpop.f32.mrf.mxu0
        %v1618 = vadd.f32 %v1529, %v1617
        %1619 = vmatmul.bf16.gmra.mxu0 %v1455
        %v1620 = vpop.f32.mrf.mxu0
        %v1621 = vadd.f32 %v1532, %v1620
        %v1622 = vpop.f32.mrf.mxu0
        %v1623 = vadd.f32 %v1534, %v1622
        %1624 = vmatmul.bf16.gmra.mxu0 %v1458
        %v1625 = vpop.f32.mrf.mxu0
        %v1626 = vadd.f32 %v1537, %v1625
        %v1627 = vpop.f32.mrf.mxu0
        %v1628 = vadd.f32 %v1539, %v1627
        %1629 = vmatmul.bf16.gmra.mxu0 %v1461
        %v1630 = vpop.f32.mrf.mxu0
        %v1631 = vadd.f32 %v1542, %v1630
        %v1632 = vpop.f32.mrf.mxu0
        %v1633 = vadd.f32 %v1544, %v1632
        %1634 = vmatmul.bf16.gmra.mxu0 %v1464
        %v1635 = vpop.f32.mrf.mxu0
        %v1636 = vadd.f32 %v1547, %v1635
        %v1637 = vpop.f32.mrf.mxu0
        %v1638 = vadd.f32 %v1549, %v1637
        %1639 = vmatmul.bf16.gmra.mxu0 %v1467
        %v1640 = vpop.f32.mrf.mxu0
        %v1641 = vadd.f32 %v1552, %v1640
        %v1642 = vpop.f32.mrf.mxu0
        %v1643 = vadd.f32 %v1554, %v1642
        %1644 = vmatmul.bf16.gmra.mxu0 %v1470
        %v1645 = vpop.f32.mrf.mxu0
        %v1646 = vadd.f32 %v1557, %v1645
        %v1647 = vpop.f32.mrf.mxu0
        %v1648 = vadd.f32 %v1559, %v1647
        %1649 = vdwg.mxu0
        %v1650 = vsub.f32 %v1571, %v967
        %v1651 = vsub.f32 %v1573, %v968
        %v1652 = vsub.f32 %v1576, %v969
        %v1653 = vsub.f32 %v1578, %v970
        %v1654 = vsub.f32 %v1581, %v971
        %v1655 = vsub.f32 %v1583, %v972
        %v1656 = vsub.f32 %v1586, %v973
        %v1657 = vsub.f32 %v1588, %v974
        %v1658 = vsub.f32 %v1591, %v975
        %v1659 = vsub.f32 %v1593, %v976
        %v1660 = vsub.f32 %v1596, %v977
        %v1661 = vsub.f32 %v1598, %v978
        %v1662 = vsub.f32 %v1601, %v979
        %v1663 = vsub.f32 %v1603, %v980
        %v1664 = vsub.f32 %v1606, %v981
        %v1665 = vsub.f32 %v1608, %v982
        %v1666 = vsub.f32 %v1611, %v951
        %v1667 = vsub.f32 %v1613, %v952
        %v1668 = vsub.f32 %v1616, %v953
        %v1669 = vsub.f32 %v1618, %v954
        %v1670 = vsub.f32 %v1621, %v955
        %v1671 = vsub.f32 %v1623, %v956
        %v1672 = vsub.f32 %v1626, %v957
        %v1673 = vsub.f32 %v1628, %v958
        %v1674 = vsub.f32 %v1631, %v959
        %v1675 = vsub.f32 %v1633, %v960
        %v1676 = vsub.f32 %v1636, %v961
        %v1677 = vsub.f32 %v1638, %v962
        %v1678 = vsub.f32 %v1641, %v963
        %v1679 = vsub.f32 %v1643, %v964
        %v1680 = vsub.f32 %v1646, %v965
        %v1681 = vsub.f32 %v1648, %v966
        %v1682 = vpack.c.bf16 %v1651, %v1650
        %v1683 = vpack.c.bf16 %v1653, %v1652
        %v1684 = vpack.c.bf16 %v1655, %v1654
        %v1685 = vpack.c.bf16 %v1657, %v1656
        %v1686 = vpack.c.bf16 %v1659, %v1658
        %v1687 = vpack.c.bf16 %v1661, %v1660
        %v1688 = vpack.c.bf16 %v1663, %v1662
        %v1689 = vpack.c.bf16 %v1665, %v1664
        %v1690 = vpack.c.bf16 %v1667, %v1666
        %v1691 = vpack.c.bf16 %v1669, %v1668
        %v1692 = vpack.c.bf16 %v1671, %v1670
        %v1693 = vpack.c.bf16 %v1673, %v1672
        %v1694 = vpack.c.bf16 %v1675, %v1674
        %v1695 = vpack.c.bf16 %v1677, %v1676
        %v1696 = vpack.c.bf16 %v1679, %v1678
        %v1697 = vpack.c.bf16 %v1681, %v1680
        %v1698 = vld [vmem:[#allocation8] sm:$0xf]
        %v1699 = vld [vmem:[#allocation8 + $0x4] sm:$0xf]
        %v1700 = vld [vmem:[#allocation8 + $0x8] sm:$0xf]
        %v1701 = vld [vmem:[#allocation8 + $0xc] sm:$0xf]
        %v1702 = vld [vmem:[#allocation8 + $0x10] sm:$0xf]
        %v1703 = vld [vmem:[#allocation8 + $0x14] sm:$0xf]
        %v1704 = vld [vmem:[#allocation8 + $0x18] sm:$0xf]
        %v1705 = vld [vmem:[#allocation8 + $0x1c] sm:$0xf]
        %v1706 = vld [vmem:[#allocation8 + $0x20] sm:$0xf]
        %v1707 = vld [vmem:[#allocation8 + $0x24] sm:$0xf]
        %v1708 = vld [vmem:[#allocation8 + $0x28] sm:$0xf]
        %v1709 = vld [vmem:[#allocation8 + $0x2c] sm:$0xf]
        %v1710 = vld [vmem:[#allocation8 + $0x30] sm:$0xf]
        %v1711 = vld [vmem:[#allocation8 + $0x34] sm:$0xf]
        %v1712 = vld [vmem:[#allocation8 + $0x38] sm:$0xf]
        %v1713 = vld [vmem:[#allocation8 + $0x3c] sm:$0xf]
        %v1730 = vunpack.c.l.b16 %v1698
        %v1731 = vunpack.c.l.b16 %v1699
        %v1732 = vunpack.c.l.b16 %v1700
        %v1733 = vunpack.c.l.b16 %v1701
        %v1734 = vunpack.c.l.b16 %v1702
        %v1735 = vunpack.c.l.b16 %v1703
        %v1736 = vunpack.c.l.b16 %v1704
        %v1737 = vunpack.c.l.b16 %v1705
        %v1738 = vunpack.c.l.b16 %v1706
        %v1739 = vunpack.c.l.b16 %v1707
        %v1740 = vunpack.c.l.b16 %v1708
        %v1741 = vunpack.c.l.b16 %v1709
        %v1742 = vunpack.c.l.b16 %v1710
        %v1743 = vunpack.c.l.b16 %v1711
        %v1744 = vunpack.c.l.b16 %v1712
        %v1745 = vunpack.c.l.b16 %v1713
        %v1746 = vpack.c.b16 %v1731, %v1730
        %v1747 = vpack.c.b16 %v1733, %v1732
        %v1748 = vpack.c.b16 %v1735, %v1734
        %v1749 = vpack.c.b16 %v1737, %v1736
        %v1750 = vpack.c.b16 %v1739, %v1738
        %v1751 = vpack.c.b16 %v1741, %v1740
        %v1752 = vpack.c.b16 %v1743, %v1742
        %v1753 = vpack.c.b16 %v1745, %v1744
        %1762 = vmatpush.bf16.msra.mxu0 %v1753
        %1763 = vmatpush.bf16.msra.mxu0 %v1752
        %1764 = vmatpush.bf16.msra.mxu0 %v1751
        %1765 = vmatpush.bf16.msra.mxu0 %v1750
        %1766 = vmatpush.bf16.msra.mxu0 %v1749
        %1767 = vmatpush.bf16.msra.mxu0 %v1748
        %1768 = vmatpush.bf16.msra.mxu0 %v1747
        %1769 = vmatpush.bf16.msra.mxu0 %v1746
        %1770 = vmatmul.bf16.gmra.mxu0 %v1682
        %v1771 = vpop.f32.mrf.mxu0
        %v1772 = vadd.f32 0.0, %v1771
        %v1773 = vpop.f32.mrf.mxu0
        %v1774 = vadd.f32 0.0, %v1773
        %1775 = vmatmul.bf16.gmra.mxu0 %v1683
        %v1776 = vpop.f32.mrf.mxu0
        %v1777 = vadd.f32 0.0, %v1776
        %v1778 = vpop.f32.mrf.mxu0
        %v1779 = vadd.f32 0.0, %v1778
        %1780 = vmatmul.bf16.gmra.mxu0 %v1684
        %v1781 = vpop.f32.mrf.mxu0
        %v1782 = vadd.f32 0.0, %v1781
        %v1783 = vpop.f32.mrf.mxu0
        %v1784 = vadd.f32 0.0, %v1783
        %1785 = vmatmul.bf16.gmra.mxu0 %v1685
        %v1786 = vpop.f32.mrf.mxu0
        %v1787 = vadd.f32 0.0, %v1786
        %v1788 = vpop.f32.mrf.mxu0
        %v1789 = vadd.f32 0.0, %v1788
        %1790 = vmatmul.bf16.gmra.mxu0 %v1686
        %v1791 = vpop.f32.mrf.mxu0
        %v1792 = vadd.f32 0.0, %v1791
        %v1793 = vpop.f32.mrf.mxu0
        %v1794 = vadd.f32 0.0, %v1793
        %1795 = vmatmul.bf16.gmra.mxu0 %v1687
        %v1796 = vpop.f32.mrf.mxu0
        %v1797 = vadd.f32 0.0, %v1796
        %v1798 = vpop.f32.mrf.mxu0
        %v1799 = vadd.f32 0.0, %v1798
        %1800 = vmatmul.bf16.gmra.mxu0 %v1688
        %v1801 = vpop.f32.mrf.mxu0
        %v1802 = vadd.f32 0.0, %v1801
        %v1803 = vpop.f32.mrf.mxu0
        %v1804 = vadd.f32 0.0, %v1803
        %1805 = vmatmul.bf16.gmra.mxu0 %v1689
        %v1806 = vpop.f32.mrf.mxu0
        %v1807 = vadd.f32 0.0, %v1806
        %v1808 = vpop.f32.mrf.mxu0
        %v1809 = vadd.f32 0.0, %v1808
        %1810 = vmatmul.bf16.gmra.mxu0 %v1690
        %v1811 = vpop.f32.mrf.mxu0
        %v1812 = vadd.f32 0.0, %v1811
        %v1813 = vpop.f32.mrf.mxu0
        %v1814 = vadd.f32 0.0, %v1813
        %1815 = vmatmul.bf16.gmra.mxu0 %v1691
        %v1816 = vpop.f32.mrf.mxu0
        %v1817 = vadd.f32 0.0, %v1816
        %v1818 = vpop.f32.mrf.mxu0
        %v1819 = vadd.f32 0.0, %v1818
        %1820 = vmatmul.bf16.gmra.mxu0 %v1692
        %v1821 = vpop.f32.mrf.mxu0
        %v1822 = vadd.f32 0.0, %v1821
        %v1823 = vpop.f32.mrf.mxu0
        %v1824 = vadd.f32 0.0, %v1823
        %1825 = vmatmul.bf16.gmra.mxu0 %v1693
        %v1826 = vpop.f32.mrf.mxu0
        %v1827 = vadd.f32 0.0, %v1826
        %v1828 = vpop.f32.mrf.mxu0
        %v1829 = vadd.f32 0.0, %v1828
        %1830 = vmatmul.bf16.gmra.mxu0 %v1694
        %v1831 = vpop.f32.mrf.mxu0
        %v1832 = vadd.f32 0.0, %v1831
        %v1833 = vpop.f32.mrf.mxu0
        %v1834 = vadd.f32 0.0, %v1833
        %1835 = vmatmul.bf16.gmra.mxu0 %v1695
        %v1836 = vpop.f32.mrf.mxu0
        %v1837 = vadd.f32 0.0, %v1836
        %v1838 = vpop.f32.mrf.mxu0
        %v1839 = vadd.f32 0.0, %v1838
        %1840 = vmatmul.bf16.gmra.mxu0 %v1696
        %v1841 = vpop.f32.mrf.mxu0
        %v1842 = vadd.f32 0.0, %v1841
        %v1843 = vpop.f32.mrf.mxu0
        %v1844 = vadd.f32 0.0, %v1843
        %1845 = vmatmul.bf16.gmra.mxu0 %v1697
        %v1846 = vpop.f32.mrf.mxu0
        %v1847 = vadd.f32 0.0, %v1846
        %v1848 = vpop.f32.mrf.mxu0
        %v1849 = vadd.f32 0.0, %v1848
        %1850 = vdwg.mxu0
        %v1851 = vadd.f32 %v951, %v1772
        %v1852 = vadd.f32 %v952, %v1774
        %v1853 = vadd.f32 %v953, %v1777
        %v1854 = vadd.f32 %v954, %v1779
        %v1855 = vadd.f32 %v955, %v1782
        %v1856 = vadd.f32 %v956, %v1784
        %v1857 = vadd.f32 %v957, %v1787
        %v1858 = vadd.f32 %v958, %v1789
        %v1859 = vadd.f32 %v959, %v1792
        %v1860 = vadd.f32 %v960, %v1794
        %v1861 = vadd.f32 %v961, %v1797
        %v1862 = vadd.f32 %v962, %v1799
        %v1863 = vadd.f32 %v963, %v1802
        %v1864 = vadd.f32 %v964, %v1804
        %v1865 = vadd.f32 %v965, %v1807
        %v1866 = vadd.f32 %v966, %v1809
        %v1867 = vadd.f32 %v967, %v1812
        %v1868 = vadd.f32 %v968, %v1814
        %v1869 = vadd.f32 %v969, %v1817
        %v1870 = vadd.f32 %v970, %v1819
        %v1871 = vadd.f32 %v971, %v1822
        %v1872 = vadd.f32 %v972, %v1824
        %v1873 = vadd.f32 %v973, %v1827
        %v1874 = vadd.f32 %v974, %v1829
        %v1875 = vadd.f32 %v975, %v1832
        %v1876 = vadd.f32 %v976, %v1834
        %v1877 = vadd.f32 %v977, %v1837
        %v1878 = vadd.f32 %v978, %v1839
        %v1879 = vadd.f32 %v979, %v1842
        %v1880 = vadd.f32 %v980, %v1844
        %v1881 = vadd.f32 %v981, %v1847
        %v1882 = vadd.f32 %v982, %v1849
        %v1883 = vmax.f32 %v1851, 0.0
        %v1884 = vmax.f32 %v1852, 0.0
        %v1885 = vmax.f32 %v1853, 0.0
        %v1886 = vmax.f32 %v1854, 0.0
        %v1887 = vmax.f32 %v1855, 0.0
        %v1888 = vmax.f32 %v1856, 0.0
        %v1889 = vmax.f32 %v1857, 0.0
        %v1890 = vmax.f32 %v1858, 0.0
        %v1891 = vmax.f32 %v1859, 0.0
        %v1892 = vmax.f32 %v1860, 0.0
        %v1893 = vmax.f32 %v1861, 0.0
        %v1894 = vmax.f32 %v1862, 0.0
        %v1895 = vmax.f32 %v1863, 0.0
        %v1896 = vmax.f32 %v1864, 0.0
        %v1897 = vmax.f32 %v1865, 0.0
        %v1898 = vmax.f32 %v1866, 0.0
        %v1899 = vmax.f32 %v1867, 0.0
        %v1900 = vmax.f32 %v1868, 0.0
        %v1901 = vmax.f32 %v1869, 0.0
        %v1902 = vmax.f32 %v1870, 0.0
        %v1903 = vmax.f32 %v1871, 0.0
        %v1904 = vmax.f32 %v1872, 0.0
        %v1905 = vmax.f32 %v1873, 0.0
        %v1906 = vmax.f32 %v1874, 0.0
        %v1907 = vmax.f32 %v1875, 0.0
        %v1908 = vmax.f32 %v1876, 0.0
        %v1909 = vmax.f32 %v1877, 0.0
        %v1910 = vmax.f32 %v1878, 0.0
        %v1911 = vmax.f32 %v1879, 0.0
        %v1912 = vmax.f32 %v1880, 0.0
        %v1913 = vmax.f32 %v1881, 0.0
        %v1914 = vmax.f32 %v1882, 0.0
        %v1915 = vpack.c.bf16 %v1884, %v1883
        %v1916 = vpack.c.bf16 %v1886, %v1885
        %v1917 = vpack.c.bf16 %v1888, %v1887
        %v1918 = vpack.c.bf16 %v1890, %v1889
        %v1919 = vpack.c.bf16 %v1892, %v1891
        %v1920 = vpack.c.bf16 %v1894, %v1893
        %v1921 = vpack.c.bf16 %v1896, %v1895
        %v1922 = vpack.c.bf16 %v1898, %v1897
        %v1923 = vpack.c.bf16 %v1900, %v1899
        %v1924 = vpack.c.bf16 %v1902, %v1901
        %v1925 = vpack.c.bf16 %v1904, %v1903
        %v1926 = vpack.c.bf16 %v1906, %v1905
        %v1927 = vpack.c.bf16 %v1908, %v1907
        %v1928 = vpack.c.bf16 %v1910, %v1909
        %v1929 = vpack.c.bf16 %v1912, %v1911
        %v1930 = vpack.c.bf16 %v1914, %v1913
        %1931 = vmatpush.bf16.msra.mxu0 %v1922
        %1932 = vmatpush.bf16.msra.mxu0 %v1921
        %1933 = vmatpush.bf16.msra.mxu0 %v1920
        %1934 = vmatpush.bf16.msra.mxu0 %v1919
        %1935 = vmatpush.bf16.msra.mxu0 %v1918
        %1936 = vmatpush.bf16.msra.mxu0 %v1917
        %1937 = vmatpush.bf16.msra.mxu0 %v1916
        %1938 = vmatpush.bf16.msra.mxu0 %v1915
        %1939 = vmatmul.bf16.gmra.mxu0 %v1079
        %v1940 = vpop.f32.mrf.mxu0
        %v1941 = vadd.f32 0.0, %v1940
        %v1942 = vpop.f32.mrf.mxu0
        %v1943 = vadd.f32 0.0, %v1942
        %1944 = vmatmul.bf16.gmra.mxu0 %v1081
        %v1945 = vpop.f32.mrf.mxu0
        %v1946 = vadd.f32 0.0, %v1945
        %v1947 = vpop.f32.mrf.mxu0
        %v1948 = vadd.f32 0.0, %v1947
        %1949 = vmatmul.bf16.gmra.mxu0 %v1083
        %v1950 = vpop.f32.mrf.mxu0
        %v1951 = vadd.f32 0.0, %v1950
        %v1952 = vpop.f32.mrf.mxu0
        %v1953 = vadd.f32 0.0, %v1952
        %1954 = vmatmul.bf16.gmra.mxu0 %v1085
        %v1955 = vpop.f32.mrf.mxu0
        %v1956 = vadd.f32 0.0, %v1955
        %v1957 = vpop.f32.mrf.mxu0
        %v1958 = vadd.f32 0.0, %v1957
        %1959 = vmatmul.bf16.gmra.mxu0 %v1087
        %v1960 = vpop.f32.mrf.mxu0
        %v1961 = vadd.f32 0.0, %v1960
        %v1962 = vpop.f32.mrf.mxu0
        %v1963 = vadd.f32 0.0, %v1962
        %1964 = vmatmul.bf16.gmra.mxu0 %v1089
        %v1965 = vpop.f32.mrf.mxu0
        %v1966 = vadd.f32 0.0, %v1965
        %v1967 = vpop.f32.mrf.mxu0
        %v1968 = vadd.f32 0.0, %v1967
        %1969 = vmatmul.bf16.gmra.mxu0 %v1091
        %v1970 = vpop.f32.mrf.mxu0
        %v1971 = vadd.f32 0.0, %v1970
        %v1972 = vpop.f32.mrf.mxu0
        %v1973 = vadd.f32 0.0, %v1972
        %1974 = vmatmul.bf16.gmra.mxu0 %v1093
        %v1975 = vpop.f32.mrf.mxu0
        %v1976 = vadd.f32 0.0, %v1975
        %v1977 = vpop.f32.mrf.mxu0
        %v1978 = vadd.f32 0.0, %v1977
        %1979 = vmatmul.bf16.gmra.mxu0 %v1095
        %v1980 = vpop.f32.mrf.mxu0
        %v1981 = vadd.f32 0.0, %v1980
        %v1982 = vpop.f32.mrf.mxu0
        %v1983 = vadd.f32 0.0, %v1982
        %1984 = vmatmul.bf16.gmra.mxu0 %v1097
        %v1985 = vpop.f32.mrf.mxu0
        %v1986 = vadd.f32 0.0, %v1985
        %v1987 = vpop.f32.mrf.mxu0
        %v1988 = vadd.f32 0.0, %v1987
        %1989 = vdwg.mxu0
        %1990 = vmatpush.bf16.msra.mxu0 %v1930
        %1991 = vmatpush.bf16.msra.mxu0 %v1929
        %1992 = vmatpush.bf16.msra.mxu0 %v1928
        %1993 = vmatpush.bf16.msra.mxu0 %v1927
        %1994 = vmatpush.bf16.msra.mxu0 %v1926
        %1995 = vmatpush.bf16.msra.mxu0 %v1925
        %1996 = vmatpush.bf16.msra.mxu0 %v1924
        %1997 = vmatpush.bf16.msra.mxu0 %v1923
        %1998 = vmatmul.bf16.gmra.mxu0 %v1080
        %v1999 = vpop.f32.mrf.mxu0
        %v2000 = vadd.f32 %v1941, %v1999
        %v2001 = vpop.f32.mrf.mxu0
        %v2002 = vadd.f32 %v1943, %v2001
        %2003 = vmatmul.bf16.gmra.mxu0 %v1082
        %v2004 = vpop.f32.mrf.mxu0
        %v2005 = vadd.f32 %v1946, %v2004
        %v2006 = vpop.f32.mrf.mxu0
        %v2007 = vadd.f32 %v1948, %v2006
        %2008 = vmatmul.bf16.gmra.mxu0 %v1084
        %v2009 = vpop.f32.mrf.mxu0
        %v2010 = vadd.f32 %v1951, %v2009
        %v2011 = vpop.f32.mrf.mxu0
        %v2012 = vadd.f32 %v1953, %v2011
        %2013 = vmatmul.bf16.gmra.mxu0 %v1086
        %v2014 = vpop.f32.mrf.mxu0
        %v2015 = vadd.f32 %v1956, %v2014
        %v2016 = vpop.f32.mrf.mxu0
        %v2017 = vadd.f32 %v1958, %v2016
        %2018 = vmatmul.bf16.gmra.mxu0 %v1088
        %v2019 = vpop.f32.mrf.mxu0
        %v2020 = vadd.f32 %v1961, %v2019
        %v2021 = vpop.f32.mrf.mxu0
        %v2022 = vadd.f32 %v1963, %v2021
        %2023 = vmatmul.bf16.gmra.mxu0 %v1090
        %v2024 = vpop.f32.mrf.mxu0
        %v2025 = vadd.f32 %v1966, %v2024
        %v2026 = vpop.f32.mrf.mxu0
        %v2027 = vadd.f32 %v1968, %v2026
        %2028 = vmatmul.bf16.gmra.mxu0 %v1092
        %v2029 = vpop.f32.mrf.mxu0
        %v2030 = vadd.f32 %v1971, %v2029
        %v2031 = vpop.f32.mrf.mxu0
        %v2032 = vadd.f32 %v1973, %v2031
        %2033 = vmatmul.bf16.gmra.mxu0 %v1094
        %v2034 = vpop.f32.mrf.mxu0
        %v2035 = vadd.f32 %v1976, %v2034
        %v2036 = vpop.f32.mrf.mxu0
        %v2037 = vadd.f32 %v1978, %v2036
        %2038 = vmatmul.bf16.gmra.mxu0 %v1096
        %v2039 = vpop.f32.mrf.mxu0
        %v2040 = vadd.f32 %v1981, %v2039
        %v2041 = vpop.f32.mrf.mxu0
        %v2042 = vadd.f32 %v1983, %v2041
        %2043 = vmatmul.bf16.gmra.mxu0 %v1098
        %v2044 = vpop.f32.mrf.mxu0
        %v2045 = vadd.f32 %v1986, %v2044
        %v2046 = vpop.f32.mrf.mxu0
        %v2047 = vadd.f32 %v1988, %v2046
        %2048 = vdwg.mxu0
        %v2049 = vpack.c.bf16 %v2002, %v2000
        %v2050 = vpack.c.bf16 %v2007, %v2005
        %v2051 = vpack.c.bf16 %v2012, %v2010
        %v2052 = vpack.c.bf16 %v2017, %v2015
        %v2053 = vpack.c.bf16 %v2022, %v2020
        %v2054 = vpack.c.bf16 %v2027, %v2025
        %v2055 = vpack.c.bf16 %v2032, %v2030
        %v2056 = vpack.c.bf16 %v2037, %v2035
        %v2057 = vpack.c.bf16 %v2042, %v2040
        %v2058 = vpack.c.bf16 %v2047, %v2045
        %2059 = vmatpush.bf16.msra.mxu0 %v2056
        %2060 = vmatpush.bf16.msra.mxu0 %v2055
        %2061 = vmatpush.bf16.msra.mxu0 %v2054
        %2062 = vmatpush.bf16.msra.mxu0 %v2053
        %2063 = vmatpush.bf16.msra.mxu0 %v2052
        %2064 = vmatpush.bf16.msra.mxu0 %v2051
        %2065 = vmatpush.bf16.msra.mxu0 %v2050
        %2066 = vmatpush.bf16.msra.mxu0 %v2049
        %2067 = vmatmul.bf16.gmra.mxu0 %v1375
        %v2068 = vpop.f32.mrf.mxu0
        %v2069 = vadd.f32 0.0, %v2068
        %v2070 = vpop.f32.mrf.mxu0
        %v2071 = vadd.f32 0.0, %v2070
        %2072 = vmatmul.bf16.gmra.mxu0 %v1377
        %v2073 = vpop.f32.mrf.mxu0
        %v2074 = vadd.f32 0.0, %v2073
        %v2075 = vpop.f32.mrf.mxu0
        %v2076 = vadd.f32 0.0, %v2075
        %2077 = vmatmul.bf16.gmra.mxu0 %v1379
        %v2078 = vpop.f32.mrf.mxu0
        %v2079 = vadd.f32 0.0, %v2078
        %v2080 = vpop.f32.mrf.mxu0
        %v2081 = vadd.f32 0.0, %v2080
        %2082 = vmatmul.bf16.gmra.mxu0 %v1381
        %v2083 = vpop.f32.mrf.mxu0
        %v2084 = vadd.f32 0.0, %v2083
        %v2085 = vpop.f32.mrf.mxu0
        %v2086 = vadd.f32 0.0, %v2085
        %2087 = vmatmul.bf16.gmra.mxu0 %v1383
        %v2088 = vpop.f32.mrf.mxu0
        %v2089 = vadd.f32 0.0, %v2088
        %v2090 = vpop.f32.mrf.mxu0
        %v2091 = vadd.f32 0.0, %v2090
        %2092 = vmatmul.bf16.gmra.mxu0 %v1385
        %v2093 = vpop.f32.mrf.mxu0
        %v2094 = vadd.f32 0.0, %v2093
        %v2095 = vpop.f32.mrf.mxu0
        %v2096 = vadd.f32 0.0, %v2095
        %2097 = vmatmul.bf16.gmra.mxu0 %v1387
        %v2098 = vpop.f32.mrf.mxu0
        %v2099 = vadd.f32 0.0, %v2098
        %v2100 = vpop.f32.mrf.mxu0
        %v2101 = vadd.f32 0.0, %v2100
        %2102 = vmatmul.bf16.gmra.mxu0 %v1389
        %v2103 = vpop.f32.mrf.mxu0
        %v2104 = vadd.f32 0.0, %v2103
        %v2105 = vpop.f32.mrf.mxu0
        %v2106 = vadd.f32 0.0, %v2105
        %2107 = vmatmul.bf16.gmra.mxu0 %v1391
        %v2108 = vpop.f32.mrf.mxu0
        %v2109 = vadd.f32 0.0, %v2108
        %v2110 = vpop.f32.mrf.mxu0
        %v2111 = vadd.f32 0.0, %v2110
        %2112 = vmatmul.bf16.gmra.mxu0 %v1393
        %v2113 = vpop.f32.mrf.mxu0
        %v2114 = vadd.f32 0.0, %v2113
        %v2115 = vpop.f32.mrf.mxu0
        %v2116 = vadd.f32 0.0, %v2115
        %2117 = vmatmul.bf16.gmra.mxu0 %v1395
        %v2118 = vpop.f32.mrf.mxu0
        %v2119 = vadd.f32 0.0, %v2118
        %v2120 = vpop.f32.mrf.mxu0
        %v2121 = vadd.f32 0.0, %v2120
        %2122 = vmatmul.bf16.gmra.mxu0 %v1397
        %v2123 = vpop.f32.mrf.mxu0
        %v2124 = vadd.f32 0.0, %v2123
        %v2125 = vpop.f32.mrf.mxu0
        %v2126 = vadd.f32 0.0, %v2125
        %2127 = vmatmul.bf16.gmra.mxu0 %v1399
        %v2128 = vpop.f32.mrf.mxu0
        %v2129 = vadd.f32 0.0, %v2128
        %v2130 = vpop.f32.mrf.mxu0
        %v2131 = vadd.f32 0.0, %v2130
        %2132 = vmatmul.bf16.gmra.mxu0 %v1401
        %v2133 = vpop.f32.mrf.mxu0
        %v2134 = vadd.f32 0.0, %v2133
        %v2135 = vpop.f32.mrf.mxu0
        %v2136 = vadd.f32 0.0, %v2135
        %2137 = vmatmul.bf16.gmra.mxu0 %v1403
        %v2138 = vpop.f32.mrf.mxu0
        %v2139 = vadd.f32 0.0, %v2138
        %v2140 = vpop.f32.mrf.mxu0
        %v2141 = vadd.f32 0.0, %v2140
        %2142 = vmatmul.bf16.gmra.mxu0 %v1405
        %v2143 = vpop.f32.mrf.mxu0
        %v2144 = vadd.f32 0.0, %v2143
        %v2145 = vpop.f32.mrf.mxu0
        %v2146 = vadd.f32 0.0, %v2145
        %2147 = vdwg.mxu0
        %2148 = vmatpush.bf16.msra.mxu0 0
        %2149 = vmatpush.bf16.msra.mxu0 0
        %2150 = vmatpush.bf16.msra.mxu0 0
        %2151 = vmatpush.bf16.msra.mxu0 0
        %2152 = vmatpush.bf16.msra.mxu0 0
        %2153 = vmatpush.bf16.msra.mxu0 0
        %2154 = vmatpush.bf16.msra.mxu0 %v2058
        %2155 = vmatpush.bf16.msra.mxu0 %v2057
        %2156 = vmatmul.bf16.gmra.mxu0 %v1425
        %v2157 = vpop.f32.mrf.mxu0
        %v2158 = vadd.f32 %v2069, %v2157
        %v2159 = vpop.f32.mrf.mxu0
        %v2160 = vadd.f32 %v2071, %v2159
        %2161 = vmatmul.bf16.gmra.mxu0 %v1428
        %v2162 = vpop.f32.mrf.mxu0
        %v2163 = vadd.f32 %v2074, %v2162
        %v2164 = vpop.f32.mrf.mxu0
        %v2165 = vadd.f32 %v2076, %v2164
        %2166 = vmatmul.bf16.gmra.mxu0 %v1431
        %v2167 = vpop.f32.mrf.mxu0
        %v2168 = vadd.f32 %v2079, %v2167
        %v2169 = vpop.f32.mrf.mxu0
        %v2170 = vadd.f32 %v2081, %v2169
        %2171 = vmatmul.bf16.gmra.mxu0 %v1434
        %v2172 = vpop.f32.mrf.mxu0
        %v2173 = vadd.f32 %v2084, %v2172
        %v2174 = vpop.f32.mrf.mxu0
        %v2175 = vadd.f32 %v2086, %v2174
        %2176 = vmatmul.bf16.gmra.mxu0 %v1437
        %v2177 = vpop.f32.mrf.mxu0
        %v2178 = vadd.f32 %v2089, %v2177
        %v2179 = vpop.f32.mrf.mxu0
        %v2180 = vadd.f32 %v2091, %v2179
        %2181 = vmatmul.bf16.gmra.mxu0 %v1440
        %v2182 = vpop.f32.mrf.mxu0
        %v2183 = vadd.f32 %v2094, %v2182
        %v2184 = vpop.f32.mrf.mxu0
        %v2185 = vadd.f32 %v2096, %v2184
        %2186 = vmatmul.bf16.gmra.mxu0 %v1443
        %v2187 = vpop.f32.mrf.mxu0
        %v2188 = vadd.f32 %v2099, %v2187
        %v2189 = vpop.f32.mrf.mxu0
        %v2190 = vadd.f32 %v2101, %v2189
        %2191 = vmatmul.bf16.gmra.mxu0 %v1446
        %v2192 = vpop.f32.mrf.mxu0
        %v2193 = vadd.f32 %v2104, %v2192
        %v2194 = vpop.f32.mrf.mxu0
        %v2195 = vadd.f32 %v2106, %v2194
        %2196 = vmatmul.bf16.gmra.mxu0 %v1449
        %v2197 = vpop.f32.mrf.mxu0
        %v2198 = vadd.f32 %v2109, %v2197
        %v2199 = vpop.f32.mrf.mxu0
        %v2200 = vadd.f32 %v2111, %v2199
        %2201 = vmatmul.bf16.gmra.mxu0 %v1452
        %v2202 = vpop.f32.mrf.mxu0
        %v2203 = vadd.f32 %v2114, %v2202
        %v2204 = vpop.f32.mrf.mxu0
        %v2205 = vadd.f32 %v2116, %v2204
        %2206 = vmatmul.bf16.gmra.mxu0 %v1455
        %v2207 = vpop.f32.mrf.mxu0
        %v2208 = vadd.f32 %v2119, %v2207
        %v2209 = vpop.f32.mrf.mxu0
        %v2210 = vadd.f32 %v2121, %v2209
        %2211 = vmatmul.bf16.gmra.mxu0 %v1458
        %v2212 = vpop.f32.mrf.mxu0
        %v2213 = vadd.f32 %v2124, %v2212
        %v2214 = vpop.f32.mrf.mxu0
        %v2215 = vadd.f32 %v2126, %v2214
        %2216 = vmatmul.bf16.gmra.mxu0 %v1461
        %v2217 = vpop.f32.mrf.mxu0
        %v2218 = vadd.f32 %v2129, %v2217
        %v2219 = vpop.f32.mrf.mxu0
        %v2220 = vadd.f32 %v2131, %v2219
        %2221 = vmatmul.bf16.gmra.mxu0 %v1464
        %v2222 = vpop.f32.mrf.mxu0
        %v2223 = vadd.f32 %v2134, %v2222
        %v2224 = vpop.f32.mrf.mxu0
        %v2225 = vadd.f32 %v2136, %v2224
        %2226 = vmatmul.bf16.gmra.mxu0 %v1467
        %v2227 = vpop.f32.mrf.mxu0
        %v2228 = vadd.f32 %v2139, %v2227
        %v2229 = vpop.f32.mrf.mxu0
        %v2230 = vadd.f32 %v2141, %v2229
        %2231 = vmatmul.bf16.gmra.mxu0 %v1470
        %v2232 = vpop.f32.mrf.mxu0
        %v2233 = vadd.f32 %v2144, %v2232
        %v2234 = vpop.f32.mrf.mxu0
        %v2235 = vadd.f32 %v2146, %v2234
        %2236 = vdwg.mxu0
        %v2237 = vsub.f32 %v2158, %v1899
        %v2238 = vsub.f32 %v2160, %v1900
        %v2239 = vsub.f32 %v2163, %v1901
        %v2240 = vsub.f32 %v2165, %v1902
        %v2241 = vsub.f32 %v2168, %v1903
        %v2242 = vsub.f32 %v2170, %v1904
        %v2243 = vsub.f32 %v2173, %v1905
        %v2244 = vsub.f32 %v2175, %v1906
        %v2245 = vsub.f32 %v2178, %v1907
        %v2246 = vsub.f32 %v2180, %v1908
        %v2247 = vsub.f32 %v2183, %v1909
        %v2248 = vsub.f32 %v2185, %v1910
        %v2249 = vsub.f32 %v2188, %v1911
        %v2250 = vsub.f32 %v2190, %v1912
        %v2251 = vsub.f32 %v2193, %v1913
        %v2252 = vsub.f32 %v2195, %v1914
        %v2253 = vsub.f32 %v2198, %v1883
        %v2254 = vsub.f32 %v2200, %v1884
        %v2255 = vsub.f32 %v2203, %v1885
        %v2256 = vsub.f32 %v2205, %v1886
        %v2257 = vsub.f32 %v2208, %v1887
        %v2258 = vsub.f32 %v2210, %v1888
        %v2259 = vsub.f32 %v2213, %v1889
        %v2260 = vsub.f32 %v2215, %v1890
        %v2261 = vsub.f32 %v2218, %v1891
        %v2262 = vsub.f32 %v2220, %v1892
        %v2263 = vsub.f32 %v2223, %v1893
        %v2264 = vsub.f32 %v2225, %v1894
        %v2265 = vsub.f32 %v2228, %v1895
        %v2266 = vsub.f32 %v2230, %v1896
        %v2267 = vsub.f32 %v2233, %v1897
        %v2268 = vsub.f32 %v2235, %v1898
        %v2269 = vpack.c.bf16 %v2238, %v2237
        %v2270 = vpack.c.bf16 %v2240, %v2239
        %v2271 = vpack.c.bf16 %v2242, %v2241
        %v2272 = vpack.c.bf16 %v2244, %v2243
        %v2273 = vpack.c.bf16 %v2246, %v2245
        %v2274 = vpack.c.bf16 %v2248, %v2247
        %v2275 = vpack.c.bf16 %v2250, %v2249
        %v2276 = vpack.c.bf16 %v2252, %v2251
        %v2277 = vpack.c.bf16 %v2254, %v2253
        %v2278 = vpack.c.bf16 %v2256, %v2255
        %v2279 = vpack.c.bf16 %v2258, %v2257
        %v2280 = vpack.c.bf16 %v2260, %v2259
        %v2281 = vpack.c.bf16 %v2262, %v2261
        %v2282 = vpack.c.bf16 %v2264, %v2263
        %v2283 = vpack.c.bf16 %v2266, %v2265
        %v2284 = vpack.c.bf16 %v2268, %v2267
        %2285 = vmatpush.bf16.msra.mxu0 %v1753
        %2286 = vmatpush.bf16.msra.mxu0 %v1752
        %2287 = vmatpush.bf16.msra.mxu0 %v1751
        %2288 = vmatpush.bf16.msra.mxu0 %v1750
        %2289 = vmatpush.bf16.msra.mxu0 %v1749
        %2290 = vmatpush.bf16.msra.mxu0 %v1748
        %2291 = vmatpush.bf16.msra.mxu0 %v1747
        %2292 = vmatpush.bf16.msra.mxu0 %v1746
        %2293 = vmatmul.bf16.gmra.mxu0 %v2269
        %v2294 = vpop.f32.mrf.mxu0
        %v2295 = vadd.f32 0.0, %v2294
        %v2296 = vpop.f32.mrf.mxu0
        %v2297 = vadd.f32 0.0, %v2296
        %2298 = vmatmul.bf16.gmra.mxu0 %v2270
        %v2299 = vpop.f32.mrf.mxu0
        %v2300 = vadd.f32 0.0, %v2299
        %v2301 = vpop.f32.mrf.mxu0
        %v2302 = vadd.f32 0.0, %v2301
        %2303 = vmatmul.bf16.gmra.mxu0 %v2271
        %v2304 = vpop.f32.mrf.mxu0
        %v2305 = vadd.f32 0.0, %v2304
        %v2306 = vpop.f32.mrf.mxu0
        %v2307 = vadd.f32 0.0, %v2306
        %2308 = vmatmul.bf16.gmra.mxu0 %v2272
        %v2309 = vpop.f32.mrf.mxu0
        %v2310 = vadd.f32 0.0, %v2309
        %v2311 = vpop.f32.mrf.mxu0
        %v2312 = vadd.f32 0.0, %v2311
        %2313 = vmatmul.bf16.gmra.mxu0 %v2273
        %v2314 = vpop.f32.mrf.mxu0
        %v2315 = vadd.f32 0.0, %v2314
        %v2316 = vpop.f32.mrf.mxu0
        %v2317 = vadd.f32 0.0, %v2316
        %2318 = vmatmul.bf16.gmra.mxu0 %v2274
        %v2319 = vpop.f32.mrf.mxu0
        %v2320 = vadd.f32 0.0, %v2319
        %v2321 = vpop.f32.mrf.mxu0
        %v2322 = vadd.f32 0.0, %v2321
        %2323 = vmatmul.bf16.gmra.mxu0 %v2275
        %v2324 = vpop.f32.mrf.mxu0
        %v2325 = vadd.f32 0.0, %v2324
        %v2326 = vpop.f32.mrf.mxu0
        %v2327 = vadd.f32 0.0, %v2326
        %2328 = vmatmul.bf16.gmra.mxu0 %v2276
        %v2329 = vpop.f32.mrf.mxu0
        %v2330 = vadd.f32 0.0, %v2329
        %v2331 = vpop.f32.mrf.mxu0
        %v2332 = vadd.f32 0.0, %v2331
        %2333 = vmatmul.bf16.gmra.mxu0 %v2277
        %v2334 = vpop.f32.mrf.mxu0
        %v2335 = vadd.f32 0.0, %v2334
        %v2336 = vpop.f32.mrf.mxu0
        %v2337 = vadd.f32 0.0, %v2336
        %2338 = vmatmul.bf16.gmra.mxu0 %v2278
        %v2339 = vpop.f32.mrf.mxu0
        %v2340 = vadd.f32 0.0, %v2339
        %v2341 = vpop.f32.mrf.mxu0
        %v2342 = vadd.f32 0.0, %v2341
        %2343 = vmatmul.bf16.gmra.mxu0 %v2279
        %v2344 = vpop.f32.mrf.mxu0
        %v2345 = vadd.f32 0.0, %v2344
        %v2346 = vpop.f32.mrf.mxu0
        %v2347 = vadd.f32 0.0, %v2346
        %2348 = vmatmul.bf16.gmra.mxu0 %v2280
        %v2349 = vpop.f32.mrf.mxu0
        %v2350 = vadd.f32 0.0, %v2349
        %v2351 = vpop.f32.mrf.mxu0
        %v2352 = vadd.f32 0.0, %v2351
        %2353 = vmatmul.bf16.gmra.mxu0 %v2281
        %v2354 = vpop.f32.mrf.mxu0
        %v2355 = vadd.f32 0.0, %v2354
        %v2356 = vpop.f32.mrf.mxu0
        %v2357 = vadd.f32 0.0, %v2356
        %2358 = vmatmul.bf16.gmra.mxu0 %v2282
        %v2359 = vpop.f32.mrf.mxu0
        %v2360 = vadd.f32 0.0, %v2359
        %v2361 = vpop.f32.mrf.mxu0
        %v2362 = vadd.f32 0.0, %v2361
        %2363 = vmatmul.bf16.gmra.mxu0 %v2283
        %v2364 = vpop.f32.mrf.mxu0
        %v2365 = vadd.f32 0.0, %v2364
        %v2366 = vpop.f32.mrf.mxu0
        %v2367 = vadd.f32 0.0, %v2366
        %2368 = vmatmul.bf16.gmra.mxu0 %v2284
        %v2369 = vpop.f32.mrf.mxu0
        %v2370 = vadd.f32 0.0, %v2369
        %v2371 = vpop.f32.mrf.mxu0
        %v2372 = vadd.f32 0.0, %v2371
        %2373 = vdwg.mxu0
        %v2374 = vadd.f32 %v951, %v2295
        %v2375 = vadd.f32 %v952, %v2297
        %v2376 = vadd.f32 %v953, %v2300
        %v2377 = vadd.f32 %v954, %v2302
        %v2378 = vadd.f32 %v955, %v2305
        %v2379 = vadd.f32 %v956, %v2307
        %v2380 = vadd.f32 %v957, %v2310
        %v2381 = vadd.f32 %v958, %v2312
        %v2382 = vadd.f32 %v959, %v2315
        %v2383 = vadd.f32 %v960, %v2317
        %v2384 = vadd.f32 %v961, %v2320
        %v2385 = vadd.f32 %v962, %v2322
        %v2386 = vadd.f32 %v963, %v2325
        %v2387 = vadd.f32 %v964, %v2327
        %v2388 = vadd.f32 %v965, %v2330
        %v2389 = vadd.f32 %v966, %v2332
        %v2390 = vadd.f32 %v967, %v2335
        %v2391 = vadd.f32 %v968, %v2337
        %v2392 = vadd.f32 %v969, %v2340
        %v2393 = vadd.f32 %v970, %v2342
        %v2394 = vadd.f32 %v971, %v2345
        %v2395 = vadd.f32 %v972, %v2347
        %v2396 = vadd.f32 %v973, %v2350
        %v2397 = vadd.f32 %v974, %v2352
        %v2398 = vadd.f32 %v975, %v2355
        %v2399 = vadd.f32 %v976, %v2357
        %v2400 = vadd.f32 %v977, %v2360
        %v2401 = vadd.f32 %v978, %v2362
        %v2402 = vadd.f32 %v979, %v2365
        %v2403 = vadd.f32 %v980, %v2367
        %v2404 = vadd.f32 %v981, %v2370
        %v2405 = vadd.f32 %v982, %v2372
        %v2406 = vmax.f32 %v2374, 0.0
        %v2407 = vmax.f32 %v2375, 0.0
        %v2408 = vmax.f32 %v2376, 0.0
        %v2409 = vmax.f32 %v2377, 0.0
        %v2410 = vmax.f32 %v2378, 0.0
        %v2411 = vmax.f32 %v2379, 0.0
        %v2412 = vmax.f32 %v2380, 0.0
        %v2413 = vmax.f32 %v2381, 0.0
        %v2414 = vmax.f32 %v2382, 0.0
        %v2415 = vmax.f32 %v2383, 0.0
        %v2416 = vmax.f32 %v2384, 0.0
        %v2417 = vmax.f32 %v2385, 0.0
        %v2418 = vmax.f32 %v2386, 0.0
        %v2419 = vmax.f32 %v2387, 0.0
        %v2420 = vmax.f32 %v2388, 0.0
        %v2421 = vmax.f32 %v2389, 0.0
        %v2422 = vmax.f32 %v2390, 0.0
        %v2423 = vmax.f32 %v2391, 0.0
        %v2424 = vmax.f32 %v2392, 0.0
        %v2425 = vmax.f32 %v2393, 0.0
        %v2426 = vmax.f32 %v2394, 0.0
        %v2427 = vmax.f32 %v2395, 0.0
        %v2428 = vmax.f32 %v2396, 0.0
        %v2429 = vmax.f32 %v2397, 0.0
        %v2430 = vmax.f32 %v2398, 0.0
        %v2431 = vmax.f32 %v2399, 0.0
        %v2432 = vmax.f32 %v2400, 0.0
        %v2433 = vmax.f32 %v2401, 0.0
        %v2434 = vmax.f32 %v2402, 0.0
        %v2435 = vmax.f32 %v2403, 0.0
        %v2436 = vmax.f32 %v2404, 0.0
        %v2437 = vmax.f32 %v2405, 0.0
        %v2438 = vpack.c.bf16 %v2407, %v2406
        %v2439 = vpack.c.bf16 %v2409, %v2408
        %v2440 = vpack.c.bf16 %v2411, %v2410
        %v2441 = vpack.c.bf16 %v2413, %v2412
        %v2442 = vpack.c.bf16 %v2415, %v2414
        %v2443 = vpack.c.bf16 %v2417, %v2416
        %v2444 = vpack.c.bf16 %v2419, %v2418
        %v2445 = vpack.c.bf16 %v2421, %v2420
        %v2446 = vpack.c.bf16 %v2423, %v2422
        %v2447 = vpack.c.bf16 %v2425, %v2424
        %v2448 = vpack.c.bf16 %v2427, %v2426
        %v2449 = vpack.c.bf16 %v2429, %v2428
        %v2450 = vpack.c.bf16 %v2431, %v2430
        %v2451 = vpack.c.bf16 %v2433, %v2432
        %v2452 = vpack.c.bf16 %v2435, %v2434
        %v2453 = vpack.c.bf16 %v2437, %v2436
        %v2454 = vld [vmem:[%s653] sm:$0xff]
        %v2455 = vld [vmem:[%s653 + $0x8] sm:$0xff]
        %v2456 = vld [vmem:[%s653 + $0x10] sm:$0xff]
        %v2457 = vld [vmem:[%s653 + $0x18] sm:$0xff]
        %v2458 = vld [vmem:[%s653 + $0x20] sm:$0xff]
        %v2459 = vld [vmem:[%s653 + $0x28] sm:$0xff]
        %v2460 = vld [vmem:[%s653 + $0x30] sm:$0xff]
        %v2461 = vld [vmem:[%s653 + $0x38] sm:$0xff]
        %v2462 = vld [vmem:[%s653 + $0x40] sm:$0xff]
        %v2463 = vld [vmem:[%s653 + $0x48] sm:$0xff]
        %v2464 = vld [vmem:[%s653 + $0x50] sm:$0xff]
        %v2465 = vld [vmem:[%s653 + $0x58] sm:$0xff]
        %v2466 = vld [vmem:[%s653 + $0x60] sm:$0xff]
        %v2467 = vld [vmem:[%s653 + $0x68] sm:$0xff]
        %v2468 = vld [vmem:[%s653 + $0x70] sm:$0xff]
        %v2469 = vld [vmem:[%s653 + $0x78] sm:$0xff]
        %v2470 = vld [vmem:[%s653 + $0x80] sm:$0xff]
        %v2471 = vld [vmem:[%s653 + $0x88] sm:$0xff]
        %v2472 = vld [vmem:[%s653 + $0x90] sm:$0xff]
        %v2473 = vld [vmem:[%s653 + $0x98] sm:$0xff]
        %2474 = vmatpush.bf16.msra.mxu0 %v2445
        %2475 = vmatpush.bf16.msra.mxu0 %v2444
        %2476 = vmatpush.bf16.msra.mxu0 %v2443
        %2477 = vmatpush.bf16.msra.mxu0 %v2442
        %2478 = vmatpush.bf16.msra.mxu0 %v2441
        %2479 = vmatpush.bf16.msra.mxu0 %v2440
        %2480 = vmatpush.bf16.msra.mxu0 %v2439
        %2481 = vmatpush.bf16.msra.mxu0 %v2438
        %2482 = vmatmul.bf16.gmra.mxu0 %v1079
        %v2483 = vpop.f32.mrf.mxu0
        %v2484 = vadd.f32 %v2454, %v2483
        %v2485 = vpop.f32.mrf.mxu0
        %v2486 = vadd.f32 %v2455, %v2485
        %2487 = vmatmul.bf16.gmra.mxu0 %v1081
        %v2488 = vpop.f32.mrf.mxu0
        %v2489 = vadd.f32 %v2456, %v2488
        %v2490 = vpop.f32.mrf.mxu0
        %v2491 = vadd.f32 %v2457, %v2490
        %2492 = vmatmul.bf16.gmra.mxu0 %v1083
        %v2493 = vpop.f32.mrf.mxu0
        %v2494 = vadd.f32 %v2458, %v2493
        %v2495 = vpop.f32.mrf.mxu0
        %v2496 = vadd.f32 %v2459, %v2495
        %2497 = vmatmul.bf16.gmra.mxu0 %v1085
        %v2498 = vpop.f32.mrf.mxu0
        %v2499 = vadd.f32 %v2460, %v2498
        %v2500 = vpop.f32.mrf.mxu0
        %v2501 = vadd.f32 %v2461, %v2500
        %2502 = vmatmul.bf16.gmra.mxu0 %v1087
        %v2503 = vpop.f32.mrf.mxu0
        %v2504 = vadd.f32 %v2462, %v2503
        %v2505 = vpop.f32.mrf.mxu0
        %v2506 = vadd.f32 %v2463, %v2505
        %2507 = vmatmul.bf16.gmra.mxu0 %v1089
        %v2508 = vpop.f32.mrf.mxu0
        %v2509 = vadd.f32 %v2464, %v2508
        %v2510 = vpop.f32.mrf.mxu0
        %v2511 = vadd.f32 %v2465, %v2510
        %2512 = vmatmul.bf16.gmra.mxu0 %v1091
        %v2513 = vpop.f32.mrf.mxu0
        %v2514 = vadd.f32 %v2466, %v2513
        %v2515 = vpop.f32.mrf.mxu0
        %v2516 = vadd.f32 %v2467, %v2515
        %2517 = vmatmul.bf16.gmra.mxu0 %v1093
        %v2518 = vpop.f32.mrf.mxu0
        %v2519 = vadd.f32 %v2468, %v2518
        %v2520 = vpop.f32.mrf.mxu0
        %v2521 = vadd.f32 %v2469, %v2520
        %2522 = vmatmul.bf16.gmra.mxu0 %v1095
        %v2523 = vpop.f32.mrf.mxu0
        %v2524 = vadd.f32 %v2470, %v2523
        %v2525 = vpop.f32.mrf.mxu0
        %v2526 = vadd.f32 %v2471, %v2525
        %2527 = vmatmul.bf16.gmra.mxu0 %v1097
        %v2528 = vpop.f32.mrf.mxu0
        %v2529 = vadd.f32 %v2472, %v2528
        %v2530 = vpop.f32.mrf.mxu0
        %v2531 = vadd.f32 %v2473, %v2530
        %2532 = vdwg.mxu0
        %2533 = vmatpush.bf16.msra.mxu0 %v2453
        %2534 = vmatpush.bf16.msra.mxu0 %v2452
        %2535 = vmatpush.bf16.msra.mxu0 %v2451
        %2536 = vmatpush.bf16.msra.mxu0 %v2450
        %2537 = vmatpush.bf16.msra.mxu0 %v2449
        %2538 = vmatpush.bf16.msra.mxu0 %v2448
        %2539 = vmatpush.bf16.msra.mxu0 %v2447
        %2540 = vmatpush.bf16.msra.mxu0 %v2446
        %2541 = vmatmul.bf16.gmra.mxu0 %v1080
        %v2542 = vpop.f32.mrf.mxu0
        %v2543 = vadd.f32 %v2484, %v2542
        %v2544 = vpop.f32.mrf.mxu0
        %v2545 = vadd.f32 %v2486, %v2544
        %2546 = vmatmul.bf16.gmra.mxu0 %v1082
        %v2547 = vpop.f32.mrf.mxu0
        %v2548 = vadd.f32 %v2489, %v2547
        %v2549 = vpop.f32.mrf.mxu0
        %v2550 = vadd.f32 %v2491, %v2549
        %2551 = vmatmul.bf16.gmra.mxu0 %v1084
        %v2552 = vpop.f32.mrf.mxu0
        %v2553 = vadd.f32 %v2494, %v2552
        %v2554 = vpop.f32.mrf.mxu0
        %v2555 = vadd.f32 %v2496, %v2554
        %2556 = vmatmul.bf16.gmra.mxu0 %v1086
        %v2557 = vpop.f32.mrf.mxu0
        %v2558 = vadd.f32 %v2499, %v2557
        %v2559 = vpop.f32.mrf.mxu0
        %v2560 = vadd.f32 %v2501, %v2559
        %2561 = vmatmul.bf16.gmra.mxu0 %v1088
        %v2562 = vpop.f32.mrf.mxu0
        %v2563 = vadd.f32 %v2504, %v2562
        %v2564 = vpop.f32.mrf.mxu0
        %v2565 = vadd.f32 %v2506, %v2564
        %2566 = vmatmul.bf16.gmra.mxu0 %v1090
        %v2567 = vpop.f32.mrf.mxu0
        %v2568 = vadd.f32 %v2509, %v2567
        %v2569 = vpop.f32.mrf.mxu0
        %v2570 = vadd.f32 %v2511, %v2569
        %2571 = vmatmul.bf16.gmra.mxu0 %v1092
        %v2572 = vpop.f32.mrf.mxu0
        %v2573 = vadd.f32 %v2514, %v2572
        %v2574 = vpop.f32.mrf.mxu0
        %v2575 = vadd.f32 %v2516, %v2574
        %2576 = vmatmul.bf16.gmra.mxu0 %v1094
        %v2577 = vpop.f32.mrf.mxu0
        %v2578 = vadd.f32 %v2519, %v2577
        %v2579 = vpop.f32.mrf.mxu0
        %v2580 = vadd.f32 %v2521, %v2579
        %2581 = vmatmul.bf16.gmra.mxu0 %v1096
        %v2582 = vpop.f32.mrf.mxu0
        %v2583 = vadd.f32 %v2524, %v2582
        %v2584 = vpop.f32.mrf.mxu0
        %v2585 = vadd.f32 %v2526, %v2584
        %2586 = vmatmul.bf16.gmra.mxu0 %v1098
        %v2587 = vpop.f32.mrf.mxu0
        %v2588 = vadd.f32 %v2529, %v2587
        %v2589 = vpop.f32.mrf.mxu0
        %v2590 = vadd.f32 %v2531, %v2589
        %2591 = vdwg.mxu0
        %v2592 = vpack.c.bf16 %v2545, %v2543
        %v2593 = vpack.c.bf16 %v2550, %v2548
        %v2594 = vpack.c.bf16 %v2555, %v2553
        %v2595 = vpack.c.bf16 %v2560, %v2558
        %v2596 = vpack.c.bf16 %v2565, %v2563
        %v2597 = vpack.c.bf16 %v2570, %v2568
        %v2598 = vpack.c.bf16 %v2575, %v2573
        %v2599 = vpack.c.bf16 %v2580, %v2578
        %v2600 = vpack.c.bf16 %v2585, %v2583
        %v2601 = vpack.c.bf16 %v2590, %v2588
        %v2602 = vld [vmem:[#allocation10] sm:$0xf]
        %v2603 = vld [vmem:[#allocation10 + $0x4] sm:$0xf]
        %v2604 = vld [vmem:[#allocation10 + $0x8] sm:$0xf]
        %v2605 = vld [vmem:[#allocation10 + $0xc] sm:$0xf]
        %v2606 = vld [vmem:[#allocation10 + $0x10] sm:$0xf]
        %v2607 = vld [vmem:[#allocation10 + $0x14] sm:$0xf]
        %v2608 = vld [vmem:[#allocation10 + $0x18] sm:$0xf]
        %v2609 = vld [vmem:[#allocation10 + $0x1c] sm:$0xf]
        %v2610 = vld [vmem:[#allocation10 + $0x20] sm:$0xf]
        %v2611 = vld [vmem:[#allocation10 + $0x24] sm:$0xf]
        %v2612 = vld [vmem:[#allocation10 + $0x28] sm:$0xf]
        %v2613 = vld [vmem:[#allocation10 + $0x2c] sm:$0xf]
        %v2614 = vld [vmem:[#allocation10 + $0x30] sm:$0xf]
        %v2615 = vld [vmem:[#allocation10 + $0x34] sm:$0xf]
        %v2616 = vld [vmem:[#allocation10 + $0x38] sm:$0xf]
        %v2617 = vld [vmem:[#allocation10 + $0x3c] sm:$0xf]
        %v2618 = vld [vmem:[%s10] sm:$0x1]
        %v2620 = vperm.slane %v2618, 0
        %v2638 = vunpack.c.l.b16 %v2602
        %v2639 = vunpack.c.l.b16 %v2603
        %v2640 = vunpack.c.l.b16 %v2604
        %v2641 = vunpack.c.l.b16 %v2605
        %v2642 = vunpack.c.l.b16 %v2606
        %v2643 = vunpack.c.l.b16 %v2607
        %v2644 = vunpack.c.l.b16 %v2608
        %v2645 = vunpack.c.l.b16 %v2609
        %v2646 = vunpack.c.l.b16 %v2610
        %v2647 = vunpack.c.l.b16 %v2611
        %v2648 = vunpack.c.l.b16 %v2612
        %v2649 = vunpack.c.l.b16 %v2613
        %v2650 = vunpack.c.l.b16 %v2614
        %v2651 = vunpack.c.l.b16 %v2615
        %v2652 = vunpack.c.l.b16 %v2616
        %v2653 = vunpack.c.l.b16 %v2617
        %v2654 = vpack.c.b16 %v2639, %v2638
        %v2655 = vpack.c.b16 %v2641, %v2640
        %v2656 = vpack.c.b16 %v2643, %v2642
        %v2657 = vpack.c.b16 %v2645, %v2644
        %v2658 = vpack.c.b16 %v2647, %v2646
        %v2659 = vpack.c.b16 %v2649, %v2648
        %v2660 = vpack.c.b16 %v2651, %v2650
        %v2661 = vpack.c.b16 %v2653, %v2652
        %2670 = vmatpush.bf16.msra.mxu0 %v2661
        %2671 = vmatpush.bf16.msra.mxu0 %v2660
        %2672 = vmatpush.bf16.msra.mxu0 %v2659
        %2673 = vmatpush.bf16.msra.mxu0 %v2658
        %2674 = vmatpush.bf16.msra.mxu0 %v2657
        %2675 = vmatpush.bf16.msra.mxu0 %v2656
        %2676 = vmatpush.bf16.msra.mxu0 %v2655
        %2677 = vmatpush.bf16.msra.mxu0 %v2654
        %2678 = vmatmul.bf16.gmra.mxu0 %v2592
        %v2679 = vpop.f32.mrf.mxu0
        %v2680 = vadd.f32 %v2620, %v2679
        %v2681 = vpop.f32.mrf.mxu0
        %v2682 = vadd.f32 %v2620, %v2681
        %2683 = vmatmul.bf16.gmra.mxu0 %v2593
        %v2684 = vpop.f32.mrf.mxu0
        %v2685 = vadd.f32 %v2620, %v2684
        %v2686 = vpop.f32.mrf.mxu0
        %v2687 = vadd.f32 %v2620, %v2686
        %2688 = vmatmul.bf16.gmra.mxu0 %v2594
        %v2689 = vpop.f32.mrf.mxu0
        %v2690 = vadd.f32 %v2620, %v2689
        %v2691 = vpop.f32.mrf.mxu0
        %v2692 = vadd.f32 %v2620, %v2691
        %2693 = vmatmul.bf16.gmra.mxu0 %v2595
        %v2694 = vpop.f32.mrf.mxu0
        %v2695 = vadd.f32 %v2620, %v2694
        %v2696 = vpop.f32.mrf.mxu0
        %v2697 = vadd.f32 %v2620, %v2696
        %2698 = vmatmul.bf16.gmra.mxu0 %v2596
        %v2699 = vpop.f32.mrf.mxu0
        %v2700 = vadd.f32 %v2620, %v2699
        %v2701 = vpop.f32.mrf.mxu0
        %v2702 = vadd.f32 %v2620, %v2701
        %2703 = vmatmul.bf16.gmra.mxu0 %v2597
        %v2704 = vpop.f32.mrf.mxu0
        %v2705 = vadd.f32 %v2620, %v2704
        %v2706 = vpop.f32.mrf.mxu0
        %v2707 = vadd.f32 %v2620, %v2706
        %2708 = vmatmul.bf16.gmra.mxu0 %v2598
        %v2709 = vpop.f32.mrf.mxu0
        %v2710 = vadd.f32 %v2620, %v2709
        %v2711 = vpop.f32.mrf.mxu0
        %v2712 = vadd.f32 %v2620, %v2711
        %2713 = vmatmul.bf16.gmra.mxu0 %v2599
        %v2714 = vpop.f32.mrf.mxu0
        %v2715 = vadd.f32 %v2620, %v2714
        %v2716 = vpop.f32.mrf.mxu0
        %v2717 = vadd.f32 %v2620, %v2716
        %2718 = vmatmul.bf16.gmra.mxu0 %v2600
        %v2719 = vpop.f32.mrf.mxu0
        %v2720 = vadd.f32 %v2620, %v2719
        %v2721 = vpop.f32.mrf.mxu0
        %v2722 = vadd.f32 %v2620, %v2721
        %2723 = vmatmul.bf16.gmra.mxu0 %v2601
        %v2724 = vpop.f32.mrf.mxu0
        %v2725 = vadd.f32 %v2620, %v2724
        %v2726 = vpop.f32.mrf.mxu0
        %v2727 = vadd.f32 %v2620, %v2726
        %2728 = vdwg.mxu0
        %v2729 = vmax.f32 %v2680, 0.0
        %v2730 = vmax.f32 %v2682, 0.0
        %v2731 = vmax.f32 %v2685, 0.0
        %v2732 = vmax.f32 %v2687, 0.0
        %v2733 = vmax.f32 %v2690, 0.0
        %v2734 = vmax.f32 %v2692, 0.0
        %v2735 = vmax.f32 %v2695, 0.0
        %v2736 = vmax.f32 %v2697, 0.0
        %v2737 = vmax.f32 %v2700, 0.0
        %v2738 = vmax.f32 %v2702, 0.0
        %v2739 = vmax.f32 %v2705, 0.0
        %v2740 = vmax.f32 %v2707, 0.0
        %v2741 = vmax.f32 %v2710, 0.0
        %v2742 = vmax.f32 %v2712, 0.0
        %v2743 = vmax.f32 %v2715, 0.0
        %v2744 = vmax.f32 %v2717, 0.0
        %v2745 = vmax.f32 %v2720, 0.0
        %v2746 = vmax.f32 %v2722, 0.0
        %v2747 = vmax.f32 %v2725, 0.0
        %v2748 = vmax.f32 %v2727, 0.0
        %v2749 = vld [vmem:[%s540] sm:$0xff]
        %v2750 = vld [vmem:[%s540 + $0x8] sm:$0xff]
        %v2751 = vld [vmem:[%s540 + $0x10] sm:$0xff]
        %v2752 = vld [vmem:[%s540 + $0x18] sm:$0xff]
        %v2753 = vpack.c.bf16 %v2730, %v2729
        %v2754 = vpack.c.bf16 %v2732, %v2731
        %v2755 = vpack.c.bf16 %v2734, %v2733
        %v2756 = vpack.c.bf16 %v2736, %v2735
        %v2757 = vpack.c.bf16 %v2738, %v2737
        %v2758 = vpack.c.bf16 %v2740, %v2739
        %v2759 = vpack.c.bf16 %v2742, %v2741
        %v2760 = vpack.c.bf16 %v2744, %v2743
        %v2761 = vpack.c.bf16 %v2746, %v2745
        %v2762 = vpack.c.bf16 %v2748, %v2747
        %v2767 = vunpack.c.l.b16 %v2749
        %v2768 = vunpack.c.h.b16 %v2749
        %v2769 = vunpack.c.l.b16 %v2750
        %v2770 = vunpack.c.h.b16 %v2750
        %v2771 = vunpack.c.l.b16 %v2751
        %v2772 = vunpack.c.h.b16 %v2751
        %v2773 = vunpack.c.l.b16 %v2752
        %v2774 = vunpack.c.h.b16 %v2752
        %v2775 = vpack.c.b16 %v2769, %v2767
        %v2776 = vpack.c.b16 %v2770, %v2768
        %v2777 = vpack.c.b16 %v2773, %v2771
        %v2778 = vpack.c.b16 %v2774, %v2772
        %v2782 = vsel %vm1423, %v2776, 0
        %v2785 = vsel %vm1423, %v2778, 0
        %2787 = vmatpush.bf16.msra.mxu0 %v2760
        %2788 = vmatpush.bf16.msra.mxu0 %v2759
        %2789 = vmatpush.bf16.msra.mxu0 %v2758
        %2790 = vmatpush.bf16.msra.mxu0 %v2757
        %2791 = vmatpush.bf16.msra.mxu0 %v2756
        %2792 = vmatpush.bf16.msra.mxu0 %v2755
        %2793 = vmatpush.bf16.msra.mxu0 %v2754
        %2794 = vmatpush.bf16.msra.mxu0 %v2753
        %2795 = vmatmul.bf16.gmra.mxu0 %v2775
        %v2796 = vpop.f32.mrf.mxu0
        %v2797 = vadd.f32 0.0, %v2796
        %v2798 = vpop.f32.mrf.mxu0
        %v2799 = vadd.f32 0.0, %v2798
        %2800 = vmatmul.bf16.gmra.mxu0 %v2777
        %v2801 = vpop.f32.mrf.mxu0
        %v2802 = vadd.f32 0.0, %v2801
        %v2803 = vpop.f32.mrf.mxu0
        %v2804 = vadd.f32 0.0, %v2803
        %2805 = vdwg.mxu0
        %2806 = vmatpush.bf16.msra.mxu0 0
        %2807 = vmatpush.bf16.msra.mxu0 0
        %2808 = vmatpush.bf16.msra.mxu0 0
        %2809 = vmatpush.bf16.msra.mxu0 0
        %2810 = vmatpush.bf16.msra.mxu0 0
        %2811 = vmatpush.bf16.msra.mxu0 0
        %2812 = vmatpush.bf16.msra.mxu0 %v2762
        %2813 = vmatpush.bf16.msra.mxu0 %v2761
        %2814 = vmatmul.bf16.gmra.mxu0 %v2782
        %v2815 = vpop.f32.mrf.mxu0
        %v2816 = vadd.f32 %v2797, %v2815
        %v2817 = vpop.f32.mrf.mxu0
        %v2818 = vadd.f32 %v2799, %v2817
        %2819 = vmatmul.bf16.gmra.mxu0 %v2785
        %v2820 = vpop.f32.mrf.mxu0
        %v2821 = vadd.f32 %v2802, %v2820
        %v2822 = vpop.f32.mrf.mxu0
        %v2823 = vadd.f32 %v2804, %v2822
        %2824 = vdwg.mxu0
        %v2825 = vld [vmem:[%s668] sm:$0xff]
        %v2826 = vld [vmem:[%s668 + $0x8] sm:$0xff]
        %v2827 = vld [vmem:[%s668 + $0x10] sm:$0xff]
        %v2828 = vld [vmem:[%s668 + $0x18] sm:$0xff]
        %2830 = vset.pattern.permute.xlu0 0
        %2831 = vperm.xlu0 %2830, %v2825
        %v2832 = vpop.permute.xlu0 %2831
        %2835 = vset.pattern.permute.xlu0 0
        %2836 = vperm.xlu0 %2835, %v2826
        %v2837 = vpop.permute.xlu0 %2836
        %2840 = vset.pattern.permute.xlu0 0
        %2841 = vperm.xlu0 %2840, %v2827
        %v2842 = vpop.permute.xlu0 %2841
        %2845 = vset.pattern.permute.xlu0 0
        %2846 = vperm.xlu0 %2845, %v2828
        %v2847 = vpop.permute.xlu0 %2846
        %v2849 = vmul.f32 %v2816, %v2832
        %v2850 = vmul.f32 %v2818, %v2837
        %v2851 = vmul.f32 %v2821, %v2842
        %v2852 = vmul.f32 %v2823, %v2847
        %v2853 = vld [vmem:[%s550] sm:$0xff]
        %v2854 = vld [vmem:[%s550 + $0x8] sm:$0xff]
        %v2855 = vld [vmem:[%s550 + $0x10] sm:$0xff]
        %v2856 = vld [vmem:[%s550 + $0x18] sm:$0xff]
        %v2857 = vadd.f32 %v2849, %v2853
        %v2858 = vadd.f32 %v2850, %v2854
        %v2859 = vadd.f32 %v2851, %v2855
        %v2860 = vadd.f32 %v2852, %v2856
        %v2861 = vpack.c.bf16 %v2858, %v2857
        %v2862 = vpack.c.bf16 %v2860, %v2859
        %v2863 = vld [vmem:[#allocation11] sm:$0xf]
        %v2864 = vld [vmem:[#allocation11 + $0x4] sm:$0xf]
        %v2865 = vld [vmem:[#allocation11 + $0x8] sm:$0xf]
        %v2866 = vld [vmem:[#allocation11 + $0xc] sm:$0xf]
        %v2867 = vld [vmem:[#allocation11 + $0x10] sm:$0xf]
        %v2868 = vld [vmem:[#allocation11 + $0x14] sm:$0xf]
        %v2869 = vld [vmem:[#allocation11 + $0x18] sm:$0xf]
        %v2870 = vld [vmem:[#allocation11 + $0x1c] sm:$0xf]
        %v2871 = vld [vmem:[#allocation11 + $0x20] sm:$0xf]
        %v2872 = vld [vmem:[#allocation11 + $0x24] sm:$0xf]
        %v2873 = vld [vmem:[#allocation11 + $0x28] sm:$0xf]
        %v2874 = vld [vmem:[#allocation11 + $0x2c] sm:$0xf]
        %v2875 = vld [vmem:[#allocation11 + $0x30] sm:$0xf]
        %v2876 = vld [vmem:[#allocation11 + $0x34] sm:$0xf]
        %v2877 = vld [vmem:[#allocation11 + $0x38] sm:$0xf]
        %v2878 = vld [vmem:[#allocation11 + $0x3c] sm:$0xf]
        %v2879 = vld [vmem:[%s12] sm:$0x1]
        %v2881 = vperm.slane %v2879, 0
        %v2899 = vunpack.c.l.b16 %v2863
        %v2900 = vunpack.c.l.b16 %v2864
        %v2901 = vunpack.c.l.b16 %v2865
        %v2902 = vunpack.c.l.b16 %v2866
        %v2903 = vunpack.c.l.b16 %v2867
        %v2904 = vunpack.c.l.b16 %v2868
        %v2905 = vunpack.c.l.b16 %v2869
        %v2906 = vunpack.c.l.b16 %v2870
        %v2907 = vunpack.c.l.b16 %v2871
        %v2908 = vunpack.c.l.b16 %v2872
        %v2909 = vunpack.c.l.b16 %v2873
        %v2910 = vunpack.c.l.b16 %v2874
        %v2911 = vunpack.c.l.b16 %v2875
        %v2912 = vunpack.c.l.b16 %v2876
        %v2913 = vunpack.c.l.b16 %v2877
        %v2914 = vunpack.c.l.b16 %v2878
        %v2915 = vpack.c.b16 %v2900, %v2899
        %v2916 = vpack.c.b16 %v2902, %v2901
        %v2917 = vpack.c.b16 %v2904, %v2903
        %v2918 = vpack.c.b16 %v2906, %v2905
        %v2919 = vpack.c.b16 %v2908, %v2907
        %v2920 = vpack.c.b16 %v2910, %v2909
        %v2921 = vpack.c.b16 %v2912, %v2911
        %v2922 = vpack.c.b16 %v2914, %v2913
        %2931 = vmatpush.bf16.msra.mxu0 %v2922
        %2932 = vmatpush.bf16.msra.mxu0 %v2921
        %2933 = vmatpush.bf16.msra.mxu0 %v2920
        %2934 = vmatpush.bf16.msra.mxu0 %v2919
        %2935 = vmatpush.bf16.msra.mxu0 %v2918
        %2936 = vmatpush.bf16.msra.mxu0 %v2917
        %2937 = vmatpush.bf16.msra.mxu0 %v2916
        %2938 = vmatpush.bf16.msra.mxu0 %v2915
        %2939 = vmatmul.bf16.gmra.mxu0 %v2861
        %v2940 = vpop.f32.mrf.mxu0
        %v2941 = vadd.f32 %v2881, %v2940
        %v2942 = vpop.f32.mrf.mxu0
        %v2943 = vadd.f32 %v2881, %v2942
        %2944 = vmatmul.bf16.gmra.mxu0 %v2862
        %v2945 = vpop.f32.mrf.mxu0
        %v2946 = vadd.f32 %v2881, %v2945
        %v2947 = vpop.f32.mrf.mxu0
        %v2948 = vadd.f32 %v2881, %v2947
        %2949 = vdwg.mxu0
        %v2950 = vtanh.pop %v2941
        %v2951 = vtanh.pop %v2943
        %v2952 = vtanh.pop %v2946
        %v2953 = vtanh.pop %v2948
        %2954 = vst [vmem:[%s643] sm:$0xff] %v2950
        %2955 = vst [vmem:[%s643 + $0x8] sm:$0xff] %v2951
        %2956 = vst [vmem:[%s643 + $0x10] sm:$0xff] %v2952
        %2957 = vst [vmem:[%s643 + $0x18] sm:$0xff] %v2953
        %s2958 = sand.u32 %s351, 1
        %s2959 = scalar_lea.sflag [#allocation4], %s2958
        %s2960 = sand.u32 %s351, 1
        %s2961 = smul.addr %s2960, 32
        %s2962 = scalar_lea.vmem [#allocation13], %s2961
        // Predicated region
        $region97: #{tpu_custom_call.1} parent=71 // pred_check
          %p2963 = pneg %p361
        $region98: #{tpu_custom_call.1} parent=71 // pred_check_branch
          %2965 = sbr.rel (%p2963) target = $region100
        $region99: #{tpu_custom_call.1} parent=71 // pred_region
          %2967 = vsyncadd %s2959, 0
          %s2968 = smul.addr %s35, 4
          %s2969 = smul.addr %s2968, 8
          %s2970 = scalar_lea.hbm %s13, %s2969
          %s2971 = sshll.u32 %s2962, 4
          %s2972 = int_to_ptr.vmem [resolvable:$true] %s2971
          %s2973 = sshll.u32 %s2970, 4
          %s2974 = int_to_ptr.hbm [resolvable:$true] %s2973
          %2979 = dma.vmem_to_hbm [thread:$0]  %s2972, 512, %s2974, %s2959, 128, 128, 8
        $region100: #{tpu_custom_call.1} parent=71 // pred_fallthru
          _
      $region72: #{tpu_custom_call.1} parent=5 // pred_fallthru
        _
      %p2980 = scmp.le.s32.totalorder 2, %s30
      // Predicated region
      $region101: #{tpu_custom_call.1} parent=5 // pred_check
        %p2981 = pneg %p2980
      $region102: #{tpu_custom_call.1} parent=5 // pred_check_branch
        %2983 = sbr.rel (%p2981) target = $region104
      $region103: #{tpu_custom_call.1} parent=5 // pred_region
        %s2984 = ssub.s32 %s30, 2
        // Predicated region
        $region105: #{tpu_custom_call.1} parent=103 // pred_check
          %p2985 = pneg %p367
        $region106: #{tpu_custom_call.1} parent=103 // pred_check_branch
          %2987 = sbr.rel (%p2985) target = $region108
        $region107: #{tpu_custom_call.1} parent=103 // pred_region
          %s2988 = sand.u32 %s352, 1
          %s2989 = scalar_lea.sflag [#allocation4], %s2988
          %s2990 = sand.u32 %s352, 1
          %s2991 = smul.addr %s2990, 32
          %s2992 = scalar_lea.vmem [#allocation13], %s2991
          %2994 = dma.done %s2989, 512
        $region108: #{tpu_custom_call.1} parent=103 // pred_fallthru
          _
      $region104: #{tpu_custom_call.1} parent=5 // pred_fallthru
        _
    $region6: #{tpu_custom_call.1} parent=1 // loop_footer
      %s34 = sadd.s32 1, %s30
    $region7: #{tpu_custom_call.1} parent=1 // loop_footer_branch
      %29 = sbr.rel target = $region3
    $region8: #{tpu_custom_call.1} parent=1 // loop_exit
      _
    %2995 = vsyncpa [#allocation3], 1
    %s2996 = scalar_lea.sflag [#allocation3], 1
    %2997 = vsyncpa %s2996, 1
    %2998 = vsyncpa [#allocation6], 1
    %s2999 = scalar_lea.sflag [#allocation6], 1
    %3000 = vsyncpa %s2999, 1
    %3001 = vsyncpa [#allocation9], 1
    %3002 = vsyncpa [#allocation12], 1
    %3003 = vsyncpa [#allocation4], 1
    %s3004 = scalar_lea.sflag [#allocation4], 1
    %3005 = vsyncpa %s3004, 1

</llo_original>
